<compile_context>
chip_gen: v6e
topology: v6e:2x2x1
jax: 0.10.0
libtpu: 0.0.40
codegen_flags: <defaults>
</compile_context>

<pallas_src>
import numpy as np
import jax
import jax.numpy as jnp
from jax.experimental import pallas as pl
from jax.experimental.pallas import tpu as pltpu

# ---- static model config (defaults of the PyTorch module) -------------------
CHANNELS = 50
KERNEL_SIZES = (50, 10)
CONV_STRIDES = (2, 2)
CONV_PADDINGS = (1, 1)
HIDDEN_SIZES = (256, 128)      # already multiples of 128 (lane-dense)
OUTPUT_SIZE = 10

LANE = 128                     # TPU lane width  (last-dim alignment)
SUBLANE = 8                    # TPU sublane width (2nd-to-last alignment)
MAX_TM = 512                   # M-tile size once the stacked batch grows
MAX_WEIGHT_BYTES = 24 * 1024 * 1024   # resident-weight VMEM budget guard


def _round_up(x, m):
    return (x + m - 1) // m * m


def _conv_out_len(L, k, s, p):
    return (L + 2 * p - k) // s + 1


# ---- Pallas kernel: entire forward_once fused (5 matmul stages) --------------
def _make_fused_kernel(stage_has_scale):
    """Builds kernel(x_ref, <per-stage w[,scale],b refs...>, o_ref).

    Quantized stages carry an extra (1, N) f32 per-column scale.  Weights are
    int8 (dequantized to bf16 in-kernel) or bf16; dot accumulation, scale, bias
    and ReLU stay in f32; inter-stage activations are re-cast to bf16.
    """
    n_stages = len(stage_has_scale)

    def kernel(x_ref, *refs):
        o_ref = refs[-1]
        prm = refs[:-1]
        a = x_ref[...]                                      # (TM, K0p) bf16
        idx = 0
        for s in range(n_stages):
            w_ref = prm[idx]; idx += 1
            sc_ref = None
            if stage_has_scale[s]:
                sc_ref = prm[idx]; idx += 1
            b_ref = prm[idx]; idx += 1
            # int8 -> bf16 dequant is exact ([-127,127] representable); bf16
            # weights pass through the astype unchanged.  MXU, f32 accumulation.
            y = jnp.dot(a, w_ref[...].astype(jnp.bfloat16),
                        preferred_element_type=jnp.float32)
            if sc_ref is not None:
                y = y * sc_ref[...]                         # per-column dequant
            y = y + b_ref[...]                              # f32 bias
            if s < n_stages - 1:
                a = jnp.maximum(y, 0.0).astype(jnp.bfloat16)  # ReLU f32 -> bf16
            else:
                o_ref[...] = y.astype(o_ref.dtype)
        return

    return kernel


# ---- wrapper ----------------------------------------------------------------
def forward_once(params, x):
    """x: (B, 1, L) f32 -> (B, OUTPUT_SIZE) f32.

    NOTE: the folded weights in `params` are specialized to the `input_size`
    given to init_params; x must have that length (like any compiled model).
    Also note tm is derived from the (static) batch, so each new batch size
    compiles its own kernel — a compile-cache, not a correctness, issue.
    """
    weights, scales, biases = params["weights"], params["scales"], params["biases"]
    B, _cin, L = x.shape
    k0p = weights[0].shape[0]
    out_pad = weights[-1].shape[1]

    xf = x.reshape(B, L).astype(jnp.bfloat16)               # bf16 input tile
    mp = _round_up(B, SUBLANE)
    tm = mp if mp <= MAX_TM else MAX_TM
    mp = _round_up(mp, tm)
    xp = jnp.pad(xf, ((0, mp - B), (0, k0p - L)))            # sublane/lane pad

    resident = dict(pipeline_mode=pl.Buffered(1))            # fetched once
    in_specs = [pl.BlockSpec((tm, k0p), lambda i: (i, 0))]
    operands = [xp]
    stage_has_scale = []
    weight_bytes = 0
    for w, sc, b in zip(weights, scales, biases):
        kin, nout = w.shape
        in_specs.append(pl.BlockSpec((kin, nout), lambda i: (0, 0), **resident))
        operands.append(w)
        weight_bytes += int(w.size) * w.dtype.itemsize
        if sc is not None:
            in_specs.append(pl.BlockSpec((1, nout), lambda i: (0, 0), **resident))
            operands.append(sc)
            weight_bytes += int(sc.size) * 4
        in_specs.append(pl.BlockSpec((1, nout), lambda i: (0, 0), **resident))
        operands.append(b)
        weight_bytes += int(b.size) * 4
        stage_has_scale.append(sc is not None)

    grid_steps = mp // tm
    # Small grids: keep everything on one TensorCore so v7x's 2 TCs don't each
    # DMA their own copy of the resident weights (weight-DMA-bound regime).
    dim_sem = ("arbitrary",) if grid_steps <= 2 else ("parallel",)

    flops = 2 * mp * sum(int(w.shape[0]) * int(w.shape[1]) for w in weights)
    bytes_accessed = (int(xp.size) * xp.dtype.itemsize
                      + mp * out_pad * 4 + weight_bytes)
    cost = pl.CostEstimate(flops=flops, transcendentals=0,
                           bytes_accessed=int(bytes_accessed))

    out = pl.pallas_call(
        _make_fused_kernel(tuple(stage_has_scale)),
        out_shape=jax.ShapeDtypeStruct((mp, out_pad), jnp.float32),
        grid=(grid_steps,),
        in_specs=in_specs,
        out_specs=pl.BlockSpec((tm, out_pad), lambda i: (i, 0)),
        compiler_params=pltpu.CompilerParams(
            dimension_semantics=dim_sem,
            vmem_limit_bytes=48 * 1024 * 1024,
        ),
        cost_estimate=cost,
    )(*operands)
    return out[:B, :OUTPUT_SIZE]


@jax.jit
def forward(params, anchor, positive, negative):
    """Run all three branches as ONE stacked batch through one pallas_call."""
    B = anchor.shape[0]
    x = jnp.concatenate([anchor, positive, negative], axis=0)   # (3B, 1, L)
    emb = forward_once(params, x)
    return emb[:B], emb[B:2 * B], emb[2 * B:]


# ---- int8 per-output-column weight quantization ------------------------------
def _quantize_per_col_int8(W):
    absmax = np.max(np.abs(W), axis=0)
    scale = np.where(absmax > 0.0, absmax / 127.0, 1.0).astype(np.float32)
    q = np.clip(np.rint(W / scale[None, :]), -127, 127).astype(np.int8)
    return q, scale.reshape(1, -1)


# ---- parameter init: raw PyTorch-like params + folded/padded kernel params --
def init_params(key, input_size):
    """Returns (fused_params, raw_params).

    raw_params keeps PyTorch-layout conv/fc weights (used only by the pure
    host-side reference); fused_params holds the folded, lane-padded stage
    matrices consumed by the Pallas kernel (conv stages int8+scale, fc bf16).
    """
    L = int(input_size)

    # ---- raw params (deterministic, PyTorch-default-like uniform) -----------
    raw = {"conv": [], "fc": []}
    in_ch, cur_len = 1, L
    conv_lens = []
    for i, k in enumerate(KERNEL_SIZES):
        key, k1, k2 = jax.random.split(key, 3)
        bound = 1.0 / float(in_ch * k) ** 0.5
        w = jax.random.uniform(k1, (CHANNELS, in_ch, k), jnp.float32, -bound, bound)
        b = jax.random.uniform(k2, (CHANNELS,), jnp.float32, -bound, bound)
        raw["conv"].append((np.asarray(w), np.asarray(b)))
        cur_len = _conv_out_len(cur_len, k, CONV_STRIDES[i], CONV_PADDINGS[i])
        conv_lens.append(cur_len)
        in_ch = CHANNELS
    L1, L2 = conv_lens
    flat = CHANNELS * L2            # == calculate_flattened_size(input_size)
    dims = [flat] + list(HIDDEN_SIZES) + [OUTPUT_SIZE]
    for i in range(len(dims) - 1):
        key, k1, k2 = jax.random.split(key, 3)
        bound = 1.0 / float(dims[i]) ** 0.5
        w = jax.random.uniform(k1, (dims[i], dims[i + 1]), jnp.float32, -bound, bound)
        b = jax.random.uniform(k2, (dims[i + 1],), jnp.float32, -bound, bound)
        raw["fc"].append((np.asarray(w), np.asarray(b)))

    # ---- fold convs into dense Toeplitz matmuls, pad everything lane-dense --
    (w1, b1), (w2, b2) = raw["conv"]
    k1sz, k2sz = KERNEL_SIZES
    s1, s2 = CONV_STRIDES
    p1, p2 = CONV_PADDINGS

    k0p = _round_up(L, LANE)
    n1, n1p = L1 * CHANNELS, _round_up(L1 * CHANNELS, LANE)
    n2, n2p = CHANNELS * L2, _round_up(CHANNELS * L2, LANE)
    outp = _round_up(OUTPUT_SIZE, LANE)

    # conv1 -> dense: input x[j] contributes to activation a1[l1*C + c]
    W1 = np.zeros((k0p, n1p), np.float32)
    for l in range(L1):
        for k in range(k1sz):
            j = l * s1 + k - p1
            if 0 <= j < L:
                W1[j, l * CHANNELS:(l + 1) * CHANNELS] += w1[:, 0, k]
    B1 = np.zeros((1, n1p), np.float32)
    B1[0, :n1] = np.tile(b1, L1)

    # conv2 -> dense: a1[l1*C + cin] contributes to a2[c*L2 + l].
    # a2 is thereby already in PyTorch's channel-major flatten order, so fc1
    # needs no runtime permutation at all.
    W2 = np.zeros((n1p, n2p), np.float32)
    cin_idx = np.arange(CHANNELS)
    cout_idx = np.arange(CHANNELS)
    for l in range(L2):
        for k in range(k2sz):
            l1 = l * s2 + k - p2
            if 0 <= l1 < L1:
                rows = l1 * CHANNELS + cin_idx
                cols = cout_idx * L2 + l
                W2[np.ix_(rows, cols)] += w2[:, :, k].T    # (Cin, Cout)
    B2 = np.zeros((1, n2p), np.float32)
    B2[0, :n2] = np.repeat(b2, L2)

    # fc layers (pad fc1's K and the final fc's N to lane multiples)
    (wf1, bf1), (wf2, bf2), (wf3, bf3) = raw["fc"]
    W3 = np.zeros((n2p, HIDDEN_SIZES[0]), np.float32)
    W3[:n2, :] = wf1
    B3 = bf1.reshape(1, -1).astype(np.float32)
    W4 = wf2.astype(np.float32)
    B4 = bf2.reshape(1, -1).astype(np.float32)
    W5 = np.zeros((HIDDEN_SIZES[1], outp), np.float32)
    W5[:, :OUTPUT_SIZE] = wf3
    B5 = np.zeros((1, outp), np.float32)
    B5[0, :OUTPUT_SIZE] = bf3

    # int8 (per-output-column scale) for the dominant folded-conv matrices;
    # fc weights stay bf16 (small).  On v7x fp8 storage would be an equivalent
    # alternative, but since we dequantize to bf16 before the dot the int8
    # form is generation-agnostic.
    W1q, S1 = _quantize_per_col_int8(W1)
    W2q, S2 = _quantize_per_col_int8(W2)

    total_bytes = (W1q.size + W2q.size                      # int8
                   + 2 * (W3.size + W4.size + W5.size)      # bf16
                   + 4 * (S1.size + S2.size
                          + B1.size + B2.size + B3.size + B4.size + B5.size))
    if total_bytes > MAX_WEIGHT_BYTES:
        # TODO(synk): for large input_size switch W2 to a banded (per-output-
        # position) layout or tile its N dim over a grid axis instead of
        # keeping the dense Toeplitz resident (v7x VMEM is only 64 MiB).
        raise ValueError(
            f"folded weights ({total_bytes / 2**20:.1f} MiB) exceed the "
            f"resident-VMEM budget ({MAX_WEIGHT_BYTES / 2**20:.0f} MiB)")

    params = {
        "weights": [jnp.asarray(W1q), jnp.asarray(W2q),
                    jnp.asarray(W3, jnp.bfloat16),
                    jnp.asarray(W4, jnp.bfloat16),
                    jnp.asarray(W5, jnp.bfloat16)],
        "scales": [jnp.asarray(S1, jnp.float32), jnp.asarray(S2, jnp.float32),
                   None, None, None],
        "biases": [jnp.asarray(Bm, jnp.float32) for Bm in (B1, B2, B3, B4, B5)],
    }
    return params, raw


# ---- pure host-side (numpy, f64) reference of the PyTorch forward_once ------
def _ref_forward_once(raw, x):
    x = np.asarray(x, np.float64)
    for i, (w, b) in enumerate(raw["conv"]):
        w = np.asarray(w, np.float64)
        b = np.asarray(b, np.float64)
        Bsz, C, L = x.shape
        Cout, Cin, K = w.shape
        s, p = CONV_STRIDES[i], CONV_PADDINGS[i]
        Lout = _conv_out_len(L, K, s, p)
        xp = np.pad(x, ((0, 0), (0, 0), (p, p)))
        idx = np.arange(Lout)[:, None] * s + np.arange(K)[None, :]
        patches = xp[:, :, idx]                             # (B, C, Lout, K)
        patches = patches.transpose(0, 2, 1, 3).reshape(Bsz, Lout, C * K)
        y = patches @ w.reshape(Cout, Cin * K).T + b        # (B, Lout, Cout)
        x = np.maximum(y, 0.0).transpose(0, 2, 1)           # (B, Cout, Lout)
    Bsz = x.shape[0]
    x = x.reshape(Bsz, -1)                                  # channel-major flatten
    for (w, b) in raw["fc"][:-1]:
        x = np.maximum(x @ np.asarray(w, np.float64) + np.asarray(b, np.float64), 0.0)
    w, b = raw["fc"][-1]
    return x @ np.asarray(w, np.float64) + np.asarray(b, np.float64)


if __name__ == "__main__":
    INPUT_SIZE = 128
    BATCH = 2

    key = jax.random.PRNGKey(0)
    key, kp, ka, kq, kn = jax.random.split(key, 5)
    params, raw = init_params(kp, INPUT_SIZE)

    anchor = jax.random.normal(ka, (BATCH, 1, INPUT_SIZE), jnp.float32)
    positive = jax.random.normal(kq, (BATCH, 1, INPUT_SIZE), jnp.float32)
    negative = jax.random.normal(kn, (BATCH, 1, INPUT_SIZE), jnp.float32)

    a_emb, p_emb, n_emb = forward(params, anchor, positive, negative)
    jax.block_until_ready((a_emb, p_emb, n_emb))

    assert a_emb.shape == (BATCH, OUTPUT_SIZE)
    assert p_emb.shape == (BATCH, OUTPUT_SIZE)
    assert n_emb.shape == (BATCH, OUTPUT_SIZE)

    # Correctness check vs an exact (numpy f64) reference of the PyTorch
    # forward.  int8 conv weights (per-column scale) + bf16 activations with
    # f32 accumulation give small drift, well inside the tolerance.
    ref = np.concatenate(
        [_ref_forward_once(raw, t) for t in (anchor, positive, negative)], axis=0)
    got = np.asarray(jnp.concatenate([a_emb, p_emb, n_emb], axis=0), np.float64)
    err = float(np.max(np.abs(got - ref)))
    assert err < 5e-2, f"max abs error vs reference: {err}"

    print("KERNEL_OK")
</pallas_src>

<mosaic_0001>
module attributes {stable_mosaic.version = 11 : i64} {
  func.func @kernel(%arg0: i32, %arg1: memref<8x128xbf16, #tpu.memory_space<vmem>>, %arg2: memref<128x2176xi8, #tpu.memory_space<vmem>>, %arg3: memref<1x2176xf32, #tpu.memory_space<vmem>>, %arg4: memref<1x2176xf32, #tpu.memory_space<vmem>>, %arg5: memref<2176x896xi8, #tpu.memory_space<vmem>>, %arg6: memref<1x896xf32, #tpu.memory_space<vmem>>, %arg7: memref<1x896xf32, #tpu.memory_space<vmem>>, %arg8: memref<896x256xbf16, #tpu.memory_space<vmem>>, %arg9: memref<1x256xf32, #tpu.memory_space<vmem>>, %arg10: memref<256x128xbf16, #tpu.memory_space<vmem>>, %arg11: memref<1x128xf32, #tpu.memory_space<vmem>>, %arg12: memref<128x128xbf16, #tpu.memory_space<vmem>>, %arg13: memref<1x128xf32, #tpu.memory_space<vmem>>, %arg14: memref<8x128xf32, #tpu.memory_space<vmem>>) attributes {dimension_semantics = [#tpu.dimension_semantics<arbitrary>], iteration_bounds = array<i64: 1>, scalar_prefetch = 0 : i64, scratch_operands = 0 : i64, tpu.core_type = #tpu.core_type<tc>, window_params = [{transform_indices = @transform_0, window_bounds = array<i64: 8, 128>}, {pipeline_mode = #tpu.pipeline_mode<synchronous>, transform_indices = @transform_1, window_bounds = array<i64: 128, 2176>}, {pipeline_mode = #tpu.pipeline_mode<synchronous>, transform_indices = @transform_2, window_bounds = array<i64: 1, 2176>}, {pipeline_mode = #tpu.pipeline_mode<synchronous>, transform_indices = @transform_3, window_bounds = array<i64: 1, 2176>}, {pipeline_mode = #tpu.pipeline_mode<synchronous>, transform_indices = @transform_4, window_bounds = array<i64: 2176, 896>}, {pipeline_mode = #tpu.pipeline_mode<synchronous>, transform_indices = @transform_5, window_bounds = array<i64: 1, 896>}, {pipeline_mode = #tpu.pipeline_mode<synchronous>, transform_indices = @transform_6, window_bounds = array<i64: 1, 896>}, {pipeline_mode = #tpu.pipeline_mode<synchronous>, transform_indices = @transform_7, window_bounds = array<i64: 896, 256>}, {pipeline_mode = #tpu.pipeline_mode<synchronous>, transform_indices = @transform_8, window_bounds = array<i64: 1, 256>}, {pipeline_mode = #tpu.pipeline_mode<synchronous>, transform_indices = @transform_9, window_bounds = array<i64: 256, 128>}, {pipeline_mode = #tpu.pipeline_mode<synchronous>, transform_indices = @transform_10, window_bounds = array<i64: 1, 128>}, {pipeline_mode = #tpu.pipeline_mode<synchronous>, transform_indices = @transform_11, window_bounds = array<i64: 128, 128>}, {pipeline_mode = #tpu.pipeline_mode<synchronous>, transform_indices = @transform_12, window_bounds = array<i64: 1, 128>}, {transform_indices = @transform_13, window_bounds = array<i64: 8, 128>}]} {
    %c0 = arith.constant 0 : index
    %c0_0 = arith.constant 0 : index
    %0 = vector.load %arg1[%c0, %c0_0] : memref<8x128xbf16, #tpu.memory_space<vmem>>, vector<8x128xbf16>
    %c0_1 = arith.constant 0 : index
    %c0_2 = arith.constant 0 : index
    %1 = vector.load %arg2[%c0_1, %c0_2] : memref<128x2176xi8, #tpu.memory_space<vmem>>, vector<128x2176xi8>
    %2 = arith.sitofp %1 : vector<128x2176xi8> to vector<128x2176xbf16>
    %cst = arith.constant dense<0.000000e+00> : vector<8x2176xf32>
    %3 = tpu.matmul %0, %2, %cst {dimension_numbers = #tpu.dot_dimension_numbers<[1], [0], [0], [1], [0, 0, 1, 1], [], []>} : vector<8x128xbf16>, vector<128x2176xbf16>, vector<8x2176xf32> -> vector<8x2176xf32>
    %c0_3 = arith.constant 0 : index
    %c0_4 = arith.constant 0 : index
    %4 = vector.load %arg3[%c0_3, %c0_4] : memref<1x2176xf32, #tpu.memory_space<vmem>>, vector<1x2176xf32>
    %5 = vector.broadcast %4 : vector<1x2176xf32> to vector<8x2176xf32>
    %6 = arith.mulf %3, %5 : vector<8x2176xf32>
    %c0_5 = arith.constant 0 : index
    %c0_6 = arith.constant 0 : index
    %7 = vector.load %arg4[%c0_5, %c0_6] : memref<1x2176xf32, #tpu.memory_space<vmem>>, vector<1x2176xf32>
    %8 = vector.broadcast %7 : vector<1x2176xf32> to vector<8x2176xf32>
    %9 = arith.addf %6, %8 : vector<8x2176xf32>
    %cst_7 = arith.constant 0.000000e+00 : f32
    %10 = vector.broadcast %cst_7 : f32 to vector<8x2176xf32>
    %11 = arith.maximumf %9, %10 : vector<8x2176xf32>
    %12 = arith.truncf %11 : vector<8x2176xf32> to vector<8x2176xbf16>
    %c0_8 = arith.constant 0 : index
    %c0_9 = arith.constant 0 : index
    %13 = vector.load %arg5[%c0_8, %c0_9] : memref<2176x896xi8, #tpu.memory_space<vmem>>, vector<2176x896xi8>
    %14 = arith.sitofp %13 : vector<2176x896xi8> to vector<2176x896xbf16>
    %cst_10 = arith.constant dense<0.000000e+00> : vector<8x896xf32>
    %15 = tpu.matmul %12, %14, %cst_10 {dimension_numbers = #tpu.dot_dimension_numbers<[1], [0], [0], [1], [0, 0, 1, 1], [], []>} : vector<8x2176xbf16>, vector<2176x896xbf16>, vector<8x896xf32> -> vector<8x896xf32>
    %c0_11 = arith.constant 0 : index
    %c0_12 = arith.constant 0 : index
    %16 = vector.load %arg6[%c0_11, %c0_12] : memref<1x896xf32, #tpu.memory_space<vmem>>, vector<1x896xf32>
    %17 = vector.broadcast %16 : vector<1x896xf32> to vector<8x896xf32>
    %18 = arith.mulf %15, %17 : vector<8x896xf32>
    %c0_13 = arith.constant 0 : index
    %c0_14 = arith.constant 0 : index
    %19 = vector.load %arg7[%c0_13, %c0_14] : memref<1x896xf32, #tpu.memory_space<vmem>>, vector<1x896xf32>
    %20 = vector.broadcast %19 : vector<1x896xf32> to vector<8x896xf32>
    %21 = arith.addf %18, %20 : vector<8x896xf32>
    %cst_15 = arith.constant 0.000000e+00 : f32
    %22 = vector.broadcast %cst_15 : f32 to vector<8x896xf32>
    %23 = arith.maximumf %21, %22 : vector<8x896xf32>
    %24 = arith.truncf %23 : vector<8x896xf32> to vector<8x896xbf16>
    %c0_16 = arith.constant 0 : index
    %c0_17 = arith.constant 0 : index
    %25 = vector.load %arg8[%c0_16, %c0_17] : memref<896x256xbf16, #tpu.memory_space<vmem>>, vector<896x256xbf16>
    %cst_18 = arith.constant dense<0.000000e+00> : vector<8x256xf32>
    %26 = tpu.matmul %24, %25, %cst_18 {dimension_numbers = #tpu.dot_dimension_numbers<[1], [0], [0], [1], [0, 0, 1, 1], [], []>} : vector<8x896xbf16>, vector<896x256xbf16>, vector<8x256xf32> -> vector<8x256xf32>
    %c0_19 = arith.constant 0 : index
    %c0_20 = arith.constant 0 : index
    %27 = vector.load %arg9[%c0_19, %c0_20] : memref<1x256xf32, #tpu.memory_space<vmem>>, vector<1x256xf32>
    %28 = vector.broadcast %27 : vector<1x256xf32> to vector<8x256xf32>
    %29 = arith.addf %26, %28 : vector<8x256xf32>
    %cst_21 = arith.constant 0.000000e+00 : f32
    %30 = vector.broadcast %cst_21 : f32 to vector<8x256xf32>
    %31 = arith.maximumf %29, %30 : vector<8x256xf32>
    %32 = arith.truncf %31 : vector<8x256xf32> to vector<8x256xbf16>
    %c0_22 = arith.constant 0 : index
    %c0_23 = arith.constant 0 : index
    %33 = vector.load %arg10[%c0_22, %c0_23] : memref<256x128xbf16, #tpu.memory_space<vmem>>, vector<256x128xbf16>
    %cst_24 = arith.constant dense<0.000000e+00> : vector<8x128xf32>
    %34 = tpu.matmul %32, %33, %cst_24 {dimension_numbers = #tpu.dot_dimension_numbers<[1], [0], [0], [1], [0, 0, 1, 1], [], []>} : vector<8x256xbf16>, vector<256x128xbf16>, vector<8x128xf32> -> vector<8x128xf32>
    %c0_25 = arith.constant 0 : index
    %c0_26 = arith.constant 0 : index
    %35 = vector.load %arg11[%c0_25, %c0_26] : memref<1x128xf32, #tpu.memory_space<vmem>>, vector<1x128xf32>
    %36 = vector.broadcast %35 : vector<1x128xf32> to vector<8x128xf32>
    %37 = arith.addf %34, %36 : vector<8x128xf32>
    %cst_27 = arith.constant 0.000000e+00 : f32
    %38 = vector.broadcast %cst_27 : f32 to vector<8x128xf32>
    %39 = arith.maximumf %37, %38 : vector<8x128xf32>
    %40 = arith.truncf %39 : vector<8x128xf32> to vector<8x128xbf16>
    %c0_28 = arith.constant 0 : index
    %c0_29 = arith.constant 0 : index
    %41 = vector.load %arg12[%c0_28, %c0_29] : memref<128x128xbf16, #tpu.memory_space<vmem>>, vector<128x128xbf16>
    %cst_30 = arith.constant dense<0.000000e+00> : vector<8x128xf32>
    %42 = tpu.matmul %40, %41, %cst_30 {dimension_numbers = #tpu.dot_dimension_numbers<[1], [0], [0], [1], [0, 0, 1, 1], [], []>} : vector<8x128xbf16>, vector<128x128xbf16>, vector<8x128xf32> -> vector<8x128xf32>
    %c0_31 = arith.constant 0 : index
    %c0_32 = arith.constant 0 : index
    %43 = vector.load %arg13[%c0_31, %c0_32] : memref<1x128xf32, #tpu.memory_space<vmem>>, vector<1x128xf32>
    %44 = vector.broadcast %43 : vector<1x128xf32> to vector<8x128xf32>
    %45 = arith.addf %42, %44 : vector<8x128xf32>
    %c0_33 = arith.constant 0 : index
    %c0_34 = arith.constant 0 : index
    %46 = vector.load %arg14[%c0_33, %c0_34] : memref<8x128xf32, #tpu.memory_space<vmem>>, vector<8x128xf32>
    tpu.vector_store %arg14[%c0_33, %c0_34], %45 {strides = array<i32>} : memref<8x128xf32, #tpu.memory_space<vmem>>, vector<8x128xf32>,
    return
  }
  func.func @transform_0(%arg0: i32) -> (i32, i32) {
    %c0_i32 = arith.constant 0 : i32
    %c0_i32_0 = arith.constant 0 : i32
    return %arg0, %c0_i32 : i32, i32
  }
  func.func @transform_1(%arg0: i32) -> (i32, i32) {
    %c0_i32 = arith.constant 0 : i32
    %c0_i32_0 = arith.constant 0 : i32
    %c0_i32_1 = arith.constant 0 : i32
    return %c0_i32, %c0_i32_0 : i32, i32
  }
  func.func @transform_2(%arg0: i32) -> (i32, i32) {
    %c0_i32 = arith.constant 0 : i32
    %c0_i32_0 = arith.constant 0 : i32
    %c0_i32_1 = arith.constant 0 : i32
    return %c0_i32, %c0_i32_0 : i32, i32
  }
  func.func @transform_3(%arg0: i32) -> (i32, i32) {
    %c0_i32 = arith.constant 0 : i32
    %c0_i32_0 = arith.constant 0 : i32
    %c0_i32_1 = arith.constant 0 : i32
    return %c0_i32, %c0_i32_0 : i32, i32
  }
  func.func @transform_4(%arg0: i32) -> (i32, i32) {
    %c0_i32 = arith.constant 0 : i32
    %c0_i32_0 = arith.constant 0 : i32
    %c0_i32_1 = arith.constant 0 : i32
    return %c0_i32, %c0_i32_0 : i32, i32
  }
  func.func @transform_5(%arg0: i32) -> (i32, i32) {
    %c0_i32 = arith.constant 0 : i32
    %c0_i32_0 = arith.constant 0 : i32
    %c0_i32_1 = arith.constant 0 : i32
    return %c0_i32, %c0_i32_0 : i32, i32
  }
  func.func @transform_6(%arg0: i32) -> (i32, i32) {
    %c0_i32 = arith.constant 0 : i32
    %c0_i32_0 = arith.constant 0 : i32
    %c0_i32_1 = arith.constant 0 : i32
    return %c0_i32, %c0_i32_0 : i32, i32
  }
  func.func @transform_7(%arg0: i32) -> (i32, i32) {
    %c0_i32 = arith.constant 0 : i32
    %c0_i32_0 = arith.constant 0 : i32
    %c0_i32_1 = arith.constant 0 : i32
    return %c0_i32, %c0_i32_0 : i32, i32
  }
  func.func @transform_8(%arg0: i32) -> (i32, i32) {
    %c0_i32 = arith.constant 0 : i32
    %c0_i32_0 = arith.constant 0 : i32
    %c0_i32_1 = arith.constant 0 : i32
    return %c0_i32, %c0_i32_0 : i32, i32
  }
  func.func @transform_9(%arg0: i32) -> (i32, i32) {
    %c0_i32 = arith.constant 0 : i32
    %c0_i32_0 = arith.constant 0 : i32
    %c0_i32_1 = arith.constant 0 : i32
    return %c0_i32, %c0_i32_0 : i32, i32
  }
  func.func @transform_10(%arg0: i32) -> (i32, i32) {
    %c0_i32 = arith.constant 0 : i32
    %c0_i32_0 = arith.constant 0 : i32
    %c0_i32_1 = arith.constant 0 : i32
    return %c0_i32, %c0_i32_0 : i32, i32
  }
  func.func @transform_11(%arg0: i32) -> (i32, i32) {
    %c0_i32 = arith.constant 0 : i32
    %c0_i32_0 = arith.constant 0 : i32
    %c0_i32_1 = arith.constant 0 : i32
    return %c0_i32, %c0_i32_0 : i32, i32
  }
  func.func @transform_12(%arg0: i32) -> (i32, i32) {
    %c0_i32 = arith.constant 0 : i32
    %c0_i32_0 = arith.constant 0 : i32
    %c0_i32_1 = arith.constant 0 : i32
    return %c0_i32, %c0_i32_0 : i32, i32
  }
  func.func @transform_13(%arg0: i32) -> (i32, i32) {
    %c0_i32 = arith.constant 0 : i32
    %c0_i32_0 = arith.constant 0 : i32
    return %arg0, %c0_i32 : i32, i32
  }
}

</mosaic_0001>

<llo_original>
// kernel: forward.1
$region0: #{forward.1}
  #allocation0 [shape = 'u32[]', space=smem, size = 0x4, offset = 0x4, fixed_abs, tag = 'smem constant byte address 0x4 - core index']
  #allocation1 [shape = 'u32[144,128]{1,0:T(1,128)}', space=vmem, size = 0x12000, scoped, tag = 'internal scratch']
  %s0 = inlined_call_operand.vmem [shape: bf16[8,128], index: 0, kind: input, shape index: {}]
  %s1 = inlined_call_operand.hbm [shape: s8[128,2176], index: 1, kind: input, shape index: {}]
  %s2 = inlined_call_operand.hbm [shape: f32[1,2176], index: 2, kind: input, shape index: {}]
  %s3 = inlined_call_operand.hbm [shape: f32[1,2176], index: 3, kind: input, shape index: {}]
  %s4 = inlined_call_operand.hbm [shape: s8[2176,896], index: 4, kind: input, shape index: {}]
  %s5 = inlined_call_operand.hbm [shape: f32[1,896], index: 5, kind: input, shape index: {}]
  %s6 = inlined_call_operand.hbm [shape: f32[1,896], index: 6, kind: input, shape index: {}]
  %s7 = inlined_call_operand.hbm [shape: bf16[896,256], index: 7, kind: input, shape index: {}]
  %s8 = inlined_call_operand.hbm [shape: f32[1,256], index: 8, kind: input, shape index: {}]
  %s9 = inlined_call_operand.hbm [shape: bf16[256,128], index: 9, kind: input, shape index: {}]
  %s10 = inlined_call_operand.hbm [shape: f32[1,128], index: 10, kind: input, shape index: {}]
  %s11 = inlined_call_operand.hbm [shape: bf16[128,128], index: 11, kind: input, shape index: {}]
  %s12 = inlined_call_operand.hbm [shape: f32[1,128], index: 12, kind: input, shape index: {}]
  %s13 = inlined_call_operand.vmem [shape: f32[8,128], index: 13, kind: output, shape index: {}]
  %s14 = sld [smem:[#allocation0]]
  $region110: #{forward.1} parent=0
    _
  %s16 = ssub.s32 1, %s14
  %s17 = scalar_select 0, %s16, %s14
  $region1: #{forward.1} parent=0
    #allocation2 [shape = 'u8[278528]{0}', space=vmem, size = 0x44000, scoped, tag = 'input window, operand 1, single buffered']
    #allocation3 [shape = 's32[1]{0}', space=sflag, size = 0x4, scoped, tag = 'scoped memory for forward.1']
    #allocation4 [shape = 'u8[8704]{0}', space=vmem, size = 0x2400, scoped, tag = 'input window, operand 2, single buffered']
    #allocation5 [shape = 's32[1]{0}', space=sflag, size = 0x4, scoped, tag = 'scoped memory for forward.1']
    #allocation6 [shape = 'u8[8704]{0}', space=vmem, size = 0x2400, scoped, tag = 'input window, operand 3, single buffered']
    #allocation7 [shape = 'u8[1949696]{0}', space=vmem, size = 0x1dc000, scoped, tag = 'input window, operand 4, single buffered']
    #allocation8 [shape = 's32[1]{0}', space=sflag, size = 0x4, scoped, tag = 'scoped memory for forward.1']
    #allocation9 [shape = 'u8[3584]{0}', space=vmem, size = 0x1000, scoped, tag = 'input window, operand 5, single buffered']
    #allocation10 [shape = 'u8[3584]{0}', space=vmem, size = 0x1000, scoped, tag = 'input window, operand 6, single buffered']
    #allocation11 [shape = 's32[1]{0}', space=sflag, size = 0x4, scoped, tag = 'scoped memory for forward.1']
    #allocation12 [shape = 'u8[458752]{0}', space=vmem, size = 0x70000, scoped, tag = 'input window, operand 7, single buffered']
    #allocation13 [shape = 'u8[1024]{0}', space=vmem, size = 0x400, scoped, tag = 'input window, operand 8, single buffered']
    #allocation14 [shape = 's32[1]{0}', space=sflag, size = 0x4, scoped, tag = 'scoped memory for forward.1']
    #allocation15 [shape = 'u8[65536]{0}', space=vmem, size = 0x10000, scoped, tag = 'input window, operand 9, single buffered']
    #allocation16 [shape = 'u8[512]{0}', space=vmem, size = 0x400, scoped, tag = 'input window, operand 10, single buffered']
    #allocation17 [shape = 's32[1]{0}', space=sflag, size = 0x4, scoped, tag = 'scoped memory for forward.1']
    #allocation18 [shape = 'u8[32768]{0}', space=vmem, size = 0x8000, scoped, tag = 'input window, operand 11, single buffered']
    #allocation19 [shape = 'u8[512]{0}', space=vmem, size = 0x400, scoped, tag = 'input window, operand 12, single buffered']
    #allocation20 [shape = 's32[1]{0}', space=sflag, size = 0x4, scoped, tag = 'scoped memory for forward.1']
    %18 = vsyncpa [#allocation3], 0
    %19 = vsyncpa [#allocation5], 0
    %20 = vsyncpa [#allocation8], 0
    %21 = vsyncpa [#allocation11], 0
    %22 = vsyncpa [#allocation14], 0
    %23 = vsyncpa [#allocation17], 0
    %24 = vsyncpa [#allocation20], 0
    // Predicated region
    $region2: #{forward.1} parent=1 // pred_check
      _
    $region3: #{forward.1} parent=1 // pred_check_branch
      %26 = sbr.rel (0) target = $region5
    $region4: #{forward.1} parent=1 // pred_region
      _
    $region5: #{forward.1} parent=1 // pred_fallthru
      _
    // Predicated region
    $region6: #{forward.1} parent=1 // pred_check
      _
    $region7: #{forward.1} parent=1 // pred_check_branch
      %28 = sbr.rel (0) target = $region9
    $region8: #{forward.1} parent=1 // pred_region
      %s30 = ssub.s32 8704, 8704
      %31 = vsyncadd [#allocation3], %s30
      %s32 = sshll.u32 [#allocation2], 4
      %s33 = int_to_ptr.vmem [resolvable:$true] %s32
      %38 = dma.hbm_to_vmem [thread:$0]  %s1, 8704, %s33, [#allocation3], 2176, 2176, 136
    $region9: #{forward.1} parent=1 // pred_fallthru
      _
    // Predicated region
    $region10: #{forward.1} parent=1 // pred_check
      _
    $region11: #{forward.1} parent=1 // pred_check_branch
      %40 = sbr.rel (0) target = $region13
    $region12: #{forward.1} parent=1 // pred_region
      %s42 = ssub.s32 272, 272
      %43 = vsyncadd [#allocation5], %s42
      %s45 = sshll.u32 [#allocation4], 4
      %s46 = int_to_ptr.vmem [resolvable:$true] %s45
      %48 = dma.hbm_to_vmem [thread:$0]  %s2, 272, %s46, [#allocation5]
    $region13: #{forward.1} parent=1 // pred_fallthru
      _
    // Predicated region
    $region14: #{forward.1} parent=1 // pred_check
      _
    $region15: #{forward.1} parent=1 // pred_check_branch
      %50 = sbr.rel (0) target = $region17
    $region16: #{forward.1} parent=1 // pred_region
      %s52 = ssub.s32 272, 272
      %53 = vsyncadd [#allocation5], %s52
      %s55 = sshll.u32 [#allocation6], 4
      %s56 = int_to_ptr.vmem [resolvable:$true] %s55
      %58 = dma.hbm_to_vmem [thread:$0]  %s3, 272, %s56, [#allocation5]
    $region17: #{forward.1} parent=1 // pred_fallthru
      _
    // Predicated region
    $region18: #{forward.1} parent=1 // pred_check
      _
    $region19: #{forward.1} parent=1 // pred_check_branch
      %60 = sbr.rel (0) target = $region21
    $region20: #{forward.1} parent=1 // pred_region
      %s62 = ssub.s32 60928, 60928
      %63 = vsyncadd [#allocation8], %s62
      %s64 = sshll.u32 [#allocation7], 4
      %s65 = int_to_ptr.vmem [resolvable:$true] %s64
      %70 = dma.hbm_to_vmem [thread:$0]  %s4, 60928, %s65, [#allocation8], 896, 896, 56
    $region21: #{forward.1} parent=1 // pred_fallthru
      _
    // Predicated region
    $region22: #{forward.1} parent=1 // pred_check
      _
    $region23: #{forward.1} parent=1 // pred_check_branch
      %72 = sbr.rel (0) target = $region25
    $region24: #{forward.1} parent=1 // pred_region
      %s74 = ssub.s32 112, 112
      %75 = vsyncadd [#allocation8], %s74
      %s77 = sshll.u32 [#allocation9], 4
      %s78 = int_to_ptr.vmem [resolvable:$true] %s77
      %80 = dma.hbm_to_vmem [thread:$0]  %s5, 112, %s78, [#allocation8]
    $region25: #{forward.1} parent=1 // pred_fallthru
      _
    // Predicated region
    $region26: #{forward.1} parent=1 // pred_check
      _
    $region27: #{forward.1} parent=1 // pred_check_branch
      %82 = sbr.rel (0) target = $region29
    $region28: #{forward.1} parent=1 // pred_region
      %s84 = ssub.s32 112, 112
      %85 = vsyncadd [#allocation11], %s84
      %s87 = sshll.u32 [#allocation10], 4
      %s88 = int_to_ptr.vmem [resolvable:$true] %s87
      %90 = dma.hbm_to_vmem [thread:$0]  %s6, 112, %s88, [#allocation11]
    $region29: #{forward.1} parent=1 // pred_fallthru
      _
    // Predicated region
    $region30: #{forward.1} parent=1 // pred_check
      _
    $region31: #{forward.1} parent=1 // pred_check_branch
      %92 = sbr.rel (0) target = $region33
    $region32: #{forward.1} parent=1 // pred_region
      %s94 = ssub.s32 14336, 14336
      %95 = vsyncadd [#allocation11], %s94
      %s96 = sshll.u32 [#allocation12], 4
      %s97 = int_to_ptr.vmem [resolvable:$true] %s96
      %102 = dma.hbm_to_vmem [thread:$0]  %s7, 14336, %s97, [#allocation11], 128, 128, 8
    $region33: #{forward.1} parent=1 // pred_fallthru
      _
    // Predicated region
    $region34: #{forward.1} parent=1 // pred_check
      _
    $region35: #{forward.1} parent=1 // pred_check_branch
      %104 = sbr.rel (0) target = $region37
    $region36: #{forward.1} parent=1 // pred_region
      %s106 = ssub.s32 32, 32
      %107 = vsyncadd [#allocation14], %s106
      %s109 = sshll.u32 [#allocation13], 4
      %s110 = int_to_ptr.vmem [resolvable:$true] %s109
      %112 = dma.hbm_to_vmem [thread:$0]  %s8, 32, %s110, [#allocation14]
    $region37: #{forward.1} parent=1 // pred_fallthru
      _
    // Predicated region
    $region38: #{forward.1} parent=1 // pred_check
      _
    $region39: #{forward.1} parent=1 // pred_check_branch
      %114 = sbr.rel (0) target = $region41
    $region40: #{forward.1} parent=1 // pred_region
      %s116 = ssub.s32 2048, 2048
      %117 = vsyncadd [#allocation14], %s116
      %s118 = sshll.u32 [#allocation15], 4
      %s119 = int_to_ptr.vmem [resolvable:$true] %s118
      %124 = dma.hbm_to_vmem [thread:$0]  %s9, 2048, %s119, [#allocation14], 64, 64, 4
    $region41: #{forward.1} parent=1 // pred_fallthru
      _
    // Predicated region
    $region42: #{forward.1} parent=1 // pred_check
      _
    $region43: #{forward.1} parent=1 // pred_check_branch
      %126 = sbr.rel (0) target = $region45
    $region44: #{forward.1} parent=1 // pred_region
      %s128 = ssub.s32 16, 16
      %129 = vsyncadd [#allocation17], %s128
      %s131 = sshll.u32 [#allocation16], 4
      %s132 = int_to_ptr.vmem [resolvable:$true] %s131
      %134 = dma.hbm_to_vmem [thread:$0]  %s10, 16, %s132, [#allocation17]
    $region45: #{forward.1} parent=1 // pred_fallthru
      _
    // Predicated region
    $region46: #{forward.1} parent=1 // pred_check
      _
    $region47: #{forward.1} parent=1 // pred_check_branch
      %136 = sbr.rel (0) target = $region49
    $region48: #{forward.1} parent=1 // pred_region
      %s138 = ssub.s32 1024, 1024
      %139 = vsyncadd [#allocation17], %s138
      %s140 = sshll.u32 [#allocation18], 4
      %s141 = int_to_ptr.vmem [resolvable:$true] %s140
      %146 = dma.hbm_to_vmem [thread:$0]  %s11, 1024, %s141, [#allocation17], 64, 64, 4
    $region49: #{forward.1} parent=1 // pred_fallthru
      _
    // Predicated region
    $region50: #{forward.1} parent=1 // pred_check
      _
    $region51: #{forward.1} parent=1 // pred_check_branch
      %148 = sbr.rel (0) target = $region53
    $region52: #{forward.1} parent=1 // pred_region
      %s150 = ssub.s32 16, 16
      %151 = vsyncadd [#allocation20], %s150
      %s153 = sshll.u32 [#allocation19], 4
      %s154 = int_to_ptr.vmem [resolvable:$true] %s153
      %156 = dma.hbm_to_vmem [thread:$0]  %s12, 16, %s154, [#allocation20]
    $region53: #{forward.1} parent=1 // pred_fallthru
      _
    // Predicated region
    $region54: #{forward.1} parent=1 // pred_check
      _
    $region55: #{forward.1} parent=1 // pred_check_branch
      %158 = sbr.rel (0) target = $region57
    $region56: #{forward.1} parent=1 // pred_region
      %159 = dma.done [#allocation3], 8704
    $region57: #{forward.1} parent=1 // pred_fallthru
      _
    // Predicated region
    $region58: #{forward.1} parent=1 // pred_check
      _
    $region59: #{forward.1} parent=1 // pred_check_branch
      %161 = sbr.rel (0) target = $region61
    $region60: #{forward.1} parent=1 // pred_region
      %162 = dma.done [#allocation5], 272
    $region61: #{forward.1} parent=1 // pred_fallthru
      _
    // Predicated region
    $region62: #{forward.1} parent=1 // pred_check
      _
    $region63: #{forward.1} parent=1 // pred_check_branch
      %164 = sbr.rel (0) target = $region65
    $region64: #{forward.1} parent=1 // pred_region
      %165 = dma.done [#allocation5], 272
    $region65: #{forward.1} parent=1 // pred_fallthru
      _
    // Predicated region
    $region66: #{forward.1} parent=1 // pred_check
      _
    $region67: #{forward.1} parent=1 // pred_check_branch
      %167 = sbr.rel (0) target = $region69
    $region68: #{forward.1} parent=1 // pred_region
      %168 = dma.done [#allocation8], 60928
    $region69: #{forward.1} parent=1 // pred_fallthru
      _
    // Predicated region
    $region70: #{forward.1} parent=1 // pred_check
      _
    $region71: #{forward.1} parent=1 // pred_check_branch
      %170 = sbr.rel (0) target = $region73
    $region72: #{forward.1} parent=1 // pred_region
      %171 = dma.done [#allocation8], 112
    $region73: #{forward.1} parent=1 // pred_fallthru
      _
    // Predicated region
    $region74: #{forward.1} parent=1 // pred_check
      _
    $region75: #{forward.1} parent=1 // pred_check_branch
      %173 = sbr.rel (0) target = $region77
    $region76: #{forward.1} parent=1 // pred_region
      %174 = dma.done [#allocation11], 112
    $region77: #{forward.1} parent=1 // pred_fallthru
      _
    // Predicated region
    $region78: #{forward.1} parent=1 // pred_check
      _
    $region79: #{forward.1} parent=1 // pred_check_branch
      %176 = sbr.rel (0) target = $region81
    $region80: #{forward.1} parent=1 // pred_region
      %177 = dma.done [#allocation11], 14336
    $region81: #{forward.1} parent=1 // pred_fallthru
      _
    // Predicated region
    $region82: #{forward.1} parent=1 // pred_check
      _
    $region83: #{forward.1} parent=1 // pred_check_branch
      %179 = sbr.rel (0) target = $region85
    $region84: #{forward.1} parent=1 // pred_region
      %180 = dma.done [#allocation14], 32
    $region85: #{forward.1} parent=1 // pred_fallthru
      _
    // Predicated region
    $region86: #{forward.1} parent=1 // pred_check
      _
    $region87: #{forward.1} parent=1 // pred_check_branch
      %182 = sbr.rel (0) target = $region89
    $region88: #{forward.1} parent=1 // pred_region
      %183 = dma.done [#allocation14], 2048
    $region89: #{forward.1} parent=1 // pred_fallthru
      _
    // Predicated region
    $region90: #{forward.1} parent=1 // pred_check
      _
    $region91: #{forward.1} parent=1 // pred_check_branch
      %185 = sbr.rel (0) target = $region93
    $region92: #{forward.1} parent=1 // pred_region
      %186 = dma.done [#allocation17], 16
    $region93: #{forward.1} parent=1 // pred_fallthru
      _
    // Predicated region
    $region94: #{forward.1} parent=1 // pred_check
      _
    $region95: #{forward.1} parent=1 // pred_check_branch
      %188 = sbr.rel (0) target = $region97
    $region96: #{forward.1} parent=1 // pred_region
      %189 = dma.done [#allocation17], 1024
    $region97: #{forward.1} parent=1 // pred_fallthru
      _
    // Predicated region
    $region98: #{forward.1} parent=1 // pred_check
      _
    $region99: #{forward.1} parent=1 // pred_check_branch
      %191 = sbr.rel (0) target = $region101
    $region100: #{forward.1} parent=1 // pred_region
      %192 = dma.done [#allocation20], 16
    $region101: #{forward.1} parent=1 // pred_fallthru
      _
    %v194 = vld [vmem:[%s0] sm:$0xf]
    %v195 = vld [vmem:[#allocation2] sm:$0xff]
    %v196 = vld [vmem:[#allocation2 + $0x8] sm:$0xff]
    %v197 = vld [vmem:[#allocation2 + $0x10] sm:$0xff]
    %v198 = vld [vmem:[#allocation2 + $0x18] sm:$0xff]
    %v199 = vld [vmem:[#allocation2 + $0x20] sm:$0xff]
    %v200 = vld [vmem:[#allocation2 + $0x28] sm:$0xff]
    %v201 = vld [vmem:[#allocation2 + $0x30] sm:$0xff]
    %v202 = vld [vmem:[#allocation2 + $0x38] sm:$0xff]
    %v203 = vld [vmem:[#allocation2 + $0x40] sm:$0xff]
    %v204 = vld [vmem:[#allocation2 + $0x48] sm:$0xff]
    %v205 = vld [vmem:[#allocation2 + $0x50] sm:$0xff]
    %v206 = vld [vmem:[#allocation2 + $0x58] sm:$0xff]
    %v207 = vld [vmem:[#allocation2 + $0x60] sm:$0xff]
    %v208 = vld [vmem:[#allocation2 + $0x68] sm:$0xff]
    %v209 = vld [vmem:[#allocation2 + $0x70] sm:$0xff]
    %v210 = vld [vmem:[#allocation2 + $0x78] sm:$0xff]
    %v211 = vld [vmem:[#allocation2 + $0x80] sm:$0xff]
    %v212 = vld [vmem:[#allocation2 + $0x88] sm:$0xff]
    %v213 = vld [vmem:[#allocation2 + $0x90] sm:$0xff]
    %v214 = vld [vmem:[#allocation2 + $0x98] sm:$0xff]
    %v215 = vld [vmem:[#allocation2 + $0xa0] sm:$0xff]
    %v216 = vld [vmem:[#allocation2 + $0xa8] sm:$0xff]
    %v217 = vld [vmem:[#allocation2 + $0xb0] sm:$0xff]
    %v218 = vld [vmem:[#allocation2 + $0xb8] sm:$0xff]
    %v219 = vld [vmem:[#allocation2 + $0xc0] sm:$0xff]
    %v220 = vld [vmem:[#allocation2 + $0xc8] sm:$0xff]
    %v221 = vld [vmem:[#allocation2 + $0xd0] sm:$0xff]
    %v222 = vld [vmem:[#allocation2 + $0xd8] sm:$0xff]
    %v223 = vld [vmem:[#allocation2 + $0xe0] sm:$0xff]
    %v224 = vld [vmem:[#allocation2 + $0xe8] sm:$0xff]
    %v225 = vld [vmem:[#allocation2 + $0xf0] sm:$0xff]
    %v226 = vld [vmem:[#allocation2 + $0xf8] sm:$0xff]
    %v227 = vld [vmem:[#allocation2 + $0x100] sm:$0xff]
    %v228 = vld [vmem:[#allocation2 + $0x108] sm:$0xff]
    %v229 = vld [vmem:[#allocation2 + $0x110] sm:$0xff]
    %v230 = vld [vmem:[#allocation2 + $0x118] sm:$0xff]
    %v231 = vld [vmem:[#allocation2 + $0x120] sm:$0xff]
    %v232 = vld [vmem:[#allocation2 + $0x128] sm:$0xff]
    %v233 = vld [vmem:[#allocation2 + $0x130] sm:$0xff]
    %v234 = vld [vmem:[#allocation2 + $0x138] sm:$0xff]
    %v235 = vld [vmem:[#allocation2 + $0x140] sm:$0xff]
    %v236 = vld [vmem:[#allocation2 + $0x148] sm:$0xff]
    %v237 = vld [vmem:[#allocation2 + $0x150] sm:$0xff]
    %v238 = vld [vmem:[#allocation2 + $0x158] sm:$0xff]
    %v239 = vld [vmem:[#allocation2 + $0x160] sm:$0xff]
    %v240 = vld [vmem:[#allocation2 + $0x168] sm:$0xff]
    %v241 = vld [vmem:[#allocation2 + $0x170] sm:$0xff]
    %v242 = vld [vmem:[#allocation2 + $0x178] sm:$0xff]
    %v243 = vld [vmem:[#allocation2 + $0x180] sm:$0xff]
    %v244 = vld [vmem:[#allocation2 + $0x188] sm:$0xff]
    %v245 = vld [vmem:[#allocation2 + $0x190] sm:$0xff]
    %v246 = vld [vmem:[#allocation2 + $0x198] sm:$0xff]
    %v247 = vld [vmem:[#allocation2 + $0x1a0] sm:$0xff]
    %v248 = vld [vmem:[#allocation2 + $0x1a8] sm:$0xff]
    %v249 = vld [vmem:[#allocation2 + $0x1b0] sm:$0xff]
    %v250 = vld [vmem:[#allocation2 + $0x1b8] sm:$0xff]
    %v251 = vld [vmem:[#allocation2 + $0x1c0] sm:$0xff]
    %v252 = vld [vmem:[#allocation2 + $0x1c8] sm:$0xff]
    %v253 = vld [vmem:[#allocation2 + $0x1d0] sm:$0xff]
    %v254 = vld [vmem:[#allocation2 + $0x1d8] sm:$0xff]
    %v255 = vld [vmem:[#allocation2 + $0x1e0] sm:$0xff]
    %v256 = vld [vmem:[#allocation2 + $0x1e8] sm:$0xff]
    %v257 = vld [vmem:[#allocation2 + $0x1f0] sm:$0xff]
    %v258 = vld [vmem:[#allocation2 + $0x1f8] sm:$0xff]
    %v259 = vld [vmem:[#allocation2 + $0x200] sm:$0xff]
    %v260 = vld [vmem:[#allocation2 + $0x208] sm:$0xff]
    %v261 = vld [vmem:[#allocation2 + $0x210] sm:$0xff]
    %v262 = vld [vmem:[#allocation2 + $0x218] sm:$0xff]
    %v263 = vunpack.c.l.s8.bf16 %v195
    %v264 = vunpack.c.l.s8.bf16 %v196
    %v265 = vunpack.c.l.s8.bf16 %v197
    %v266 = vunpack.c.l.s8.bf16 %v198
    %v267 = vunpack.c.l.s8.bf16 %v199
    %v268 = vunpack.c.l.s8.bf16 %v200
    %v269 = vunpack.c.l.s8.bf16 %v201
    %v270 = vunpack.c.l.s8.bf16 %v202
    %v271 = vunpack.c.l.s8.bf16 %v203
    %v272 = vunpack.c.l.s8.bf16 %v204
    %v273 = vunpack.c.l.s8.bf16 %v205
    %v274 = vunpack.c.l.s8.bf16 %v206
    %v275 = vunpack.c.l.s8.bf16 %v207
    %v276 = vunpack.c.l.s8.bf16 %v208
    %v277 = vunpack.c.l.s8.bf16 %v209
    %v278 = vunpack.c.l.s8.bf16 %v210
    %v279 = vunpack.c.l.s8.bf16 %v211
    %v280 = vunpack.c.h.s8.bf16 %v195
    %v281 = vunpack.c.h.s8.bf16 %v196
    %v282 = vunpack.c.h.s8.bf16 %v197
    %v283 = vunpack.c.h.s8.bf16 %v198
    %v284 = vunpack.c.h.s8.bf16 %v199
    %v285 = vunpack.c.h.s8.bf16 %v200
    %v286 = vunpack.c.h.s8.bf16 %v201
    %v287 = vunpack.c.h.s8.bf16 %v202
    %v288 = vunpack.c.h.s8.bf16 %v203
    %v289 = vunpack.c.h.s8.bf16 %v204
    %v290 = vunpack.c.h.s8.bf16 %v205
    %v291 = vunpack.c.h.s8.bf16 %v206
    %v292 = vunpack.c.h.s8.bf16 %v207
    %v293 = vunpack.c.h.s8.bf16 %v208
    %v294 = vunpack.c.h.s8.bf16 %v209
    %v295 = vunpack.c.h.s8.bf16 %v210
    %v296 = vunpack.c.h.s8.bf16 %v211
    %v297 = vunpack.c.l.s8.bf16 %v212
    %v298 = vunpack.c.l.s8.bf16 %v213
    %v299 = vunpack.c.l.s8.bf16 %v214
    %v300 = vunpack.c.l.s8.bf16 %v215
    %v301 = vunpack.c.l.s8.bf16 %v216
    %v302 = vunpack.c.l.s8.bf16 %v217
    %v303 = vunpack.c.l.s8.bf16 %v218
    %v304 = vunpack.c.l.s8.bf16 %v219
    %v305 = vunpack.c.l.s8.bf16 %v220
    %v306 = vunpack.c.l.s8.bf16 %v221
    %v307 = vunpack.c.l.s8.bf16 %v222
    %v308 = vunpack.c.l.s8.bf16 %v223
    %v309 = vunpack.c.l.s8.bf16 %v224
    %v310 = vunpack.c.l.s8.bf16 %v225
    %v311 = vunpack.c.l.s8.bf16 %v226
    %v312 = vunpack.c.l.s8.bf16 %v227
    %v313 = vunpack.c.l.s8.bf16 %v228
    %v314 = vunpack.c.h.s8.bf16 %v212
    %v315 = vunpack.c.h.s8.bf16 %v213
    %v316 = vunpack.c.h.s8.bf16 %v214
    %v317 = vunpack.c.h.s8.bf16 %v215
    %v318 = vunpack.c.h.s8.bf16 %v216
    %v319 = vunpack.c.h.s8.bf16 %v217
    %v320 = vunpack.c.h.s8.bf16 %v218
    %v321 = vunpack.c.h.s8.bf16 %v219
    %v322 = vunpack.c.h.s8.bf16 %v220
    %v323 = vunpack.c.h.s8.bf16 %v221
    %v324 = vunpack.c.h.s8.bf16 %v222
    %v325 = vunpack.c.h.s8.bf16 %v223
    %v326 = vunpack.c.h.s8.bf16 %v224
    %v327 = vunpack.c.h.s8.bf16 %v225
    %v328 = vunpack.c.h.s8.bf16 %v226
    %v329 = vunpack.c.h.s8.bf16 %v227
    %v330 = vunpack.c.h.s8.bf16 %v228
    %v331 = vunpack.c.l.s8.bf16 %v229
    %v332 = vunpack.c.l.s8.bf16 %v230
    %v333 = vunpack.c.l.s8.bf16 %v231
    %v334 = vunpack.c.l.s8.bf16 %v232
    %v335 = vunpack.c.l.s8.bf16 %v233
    %v336 = vunpack.c.l.s8.bf16 %v234
    %v337 = vunpack.c.l.s8.bf16 %v235
    %v338 = vunpack.c.l.s8.bf16 %v236
    %v339 = vunpack.c.l.s8.bf16 %v237
    %v340 = vunpack.c.l.s8.bf16 %v238
    %v341 = vunpack.c.l.s8.bf16 %v239
    %v342 = vunpack.c.l.s8.bf16 %v240
    %v343 = vunpack.c.l.s8.bf16 %v241
    %v344 = vunpack.c.l.s8.bf16 %v242
    %v345 = vunpack.c.l.s8.bf16 %v243
    %v346 = vunpack.c.l.s8.bf16 %v244
    %v347 = vunpack.c.l.s8.bf16 %v245
    %v348 = vunpack.c.h.s8.bf16 %v229
    %v349 = vunpack.c.h.s8.bf16 %v230
    %v350 = vunpack.c.h.s8.bf16 %v231
    %v351 = vunpack.c.h.s8.bf16 %v232
    %v352 = vunpack.c.h.s8.bf16 %v233
    %v353 = vunpack.c.h.s8.bf16 %v234
    %v354 = vunpack.c.h.s8.bf16 %v235
    %v355 = vunpack.c.h.s8.bf16 %v236
    %v356 = vunpack.c.h.s8.bf16 %v237
    %v357 = vunpack.c.h.s8.bf16 %v238
    %v358 = vunpack.c.h.s8.bf16 %v239
    %v359 = vunpack.c.h.s8.bf16 %v240
    %v360 = vunpack.c.h.s8.bf16 %v241
    %v361 = vunpack.c.h.s8.bf16 %v242
    %v362 = vunpack.c.h.s8.bf16 %v243
    %v363 = vunpack.c.h.s8.bf16 %v244
    %v364 = vunpack.c.h.s8.bf16 %v245
    %v365 = vunpack.c.l.s8.bf16 %v246
    %v366 = vunpack.c.l.s8.bf16 %v247
    %v367 = vunpack.c.l.s8.bf16 %v248
    %v368 = vunpack.c.l.s8.bf16 %v249
    %v369 = vunpack.c.l.s8.bf16 %v250
    %v370 = vunpack.c.l.s8.bf16 %v251
    %v371 = vunpack.c.l.s8.bf16 %v252
    %v372 = vunpack.c.l.s8.bf16 %v253
    %v373 = vunpack.c.l.s8.bf16 %v254
    %v374 = vunpack.c.l.s8.bf16 %v255
    %v375 = vunpack.c.l.s8.bf16 %v256
    %v376 = vunpack.c.l.s8.bf16 %v257
    %v377 = vunpack.c.l.s8.bf16 %v258
    %v378 = vunpack.c.l.s8.bf16 %v259
    %v379 = vunpack.c.l.s8.bf16 %v260
    %v380 = vunpack.c.l.s8.bf16 %v261
    %v381 = vunpack.c.l.s8.bf16 %v262
    %v382 = vunpack.c.h.s8.bf16 %v246
    %v383 = vunpack.c.h.s8.bf16 %v247
    %v384 = vunpack.c.h.s8.bf16 %v248
    %v385 = vunpack.c.h.s8.bf16 %v249
    %v386 = vunpack.c.h.s8.bf16 %v250
    %v387 = vunpack.c.h.s8.bf16 %v251
    %v388 = vunpack.c.h.s8.bf16 %v252
    %v389 = vunpack.c.h.s8.bf16 %v253
    %v390 = vunpack.c.h.s8.bf16 %v254
    %v391 = vunpack.c.h.s8.bf16 %v255
    %v392 = vunpack.c.h.s8.bf16 %v256
    %v393 = vunpack.c.h.s8.bf16 %v257
    %v394 = vunpack.c.h.s8.bf16 %v258
    %v395 = vunpack.c.h.s8.bf16 %v259
    %v396 = vunpack.c.h.s8.bf16 %v260
    %v397 = vunpack.c.h.s8.bf16 %v261
    %v398 = vunpack.c.h.s8.bf16 %v262
    %399 = vmatprep.subr.bf16.mxu0 %v383
    %400 = vmatpush1.bf16.msra.mxu0 %v382
    %401 = vmatprep.subr.bf16.mxu0 %v366
    %402 = vmatpush1.bf16.msra.mxu0 %v365
    %403 = vmatprep.subr.bf16.mxu0 %v349
    %404 = vmatpush1.bf16.msra.mxu0 %v348
    %405 = vmatprep.subr.bf16.mxu0 %v332
    %406 = vmatpush1.bf16.msra.mxu0 %v331
    %407 = vmatprep.subr.bf16.mxu0 %v315
    %408 = vmatpush1.bf16.msra.mxu0 %v314
    %409 = vmatprep.subr.bf16.mxu0 %v298
    %410 = vmatpush1.bf16.msra.mxu0 %v297
    %411 = vmatprep.subr.bf16.mxu0 %v281
    %412 = vmatpush1.bf16.msra.mxu0 %v280
    %413 = vmatprep.subr.bf16.mxu0 %v264
    %414 = vmatpush1.bf16.msra.mxu0 %v263
    %415 = vmatprep.subr.bf16.mxu0 0
    %416 = vmatpush2.bf16.msra.mxu0 0
    %417 = vmatprep.subr.bf16.mxu0 0
    %418 = vmatpush2.bf16.msra.mxu0 0
    %419 = vmatprep.subr.bf16.mxu0 0
    %420 = vmatpush2.bf16.msra.mxu0 0
    %421 = vmatprep.subr.bf16.mxu0 0
    %422 = vmatpush2.bf16.msra.mxu0 0
    %423 = vmatprep.subr.bf16.mxu0 0
    %424 = vmatpush2.bf16.msra.mxu0 0
    %425 = vmatprep.subr.bf16.mxu0 0
    %426 = vmatpush2.bf16.msra.mxu0 0
    %427 = vmatprep.subr.bf16.mxu0 0
    %428 = vmatpush2.bf16.msra.mxu0 0
    %429 = vmatprep.subr.bf16.mxu0 0
    %430 = vmatpush2.bf16.msra.mxu0 0
    %431 = vmatprep.mubr.bf16.mxu0 0
    %432 = vmatmul.mubr.bf16.gmra.mxu0 %v194
    %v433 = vpop.f32.mrf.mxu0
    %v434 = vadd.f32 0.0, %v433
    %v435 = vpop.f32.mrf.mxu0
    %v436 = vadd.f32 0.0, %v435
    %v437 = vpop.f32.mrf.mxu0
    %v438 = vpop.f32.mrf.mxu0
    %439 = vdwg.mxu0
    %440 = vmatprep.subr.bf16.mxu0 %v385
    %441 = vmatpush1.bf16.msra.mxu0 %v384
    %442 = vmatprep.subr.bf16.mxu0 %v368
    %443 = vmatpush1.bf16.msra.mxu0 %v367
    %444 = vmatprep.subr.bf16.mxu0 %v351
    %445 = vmatpush1.bf16.msra.mxu0 %v350
    %446 = vmatprep.subr.bf16.mxu0 %v334
    %447 = vmatpush1.bf16.msra.mxu0 %v333
    %448 = vmatprep.subr.bf16.mxu0 %v317
    %449 = vmatpush1.bf16.msra.mxu0 %v316
    %450 = vmatprep.subr.bf16.mxu0 %v300
    %451 = vmatpush1.bf16.msra.mxu0 %v299
    %452 = vmatprep.subr.bf16.mxu0 %v283
    %453 = vmatpush1.bf16.msra.mxu0 %v282
    %454 = vmatprep.subr.bf16.mxu0 %v266
    %455 = vmatpush1.bf16.msra.mxu0 %v265
    %456 = vmatprep.subr.bf16.mxu0 0
    %457 = vmatpush2.bf16.msra.mxu0 0
    %458 = vmatprep.subr.bf16.mxu0 0
    %459 = vmatpush2.bf16.msra.mxu0 0
    %460 = vmatprep.subr.bf16.mxu0 0
    %461 = vmatpush2.bf16.msra.mxu0 0
    %462 = vmatprep.subr.bf16.mxu0 0
    %463 = vmatpush2.bf16.msra.mxu0 0
    %464 = vmatprep.subr.bf16.mxu0 0
    %465 = vmatpush2.bf16.msra.mxu0 0
    %466 = vmatprep.subr.bf16.mxu0 0
    %467 = vmatpush2.bf16.msra.mxu0 0
    %468 = vmatprep.subr.bf16.mxu0 0
    %469 = vmatpush2.bf16.msra.mxu0 0
    %470 = vmatprep.subr.bf16.mxu0 0
    %471 = vmatpush2.bf16.msra.mxu0 0
    %472 = vmatprep.mubr.bf16.mxu0 0
    %473 = vmatmul.mubr.bf16.gmra.mxu0 %v194
    %v474 = vpop.f32.mrf.mxu0
    %v475 = vadd.f32 0.0, %v474
    %v476 = vpop.f32.mrf.mxu0
    %v477 = vadd.f32 0.0, %v476
    %v478 = vpop.f32.mrf.mxu0
    %v479 = vpop.f32.mrf.mxu0
    %480 = vdwg.mxu0
    %481 = vmatprep.subr.bf16.mxu0 %v387
    %482 = vmatpush1.bf16.msra.mxu0 %v386
    %483 = vmatprep.subr.bf16.mxu0 %v370
    %484 = vmatpush1.bf16.msra.mxu0 %v369
    %485 = vmatprep.subr.bf16.mxu0 %v353
    %486 = vmatpush1.bf16.msra.mxu0 %v352
    %487 = vmatprep.subr.bf16.mxu0 %v336
    %488 = vmatpush1.bf16.msra.mxu0 %v335
    %489 = vmatprep.subr.bf16.mxu0 %v319
    %490 = vmatpush1.bf16.msra.mxu0 %v318
    %491 = vmatprep.subr.bf16.mxu0 %v302
    %492 = vmatpush1.bf16.msra.mxu0 %v301
    %493 = vmatprep.subr.bf16.mxu0 %v285
    %494 = vmatpush1.bf16.msra.mxu0 %v284
    %495 = vmatprep.subr.bf16.mxu0 %v268
    %496 = vmatpush1.bf16.msra.mxu0 %v267
    %497 = vmatprep.subr.bf16.mxu0 0
    %498 = vmatpush2.bf16.msra.mxu0 0
    %499 = vmatprep.subr.bf16.mxu0 0
    %500 = vmatpush2.bf16.msra.mxu0 0
    %501 = vmatprep.subr.bf16.mxu0 0
    %502 = vmatpush2.bf16.msra.mxu0 0
    %503 = vmatprep.subr.bf16.mxu0 0
    %504 = vmatpush2.bf16.msra.mxu0 0
    %505 = vmatprep.subr.bf16.mxu0 0
    %506 = vmatpush2.bf16.msra.mxu0 0
    %507 = vmatprep.subr.bf16.mxu0 0
    %508 = vmatpush2.bf16.msra.mxu0 0
    %509 = vmatprep.subr.bf16.mxu0 0
    %510 = vmatpush2.bf16.msra.mxu0 0
    %511 = vmatprep.subr.bf16.mxu0 0
    %512 = vmatpush2.bf16.msra.mxu0 0
    %513 = vmatprep.mubr.bf16.mxu0 0
    %514 = vmatmul.mubr.bf16.gmra.mxu0 %v194
    %v515 = vpop.f32.mrf.mxu0
    %v516 = vadd.f32 0.0, %v515
    %v517 = vpop.f32.mrf.mxu0
    %v518 = vadd.f32 0.0, %v517
    %v519 = vpop.f32.mrf.mxu0
    %v520 = vpop.f32.mrf.mxu0
    %521 = vdwg.mxu0
    %522 = vmatprep.subr.bf16.mxu0 %v389
    %523 = vmatpush1.bf16.msra.mxu0 %v388
    %524 = vmatprep.subr.bf16.mxu0 %v372
    %525 = vmatpush1.bf16.msra.mxu0 %v371
    %526 = vmatprep.subr.bf16.mxu0 %v355
    %527 = vmatpush1.bf16.msra.mxu0 %v354
    %528 = vmatprep.subr.bf16.mxu0 %v338
    %529 = vmatpush1.bf16.msra.mxu0 %v337
    %530 = vmatprep.subr.bf16.mxu0 %v321
    %531 = vmatpush1.bf16.msra.mxu0 %v320
    %532 = vmatprep.subr.bf16.mxu0 %v304
    %533 = vmatpush1.bf16.msra.mxu0 %v303
    %534 = vmatprep.subr.bf16.mxu0 %v287
    %535 = vmatpush1.bf16.msra.mxu0 %v286
    %536 = vmatprep.subr.bf16.mxu0 %v270
    %537 = vmatpush1.bf16.msra.mxu0 %v269
    %538 = vmatprep.subr.bf16.mxu0 0
    %539 = vmatpush2.bf16.msra.mxu0 0
    %540 = vmatprep.subr.bf16.mxu0 0
    %541 = vmatpush2.bf16.msra.mxu0 0
    %542 = vmatprep.subr.bf16.mxu0 0
    %543 = vmatpush2.bf16.msra.mxu0 0
    %544 = vmatprep.subr.bf16.mxu0 0
    %545 = vmatpush2.bf16.msra.mxu0 0
    %546 = vmatprep.subr.bf16.mxu0 0
    %547 = vmatpush2.bf16.msra.mxu0 0
    %548 = vmatprep.subr.bf16.mxu0 0
    %549 = vmatpush2.bf16.msra.mxu0 0
    %550 = vmatprep.subr.bf16.mxu0 0
    %551 = vmatpush2.bf16.msra.mxu0 0
    %552 = vmatprep.subr.bf16.mxu0 0
    %553 = vmatpush2.bf16.msra.mxu0 0
    %554 = vmatprep.mubr.bf16.mxu0 0
    %555 = vmatmul.mubr.bf16.gmra.mxu0 %v194
    %v556 = vpop.f32.mrf.mxu0
    %v557 = vadd.f32 0.0, %v556
    %v558 = vpop.f32.mrf.mxu0
    %v559 = vadd.f32 0.0, %v558
    %v560 = vpop.f32.mrf.mxu0
    %v561 = vpop.f32.mrf.mxu0
    %562 = vdwg.mxu0
    %563 = vmatprep.subr.bf16.mxu0 %v391
    %564 = vmatpush1.bf16.msra.mxu0 %v390
    %565 = vmatprep.subr.bf16.mxu0 %v374
    %566 = vmatpush1.bf16.msra.mxu0 %v373
    %567 = vmatprep.subr.bf16.mxu0 %v357
    %568 = vmatpush1.bf16.msra.mxu0 %v356
    %569 = vmatprep.subr.bf16.mxu0 %v340
    %570 = vmatpush1.bf16.msra.mxu0 %v339
    %571 = vmatprep.subr.bf16.mxu0 %v323
    %572 = vmatpush1.bf16.msra.mxu0 %v322
    %573 = vmatprep.subr.bf16.mxu0 %v306
    %574 = vmatpush1.bf16.msra.mxu0 %v305
    %575 = vmatprep.subr.bf16.mxu0 %v289
    %576 = vmatpush1.bf16.msra.mxu0 %v288
    %577 = vmatprep.subr.bf16.mxu0 %v272
    %578 = vmatpush1.bf16.msra.mxu0 %v271
    %579 = vmatprep.subr.bf16.mxu0 0
    %580 = vmatpush2.bf16.msra.mxu0 0
    %581 = vmatprep.subr.bf16.mxu0 0
    %582 = vmatpush2.bf16.msra.mxu0 0
    %583 = vmatprep.subr.bf16.mxu0 0
    %584 = vmatpush2.bf16.msra.mxu0 0
    %585 = vmatprep.subr.bf16.mxu0 0
    %586 = vmatpush2.bf16.msra.mxu0 0
    %587 = vmatprep.subr.bf16.mxu0 0
    %588 = vmatpush2.bf16.msra.mxu0 0
    %589 = vmatprep.subr.bf16.mxu0 0
    %590 = vmatpush2.bf16.msra.mxu0 0
    %591 = vmatprep.subr.bf16.mxu0 0
    %592 = vmatpush2.bf16.msra.mxu0 0
    %593 = vmatprep.subr.bf16.mxu0 0
    %594 = vmatpush2.bf16.msra.mxu0 0
    %595 = vmatprep.mubr.bf16.mxu0 0
    %596 = vmatmul.mubr.bf16.gmra.mxu0 %v194
    %v597 = vpop.f32.mrf.mxu0
    %v598 = vadd.f32 0.0, %v597
    %v599 = vpop.f32.mrf.mxu0
    %v600 = vadd.f32 0.0, %v599
    %v601 = vpop.f32.mrf.mxu0
    %v602 = vpop.f32.mrf.mxu0
    %603 = vdwg.mxu0
    %604 = vmatprep.subr.bf16.mxu0 %v393
    %605 = vmatpush1.bf16.msra.mxu0 %v392
    %606 = vmatprep.subr.bf16.mxu0 %v376
    %607 = vmatpush1.bf16.msra.mxu0 %v375
    %608 = vmatprep.subr.bf16.mxu0 %v359
    %609 = vmatpush1.bf16.msra.mxu0 %v358
    %610 = vmatprep.subr.bf16.mxu0 %v342
    %611 = vmatpush1.bf16.msra.mxu0 %v341
    %612 = vmatprep.subr.bf16.mxu0 %v325
    %613 = vmatpush1.bf16.msra.mxu0 %v324
    %614 = vmatprep.subr.bf16.mxu0 %v308
    %615 = vmatpush1.bf16.msra.mxu0 %v307
    %616 = vmatprep.subr.bf16.mxu0 %v291
    %617 = vmatpush1.bf16.msra.mxu0 %v290
    %618 = vmatprep.subr.bf16.mxu0 %v274
    %619 = vmatpush1.bf16.msra.mxu0 %v273
    %620 = vmatprep.subr.bf16.mxu0 0
    %621 = vmatpush2.bf16.msra.mxu0 0
    %622 = vmatprep.subr.bf16.mxu0 0
    %623 = vmatpush2.bf16.msra.mxu0 0
    %624 = vmatprep.subr.bf16.mxu0 0
    %625 = vmatpush2.bf16.msra.mxu0 0
    %626 = vmatprep.subr.bf16.mxu0 0
    %627 = vmatpush2.bf16.msra.mxu0 0
    %628 = vmatprep.subr.bf16.mxu0 0
    %629 = vmatpush2.bf16.msra.mxu0 0
    %630 = vmatprep.subr.bf16.mxu0 0
    %631 = vmatpush2.bf16.msra.mxu0 0
    %632 = vmatprep.subr.bf16.mxu0 0
    %633 = vmatpush2.bf16.msra.mxu0 0
    %634 = vmatprep.subr.bf16.mxu0 0
    %635 = vmatpush2.bf16.msra.mxu0 0
    %636 = vmatprep.mubr.bf16.mxu0 0
    %637 = vmatmul.mubr.bf16.gmra.mxu0 %v194
    %v638 = vpop.f32.mrf.mxu0
    %v639 = vadd.f32 0.0, %v638
    %v640 = vpop.f32.mrf.mxu0
    %v641 = vadd.f32 0.0, %v640
    %v642 = vpop.f32.mrf.mxu0
    %v643 = vpop.f32.mrf.mxu0
    %644 = vdwg.mxu0
    %645 = vmatprep.subr.bf16.mxu0 %v395
    %646 = vmatpush1.bf16.msra.mxu0 %v394
    %647 = vmatprep.subr.bf16.mxu0 %v378
    %648 = vmatpush1.bf16.msra.mxu0 %v377
    %649 = vmatprep.subr.bf16.mxu0 %v361
    %650 = vmatpush1.bf16.msra.mxu0 %v360
    %651 = vmatprep.subr.bf16.mxu0 %v344
    %652 = vmatpush1.bf16.msra.mxu0 %v343
    %653 = vmatprep.subr.bf16.mxu0 %v327
    %654 = vmatpush1.bf16.msra.mxu0 %v326
    %655 = vmatprep.subr.bf16.mxu0 %v310
    %656 = vmatpush1.bf16.msra.mxu0 %v309
    %657 = vmatprep.subr.bf16.mxu0 %v293
    %658 = vmatpush1.bf16.msra.mxu0 %v292
    %659 = vmatprep.subr.bf16.mxu0 %v276
    %660 = vmatpush1.bf16.msra.mxu0 %v275
    %661 = vmatprep.subr.bf16.mxu0 0
    %662 = vmatpush2.bf16.msra.mxu0 0
    %663 = vmatprep.subr.bf16.mxu0 0
    %664 = vmatpush2.bf16.msra.mxu0 0
    %665 = vmatprep.subr.bf16.mxu0 0
    %666 = vmatpush2.bf16.msra.mxu0 0
    %667 = vmatprep.subr.bf16.mxu0 0
    %668 = vmatpush2.bf16.msra.mxu0 0
    %669 = vmatprep.subr.bf16.mxu0 0
    %670 = vmatpush2.bf16.msra.mxu0 0
    %671 = vmatprep.subr.bf16.mxu0 0
    %672 = vmatpush2.bf16.msra.mxu0 0
    %673 = vmatprep.subr.bf16.mxu0 0
    %674 = vmatpush2.bf16.msra.mxu0 0
    %675 = vmatprep.subr.bf16.mxu0 0
    %676 = vmatpush2.bf16.msra.mxu0 0
    %677 = vmatprep.mubr.bf16.mxu0 0
    %678 = vmatmul.mubr.bf16.gmra.mxu0 %v194
    %v679 = vpop.f32.mrf.mxu0
    %v680 = vadd.f32 0.0, %v679
    %v681 = vpop.f32.mrf.mxu0
    %v682 = vadd.f32 0.0, %v681
    %v683 = vpop.f32.mrf.mxu0
    %v684 = vpop.f32.mrf.mxu0
    %685 = vdwg.mxu0
    %686 = vmatprep.subr.bf16.mxu0 %v397
    %687 = vmatpush1.bf16.msra.mxu0 %v396
    %688 = vmatprep.subr.bf16.mxu0 %v380
    %689 = vmatpush1.bf16.msra.mxu0 %v379
    %690 = vmatprep.subr.bf16.mxu0 %v363
    %691 = vmatpush1.bf16.msra.mxu0 %v362
    %692 = vmatprep.subr.bf16.mxu0 %v346
    %693 = vmatpush1.bf16.msra.mxu0 %v345
    %694 = vmatprep.subr.bf16.mxu0 %v329
    %695 = vmatpush1.bf16.msra.mxu0 %v328
    %696 = vmatprep.subr.bf16.mxu0 %v312
    %697 = vmatpush1.bf16.msra.mxu0 %v311
    %698 = vmatprep.subr.bf16.mxu0 %v295
    %699 = vmatpush1.bf16.msra.mxu0 %v294
    %700 = vmatprep.subr.bf16.mxu0 %v278
    %701 = vmatpush1.bf16.msra.mxu0 %v277
    %702 = vmatprep.subr.bf16.mxu0 0
    %703 = vmatpush2.bf16.msra.mxu0 0
    %704 = vmatprep.subr.bf16.mxu0 0
    %705 = vmatpush2.bf16.msra.mxu0 0
    %706 = vmatprep.subr.bf16.mxu0 0
    %707 = vmatpush2.bf16.msra.mxu0 0
    %708 = vmatprep.subr.bf16.mxu0 0
    %709 = vmatpush2.bf16.msra.mxu0 0
    %710 = vmatprep.subr.bf16.mxu0 0
    %711 = vmatpush2.bf16.msra.mxu0 0
    %712 = vmatprep.subr.bf16.mxu0 0
    %713 = vmatpush2.bf16.msra.mxu0 0
    %714 = vmatprep.subr.bf16.mxu0 0
    %715 = vmatpush2.bf16.msra.mxu0 0
    %716 = vmatprep.subr.bf16.mxu0 0
    %717 = vmatpush2.bf16.msra.mxu0 0
    %718 = vmatprep.mubr.bf16.mxu0 0
    %719 = vmatmul.mubr.bf16.gmra.mxu0 %v194
    %v720 = vpop.f32.mrf.mxu0
    %v721 = vadd.f32 0.0, %v720
    %v722 = vpop.f32.mrf.mxu0
    %v723 = vadd.f32 0.0, %v722
    %v724 = vpop.f32.mrf.mxu0
    %v725 = vpop.f32.mrf.mxu0
    %726 = vdwg.mxu0
    %727 = vmatprep.subr.bf16.mxu0 0
    %728 = vmatpush1.bf16.msra.mxu0 %v398
    %729 = vmatprep.subr.bf16.mxu0 0
    %730 = vmatpush1.bf16.msra.mxu0 %v381
    %731 = vmatprep.subr.bf16.mxu0 0
    %732 = vmatpush1.bf16.msra.mxu0 %v364
    %733 = vmatprep.subr.bf16.mxu0 0
    %734 = vmatpush1.bf16.msra.mxu0 %v347
    %735 = vmatprep.subr.bf16.mxu0 0
    %736 = vmatpush1.bf16.msra.mxu0 %v330
    %737 = vmatprep.subr.bf16.mxu0 0
    %738 = vmatpush1.bf16.msra.mxu0 %v313
    %739 = vmatprep.subr.bf16.mxu0 0
    %740 = vmatpush1.bf16.msra.mxu0 %v296
    %741 = vmatprep.subr.bf16.mxu0 0
    %742 = vmatpush1.bf16.msra.mxu0 %v279
    %743 = vmatprep.subr.bf16.mxu0 0
    %744 = vmatpush2.bf16.msra.mxu0 0
    %745 = vmatprep.subr.bf16.mxu0 0
    %746 = vmatpush2.bf16.msra.mxu0 0
    %747 = vmatprep.subr.bf16.mxu0 0
    %748 = vmatpush2.bf16.msra.mxu0 0
    %749 = vmatprep.subr.bf16.mxu0 0
    %750 = vmatpush2.bf16.msra.mxu0 0
    %751 = vmatprep.subr.bf16.mxu0 0
    %752 = vmatpush2.bf16.msra.mxu0 0
    %753 = vmatprep.subr.bf16.mxu0 0
    %754 = vmatpush2.bf16.msra.mxu0 0
    %755 = vmatprep.subr.bf16.mxu0 0
    %756 = vmatpush2.bf16.msra.mxu0 0
    %757 = vmatprep.subr.bf16.mxu0 0
    %758 = vmatpush2.bf16.msra.mxu0 0
    %759 = vmatprep.mubr.bf16.mxu0 0
    %760 = vmatmul.mubr.bf16.gmra.mxu0 %v194
    %v761 = vpop.f32.mrf.mxu0
    %v762 = vadd.f32 0.0, %v761
    %v763 = vpop.f32.mrf.mxu0
    %v764 = vpop.f32.mrf.mxu0
    %v765 = vpop.f32.mrf.mxu0
    %766 = vdwg.mxu0
    %v767 = vld [vmem:[#allocation4] sm:$0xff]
    %v768 = vld [vmem:[#allocation4 + $0x8] sm:$0xff]
    %v769 = vld [vmem:[#allocation4 + $0x10] sm:$0x1]
    %v773 = vlaneseq
    %v774 = vshrl.u32 %v773, 7
    %v775 = vsub.s32 0, %v774
    %v776 = vrot.slane %v767, %v775
    %v777 = vlaneseq
    %v778 = vshrl.u32 %v777, 7
    %v779 = vsub.s32 1, %v778
    %v780 = vrot.slane %v767, %v779
    %v781 = vlaneseq
    %v782 = vshrl.u32 %v781, 7
    %v783 = vsub.s32 2, %v782
    %v784 = vrot.slane %v767, %v783
    %v785 = vlaneseq
    %v786 = vshrl.u32 %v785, 7
    %v787 = vsub.s32 3, %v786
    %v788 = vrot.slane %v767, %v787
    %v789 = vlaneseq
    %v790 = vshrl.u32 %v789, 7
    %v791 = vsub.s32 4, %v790
    %v792 = vrot.slane %v767, %v791
    %v793 = vlaneseq
    %v794 = vshrl.u32 %v793, 7
    %v795 = vsub.s32 5, %v794
    %v796 = vrot.slane %v767, %v795
    %v797 = vlaneseq
    %v798 = vshrl.u32 %v797, 7
    %v799 = vsub.s32 6, %v798
    %v800 = vrot.slane %v767, %v799
    %v801 = vlaneseq
    %v802 = vshrl.u32 %v801, 7
    %v803 = vsub.s32 7, %v802
    %v804 = vrot.slane %v767, %v803
    %v805 = vlaneseq
    %v806 = vshrl.u32 %v805, 7
    %v807 = vsub.s32 0, %v806
    %v808 = vrot.slane %v768, %v807
    %v809 = vlaneseq
    %v810 = vshrl.u32 %v809, 7
    %v811 = vsub.s32 1, %v810
    %v812 = vrot.slane %v768, %v811
    %v813 = vlaneseq
    %v814 = vshrl.u32 %v813, 7
    %v815 = vsub.s32 2, %v814
    %v816 = vrot.slane %v768, %v815
    %v817 = vlaneseq
    %v818 = vshrl.u32 %v817, 7
    %v819 = vsub.s32 3, %v818
    %v820 = vrot.slane %v768, %v819
    %v821 = vlaneseq
    %v822 = vshrl.u32 %v821, 7
    %v823 = vsub.s32 4, %v822
    %v824 = vrot.slane %v768, %v823
    %v825 = vlaneseq
    %v826 = vshrl.u32 %v825, 7
    %v827 = vsub.s32 5, %v826
    %v828 = vrot.slane %v768, %v827
    %v829 = vlaneseq
    %v830 = vshrl.u32 %v829, 7
    %v831 = vsub.s32 6, %v830
    %v832 = vrot.slane %v768, %v831
    %v833 = vlaneseq
    %v834 = vshrl.u32 %v833, 7
    %v835 = vsub.s32 7, %v834
    %v836 = vrot.slane %v768, %v835
    %v837 = vlaneseq
    %v838 = vshrl.u32 %v837, 7
    %v839 = vsub.s32 0, %v838
    %v840 = vrot.slane %v769, %v839
    %v858 = vmul.f32 %v434, %v776
    %v859 = vmul.f32 %v436, %v780
    %v860 = vmul.f32 %v475, %v784
    %v861 = vmul.f32 %v477, %v788
    %v862 = vmul.f32 %v516, %v792
    %v863 = vmul.f32 %v518, %v796
    %v864 = vmul.f32 %v557, %v800
    %v865 = vmul.f32 %v559, %v804
    %v866 = vmul.f32 %v598, %v808
    %v867 = vmul.f32 %v600, %v812
    %v868 = vmul.f32 %v639, %v816
    %v869 = vmul.f32 %v641, %v820
    %v870 = vmul.f32 %v680, %v824
    %v871 = vmul.f32 %v682, %v828
    %v872 = vmul.f32 %v721, %v832
    %v873 = vmul.f32 %v723, %v836
    %v874 = vmul.f32 %v762, %v840
    %v875 = vld [vmem:[#allocation6] sm:$0xff]
    %v876 = vld [vmem:[#allocation6 + $0x8] sm:$0xff]
    %v877 = vld [vmem:[#allocation6 + $0x10] sm:$0x1]
    %v881 = vlaneseq
    %v882 = vshrl.u32 %v881, 7
    %v883 = vsub.s32 0, %v882
    %v884 = vrot.slane %v875, %v883
    %v885 = vlaneseq
    %v886 = vshrl.u32 %v885, 7
    %v887 = vsub.s32 1, %v886
    %v888 = vrot.slane %v875, %v887
    %v889 = vlaneseq
    %v890 = vshrl.u32 %v889, 7
    %v891 = vsub.s32 2, %v890
    %v892 = vrot.slane %v875, %v891
    %v893 = vlaneseq
    %v894 = vshrl.u32 %v893, 7
    %v895 = vsub.s32 3, %v894
    %v896 = vrot.slane %v875, %v895
    %v897 = vlaneseq
    %v898 = vshrl.u32 %v897, 7
    %v899 = vsub.s32 4, %v898
    %v900 = vrot.slane %v875, %v899
    %v901 = vlaneseq
    %v902 = vshrl.u32 %v901, 7
    %v903 = vsub.s32 5, %v902
    %v904 = vrot.slane %v875, %v903
    %v905 = vlaneseq
    %v906 = vshrl.u32 %v905, 7
    %v907 = vsub.s32 6, %v906
    %v908 = vrot.slane %v875, %v907
    %v909 = vlaneseq
    %v910 = vshrl.u32 %v909, 7
    %v911 = vsub.s32 7, %v910
    %v912 = vrot.slane %v875, %v911
    %v913 = vlaneseq
    %v914 = vshrl.u32 %v913, 7
    %v915 = vsub.s32 0, %v914
    %v916 = vrot.slane %v876, %v915
    %v917 = vlaneseq
    %v918 = vshrl.u32 %v917, 7
    %v919 = vsub.s32 1, %v918
    %v920 = vrot.slane %v876, %v919
    %v921 = vlaneseq
    %v922 = vshrl.u32 %v921, 7
    %v923 = vsub.s32 2, %v922
    %v924 = vrot.slane %v876, %v923
    %v925 = vlaneseq
    %v926 = vshrl.u32 %v925, 7
    %v927 = vsub.s32 3, %v926
    %v928 = vrot.slane %v876, %v927
    %v929 = vlaneseq
    %v930 = vshrl.u32 %v929, 7
    %v931 = vsub.s32 4, %v930
    %v932 = vrot.slane %v876, %v931
    %v933 = vlaneseq
    %v934 = vshrl.u32 %v933, 7
    %v935 = vsub.s32 5, %v934
    %v936 = vrot.slane %v876, %v935
    %v937 = vlaneseq
    %v938 = vshrl.u32 %v937, 7
    %v939 = vsub.s32 6, %v938
    %v940 = vrot.slane %v876, %v939
    %v941 = vlaneseq
    %v942 = vshrl.u32 %v941, 7
    %v943 = vsub.s32 7, %v942
    %v944 = vrot.slane %v876, %v943
    %v945 = vlaneseq
    %v946 = vshrl.u32 %v945, 7
    %v947 = vsub.s32 0, %v946
    %v948 = vrot.slane %v877, %v947
    %v966 = vadd.f32 %v858, %v884
    %v967 = vadd.f32 %v859, %v888
    %v968 = vadd.f32 %v860, %v892
    %v969 = vadd.f32 %v861, %v896
    %v970 = vadd.f32 %v862, %v900
    %v971 = vadd.f32 %v863, %v904
    %v972 = vadd.f32 %v864, %v908
    %v973 = vadd.f32 %v865, %v912
    %v974 = vadd.f32 %v866, %v916
    %v975 = vadd.f32 %v867, %v920
    %v976 = vadd.f32 %v868, %v924
    %v977 = vadd.f32 %v869, %v928
    %v978 = vadd.f32 %v870, %v932
    %v979 = vadd.f32 %v871, %v936
    %v980 = vadd.f32 %v872, %v940
    %v981 = vadd.f32 %v873, %v944
    %v982 = vadd.f32 %v874, %v948
    %v983 = vmax.f32 %v966, 0.0
    %v984 = vmax.f32 %v967, 0.0
    %v985 = vmax.f32 %v968, 0.0
    %v986 = vmax.f32 %v969, 0.0
    %v987 = vmax.f32 %v970, 0.0
    %v988 = vmax.f32 %v971, 0.0
    %v989 = vmax.f32 %v972, 0.0
    %v990 = vmax.f32 %v973, 0.0
    %v991 = vmax.f32 %v974, 0.0
    %v992 = vmax.f32 %v975, 0.0
    %v993 = vmax.f32 %v976, 0.0
    %v994 = vmax.f32 %v977, 0.0
    %v995 = vmax.f32 %v978, 0.0
    %v996 = vmax.f32 %v979, 0.0
    %v997 = vmax.f32 %v980, 0.0
    %v998 = vmax.f32 %v981, 0.0
    %v999 = vmax.f32 %v982, 0.0
    %v1000 = vpack.c.bf16 %v983, %v983
    %v1001 = vpack.c.bf16 %v984, %v984
    %v1002 = vpack.c.bf16 %v985, %v985
    %v1003 = vpack.c.bf16 %v986, %v986
    %v1004 = vpack.c.bf16 %v987, %v987
    %v1005 = vpack.c.bf16 %v988, %v988
    %v1006 = vpack.c.bf16 %v989, %v989
    %v1007 = vpack.c.bf16 %v990, %v990
    %v1008 = vpack.c.bf16 %v991, %v991
    %v1009 = vpack.c.bf16 %v992, %v992
    %v1010 = vpack.c.bf16 %v993, %v993
    %v1011 = vpack.c.bf16 %v994, %v994
    %v1012 = vpack.c.bf16 %v995, %v995
    %v1013 = vpack.c.bf16 %v996, %v996
    %v1014 = vpack.c.bf16 %v997, %v997
    %v1015 = vpack.c.bf16 %v998, %v998
    %v1016 = vpack.c.bf16 %v999, %v999
    %v1017 = vld [vmem:[#allocation7] sm:$0xff]
    %v1018 = vld [vmem:[#allocation7 + $0x8] sm:$0xff]
    %v1019 = vld [vmem:[#allocation7 + $0x10] sm:$0xff]
    %v1020 = vld [vmem:[#allocation7 + $0x18] sm:$0xff]
    %v1021 = vld [vmem:[#allocation7 + $0x20] sm:$0xff]
    %v1022 = vld [vmem:[#allocation7 + $0x28] sm:$0xff]
    %v1023 = vld [vmem:[#allocation7 + $0x30] sm:$0xff]
    %v1024 = vld [vmem:[#allocation7 + $0x38] sm:$0xff]
    %v1025 = vld [vmem:[#allocation7 + $0x40] sm:$0xff]
    %v1026 = vld [vmem:[#allocation7 + $0x48] sm:$0xff]
    %v1027 = vld [vmem:[#allocation7 + $0x50] sm:$0xff]
    %v1028 = vld [vmem:[#allocation7 + $0x58] sm:$0xff]
    %v1029 = vld [vmem:[#allocation7 + $0x60] sm:$0xff]
    %v1030 = vld [vmem:[#allocation7 + $0x68] sm:$0xff]
    %v1031 = vld [vmem:[#allocation7 + $0x70] sm:$0xff]
    %v1032 = vld [vmem:[#allocation7 + $0x78] sm:$0xff]
    %v1033 = vld [vmem:[#allocation7 + $0x80] sm:$0xff]
    %v1034 = vld [vmem:[#allocation7 + $0x88] sm:$0xff]
    %v1035 = vld [vmem:[#allocation7 + $0x90] sm:$0xff]
    %v1036 = vld [vmem:[#allocation7 + $0x98] sm:$0xff]
    %v1037 = vld [vmem:[#allocation7 + $0xa0] sm:$0xff]
    %v1038 = vld [vmem:[#allocation7 + $0xa8] sm:$0xff]
    %v1039 = vld [vmem:[#allocation7 + $0xb0] sm:$0xff]
    %v1040 = vld [vmem:[#allocation7 + $0xb8] sm:$0xff]
    %v1041 = vld [vmem:[#allocation7 + $0xc0] sm:$0xff]
    %v1042 = vld [vmem:[#allocation7 + $0xc8] sm:$0xff]
    %v1043 = vld [vmem:[#allocation7 + $0xd0] sm:$0xff]
    %v1044 = vld [vmem:[#allocation7 + $0xd8] sm:$0xff]
    %v1045 = vld [vmem:[#allocation7 + $0xe0] sm:$0xff]
    %v1046 = vld [vmem:[#allocation7 + $0xe8] sm:$0xff]
    %v1047 = vld [vmem:[#allocation7 + $0xf0] sm:$0xff]
    %v1048 = vld [vmem:[#allocation7 + $0xf8] sm:$0xff]
    %v1049 = vld [vmem:[#allocation7 + $0x100] sm:$0xff]
    %v1050 = vld [vmem:[#allocation7 + $0x108] sm:$0xff]
    %v1051 = vld [vmem:[#allocation7 + $0x110] sm:$0xff]
    %v1052 = vld [vmem:[#allocation7 + $0x118] sm:$0xff]
    %v1053 = vld [vmem:[#allocation7 + $0x120] sm:$0xff]
    %v1054 = vld [vmem:[#allocation7 + $0x128] sm:$0xff]
    %v1055 = vld [vmem:[#allocation7 + $0x130] sm:$0xff]
    %v1056 = vld [vmem:[#allocation7 + $0x138] sm:$0xff]
    %v1057 = vld [vmem:[#allocation7 + $0x140] sm:$0xff]
    %v1058 = vld [vmem:[#allocation7 + $0x148] sm:$0xff]
    %v1059 = vld [vmem:[#allocation7 + $0x150] sm:$0xff]
    %v1060 = vld [vmem:[#allocation7 + $0x158] sm:$0xff]
    %v1061 = vld [vmem:[#allocation7 + $0x160] sm:$0xff]
    %v1062 = vld [vmem:[#allocation7 + $0x168] sm:$0xff]
    %v1063 = vld [vmem:[#allocation7 + $0x170] sm:$0xff]
    %v1064 = vld [vmem:[#allocation7 + $0x178] sm:$0xff]
    %v1065 = vld [vmem:[#allocation7 + $0x180] sm:$0xff]
    %v1066 = vld [vmem:[#allocation7 + $0x188] sm:$0xff]
    %v1067 = vld [vmem:[#allocation7 + $0x190] sm:$0xff]
    %v1068 = vld [vmem:[#allocation7 + $0x198] sm:$0xff]
    %v1069 = vld [vmem:[#allocation7 + $0x1a0] sm:$0xff]
    %v1070 = vld [vmem:[#allocation7 + $0x1a8] sm:$0xff]
    %v1071 = vld [vmem:[#allocation7 + $0x1b0] sm:$0xff]
    %v1072 = vld [vmem:[#allocation7 + $0x1b8] sm:$0xff]
    %v1073 = vld [vmem:[#allocation7 + $0x1c0] sm:$0xff]
    %v1074 = vld [vmem:[#allocation7 + $0x1c8] sm:$0xff]
    %v1075 = vld [vmem:[#allocation7 + $0x1d0] sm:$0xff]
    %v1076 = vld [vmem:[#allocation7 + $0x1d8] sm:$0xff]
    %v1077 = vld [vmem:[#allocation7 + $0x1e0] sm:$0xff]
    %v1078 = vld [vmem:[#allocation7 + $0x1e8] sm:$0xff]
    %v1079 = vld [vmem:[#allocation7 + $0x1f0] sm:$0xff]
    %v1080 = vld [vmem:[#allocation7 + $0x1f8] sm:$0xff]
    %v1081 = vld [vmem:[#allocation7 + $0x200] sm:$0xff]
    %v1082 = vld [vmem:[#allocation7 + $0x208] sm:$0xff]
    %v1083 = vld [vmem:[#allocation7 + $0x210] sm:$0xff]
    %v1084 = vld [vmem:[#allocation7 + $0x218] sm:$0xff]
    %v1085 = vld [vmem:[#allocation7 + $0x220] sm:$0xff]
    %v1086 = vld [vmem:[#allocation7 + $0x228] sm:$0xff]
    %v1087 = vld [vmem:[#allocation7 + $0x230] sm:$0xff]
    %v1088 = vld [vmem:[#allocation7 + $0x238] sm:$0xff]
    %v1089 = vld [vmem:[#allocation7 + $0x240] sm:$0xff]
    %v1090 = vld [vmem:[#allocation7 + $0x248] sm:$0xff]
    %v1091 = vld [vmem:[#allocation7 + $0x250] sm:$0xff]
    %v1092 = vld [vmem:[#allocation7 + $0x258] sm:$0xff]
    %v1093 = vld [vmem:[#allocation7 + $0x260] sm:$0xff]
    %v1094 = vld [vmem:[#allocation7 + $0x268] sm:$0xff]
    %v1095 = vld [vmem:[#allocation7 + $0x270] sm:$0xff]
    %v1096 = vld [vmem:[#allocation7 + $0x278] sm:$0xff]
    %v1097 = vld [vmem:[#allocation7 + $0x280] sm:$0xff]
    %v1098 = vld [vmem:[#allocation7 + $0x288] sm:$0xff]
    %v1099 = vld [vmem:[#allocation7 + $0x290] sm:$0xff]
    %v1100 = vld [vmem:[#allocation7 + $0x298] sm:$0xff]
    %v1101 = vld [vmem:[#allocation7 + $0x2a0] sm:$0xff]
    %v1102 = vld [vmem:[#allocation7 + $0x2a8] sm:$0xff]
    %v1103 = vld [vmem:[#allocation7 + $0x2b0] sm:$0xff]
    %v1104 = vld [vmem:[#allocation7 + $0x2b8] sm:$0xff]
    %v1105 = vld [vmem:[#allocation7 + $0x2c0] sm:$0xff]
    %v1106 = vld [vmem:[#allocation7 + $0x2c8] sm:$0xff]
    %v1107 = vld [vmem:[#allocation7 + $0x2d0] sm:$0xff]
    %v1108 = vld [vmem:[#allocation7 + $0x2d8] sm:$0xff]
    %v1109 = vld [vmem:[#allocation7 + $0x2e0] sm:$0xff]
    %v1110 = vld [vmem:[#allocation7 + $0x2e8] sm:$0xff]
    %v1111 = vld [vmem:[#allocation7 + $0x2f0] sm:$0xff]
    %v1112 = vld [vmem:[#allocation7 + $0x2f8] sm:$0xff]
    %v1113 = vld [vmem:[#allocation7 + $0x300] sm:$0xff]
    %v1114 = vld [vmem:[#allocation7 + $0x308] sm:$0xff]
    %v1115 = vld [vmem:[#allocation7 + $0x310] sm:$0xff]
    %v1116 = vld [vmem:[#allocation7 + $0x318] sm:$0xff]
    %v1117 = vld [vmem:[#allocation7 + $0x320] sm:$0xff]
    %v1118 = vld [vmem:[#allocation7 + $0x328] sm:$0xff]
    %v1119 = vld [vmem:[#allocation7 + $0x330] sm:$0xff]
    %v1120 = vld [vmem:[#allocation7 + $0x338] sm:$0xff]
    %v1121 = vld [vmem:[#allocation7 + $0x340] sm:$0xff]
    %v1122 = vld [vmem:[#allocation7 + $0x348] sm:$0xff]
    %v1123 = vld [vmem:[#allocation7 + $0x350] sm:$0xff]
    %v1124 = vld [vmem:[#allocation7 + $0x358] sm:$0xff]
    %v1125 = vld [vmem:[#allocation7 + $0x360] sm:$0xff]
    %v1126 = vld [vmem:[#allocation7 + $0x368] sm:$0xff]
    %v1127 = vld [vmem:[#allocation7 + $0x370] sm:$0xff]
    %v1128 = vld [vmem:[#allocation7 + $0x378] sm:$0xff]
    %v1129 = vld [vmem:[#allocation7 + $0x380] sm:$0xff]
    %v1130 = vld [vmem:[#allocation7 + $0x388] sm:$0xff]
    %v1131 = vld [vmem:[#allocation7 + $0x390] sm:$0xff]
    %v1132 = vld [vmem:[#allocation7 + $0x398] sm:$0xff]
    %v1133 = vld [vmem:[#allocation7 + $0x3a0] sm:$0xff]
    %v1134 = vld [vmem:[#allocation7 + $0x3a8] sm:$0xff]
    %v1135 = vld [vmem:[#allocation7 + $0x3b0] sm:$0xff]
    %v1136 = vld [vmem:[#allocation7 + $0x3b8] sm:$0xff]
    %v1137 = vld [vmem:[#allocation7 + $0x3c0] sm:$0xff]
    %v1138 = vld [vmem:[#allocation7 + $0x3c8] sm:$0xff]
    %v1139 = vld [vmem:[#allocation7 + $0x3d0] sm:$0xff]
    %v1140 = vld [vmem:[#allocation7 + $0x3d8] sm:$0xff]
    %v1141 = vld [vmem:[#allocation7 + $0x3e0] sm:$0xff]
    %v1142 = vld [vmem:[#allocation7 + $0x3e8] sm:$0xff]
    %v1143 = vld [vmem:[#allocation7 + $0x3f0] sm:$0xff]
    %v1144 = vld [vmem:[#allocation7 + $0x3f8] sm:$0xff]
    %v1145 = vld [vmem:[#allocation7 + $0x400] sm:$0xff]
    %v1146 = vld [vmem:[#allocation7 + $0x408] sm:$0xff]
    %v1147 = vld [vmem:[#allocation7 + $0x410] sm:$0xff]
    %v1148 = vld [vmem:[#allocation7 + $0x418] sm:$0xff]
    %v1149 = vld [vmem:[#allocation7 + $0x420] sm:$0xff]
    %v1150 = vld [vmem:[#allocation7 + $0x428] sm:$0xff]
    %v1151 = vld [vmem:[#allocation7 + $0x430] sm:$0xff]
    %v1152 = vld [vmem:[#allocation7 + $0x438] sm:$0xff]
    %v1153 = vld [vmem:[#allocation7 + $0x440] sm:$0xff]
    %v1154 = vld [vmem:[#allocation7 + $0x448] sm:$0xff]
    %v1155 = vld [vmem:[#allocation7 + $0x450] sm:$0xff]
    %v1156 = vld [vmem:[#allocation7 + $0x458] sm:$0xff]
    %v1157 = vld [vmem:[#allocation7 + $0x460] sm:$0xff]
    %v1158 = vld [vmem:[#allocation7 + $0x468] sm:$0xff]
    %v1159 = vld [vmem:[#allocation7 + $0x470] sm:$0xff]
    %v1160 = vld [vmem:[#allocation7 + $0x478] sm:$0xff]
    %v1161 = vld [vmem:[#allocation7 + $0x480] sm:$0xff]
    %v1162 = vld [vmem:[#allocation7 + $0x488] sm:$0xff]
    %v1163 = vld [vmem:[#allocation7 + $0x490] sm:$0xff]
    %v1164 = vld [vmem:[#allocation7 + $0x498] sm:$0xff]
    %v1165 = vld [vmem:[#allocation7 + $0x4a0] sm:$0xff]
    %v1166 = vld [vmem:[#allocation7 + $0x4a8] sm:$0xff]
    %v1167 = vld [vmem:[#allocation7 + $0x4b0] sm:$0xff]
    %v1168 = vld [vmem:[#allocation7 + $0x4b8] sm:$0xff]
    %v1169 = vld [vmem:[#allocation7 + $0x4c0] sm:$0xff]
    %v1170 = vld [vmem:[#allocation7 + $0x4c8] sm:$0xff]
    %v1171 = vld [vmem:[#allocation7 + $0x4d0] sm:$0xff]
    %v1172 = vld [vmem:[#allocation7 + $0x4d8] sm:$0xff]
    %v1173 = vld [vmem:[#allocation7 + $0x4e0] sm:$0xff]
    %v1174 = vld [vmem:[#allocation7 + $0x4e8] sm:$0xff]
    %v1175 = vld [vmem:[#allocation7 + $0x4f0] sm:$0xff]
    %v1176 = vld [vmem:[#allocation7 + $0x4f8] sm:$0xff]
    %v1177 = vld [vmem:[#allocation7 + $0x500] sm:$0xff]
    %v1178 = vld [vmem:[#allocation7 + $0x508] sm:$0xff]
    %v1179 = vld [vmem:[#allocation7 + $0x510] sm:$0xff]
    %v1180 = vld [vmem:[#allocation7 + $0x518] sm:$0xff]
    %v1181 = vld [vmem:[#allocation7 + $0x520] sm:$0xff]
    %v1182 = vld [vmem:[#allocation7 + $0x528] sm:$0xff]
    %v1183 = vld [vmem:[#allocation7 + $0x530] sm:$0xff]
    %v1184 = vld [vmem:[#allocation7 + $0x538] sm:$0xff]
    %v1185 = vld [vmem:[#allocation7 + $0x540] sm:$0xff]
    %v1186 = vld [vmem:[#allocation7 + $0x548] sm:$0xff]
    %v1187 = vld [vmem:[#allocation7 + $0x550] sm:$0xff]
    %v1188 = vld [vmem:[#allocation7 + $0x558] sm:$0xff]
    %v1189 = vld [vmem:[#allocation7 + $0x560] sm:$0xff]
    %v1190 = vld [vmem:[#allocation7 + $0x568] sm:$0xff]
    %v1191 = vld [vmem:[#allocation7 + $0x570] sm:$0xff]
    %v1192 = vld [vmem:[#allocation7 + $0x578] sm:$0xff]
    %v1193 = vld [vmem:[#allocation7 + $0x580] sm:$0xff]
    %v1194 = vld [vmem:[#allocation7 + $0x588] sm:$0xff]
    %v1195 = vld [vmem:[#allocation7 + $0x590] sm:$0xff]
    %v1196 = vld [vmem:[#allocation7 + $0x598] sm:$0xff]
    %v1197 = vld [vmem:[#allocation7 + $0x5a0] sm:$0xff]
    %v1198 = vld [vmem:[#allocation7 + $0x5a8] sm:$0xff]
    %v1199 = vld [vmem:[#allocation7 + $0x5b0] sm:$0xff]
    %v1200 = vld [vmem:[#allocation7 + $0x5b8] sm:$0xff]
    %v1201 = vld [vmem:[#allocation7 + $0x5c0] sm:$0xff]
    %v1202 = vld [vmem:[#allocation7 + $0x5c8] sm:$0xff]
    %v1203 = vld [vmem:[#allocation7 + $0x5d0] sm:$0xff]
    %v1204 = vld [vmem:[#allocation7 + $0x5d8] sm:$0xff]
    %v1205 = vld [vmem:[#allocation7 + $0x5e0] sm:$0xff]
    %v1206 = vld [vmem:[#allocation7 + $0x5e8] sm:$0xff]
    %v1207 = vld [vmem:[#allocation7 + $0x5f0] sm:$0xff]
    %v1208 = vld [vmem:[#allocation7 + $0x5f8] sm:$0xff]
    %v1209 = vld [vmem:[#allocation7 + $0x600] sm:$0xff]
    %v1210 = vld [vmem:[#allocation7 + $0x608] sm:$0xff]
    %v1211 = vld [vmem:[#allocation7 + $0x610] sm:$0xff]
    %v1212 = vld [vmem:[#allocation7 + $0x618] sm:$0xff]
    %v1213 = vld [vmem:[#allocation7 + $0x620] sm:$0xff]
    %v1214 = vld [vmem:[#allocation7 + $0x628] sm:$0xff]
    %v1215 = vld [vmem:[#allocation7 + $0x630] sm:$0xff]
    %v1216 = vld [vmem:[#allocation7 + $0x638] sm:$0xff]
    %v1217 = vld [vmem:[#allocation7 + $0x640] sm:$0xff]
    %v1218 = vld [vmem:[#allocation7 + $0x648] sm:$0xff]
    %v1219 = vld [vmem:[#allocation7 + $0x650] sm:$0xff]
    %v1220 = vld [vmem:[#allocation7 + $0x658] sm:$0xff]
    %v1221 = vld [vmem:[#allocation7 + $0x660] sm:$0xff]
    %v1222 = vld [vmem:[#allocation7 + $0x668] sm:$0xff]
    %v1223 = vld [vmem:[#allocation7 + $0x670] sm:$0xff]
    %v1224 = vld [vmem:[#allocation7 + $0x678] sm:$0xff]
    %v1225 = vld [vmem:[#allocation7 + $0x680] sm:$0xff]
    %v1226 = vld [vmem:[#allocation7 + $0x688] sm:$0xff]
    %v1227 = vld [vmem:[#allocation7 + $0x690] sm:$0xff]
    %v1228 = vld [vmem:[#allocation7 + $0x698] sm:$0xff]
    %v1229 = vld [vmem:[#allocation7 + $0x6a0] sm:$0xff]
    %v1230 = vld [vmem:[#allocation7 + $0x6a8] sm:$0xff]
    %v1231 = vld [vmem:[#allocation7 + $0x6b0] sm:$0xff]
    %v1232 = vld [vmem:[#allocation7 + $0x6b8] sm:$0xff]
    %v1233 = vld [vmem:[#allocation7 + $0x6c0] sm:$0xff]
    %v1234 = vld [vmem:[#allocation7 + $0x6c8] sm:$0xff]
    %v1235 = vld [vmem:[#allocation7 + $0x6d0] sm:$0xff]
    %v1236 = vld [vmem:[#allocation7 + $0x6d8] sm:$0xff]
    %v1237 = vld [vmem:[#allocation7 + $0x6e0] sm:$0xff]
    %v1238 = vld [vmem:[#allocation7 + $0x6e8] sm:$0xff]
    %v1239 = vld [vmem:[#allocation7 + $0x6f0] sm:$0xff]
    %v1240 = vld [vmem:[#allocation7 + $0x6f8] sm:$0xff]
    %v1241 = vld [vmem:[#allocation7 + $0x700] sm:$0xff]
    %v1242 = vld [vmem:[#allocation7 + $0x708] sm:$0xff]
    %v1243 = vld [vmem:[#allocation7 + $0x710] sm:$0xff]
    %v1244 = vld [vmem:[#allocation7 + $0x718] sm:$0xff]
    %v1245 = vld [vmem:[#allocation7 + $0x720] sm:$0xff]
    %v1246 = vld [vmem:[#allocation7 + $0x728] sm:$0xff]
    %v1247 = vld [vmem:[#allocation7 + $0x730] sm:$0xff]
    %v1248 = vld [vmem:[#allocation7 + $0x738] sm:$0xff]
    %v1249 = vld [vmem:[#allocation7 + $0x740] sm:$0xff]
    %v1250 = vld [vmem:[#allocation7 + $0x748] sm:$0xff]
    %v1251 = vld [vmem:[#allocation7 + $0x750] sm:$0xff]
    %v1252 = vld [vmem:[#allocation7 + $0x758] sm:$0xff]
    %v1253 = vld [vmem:[#allocation7 + $0x760] sm:$0xff]
    %v1254 = vld [vmem:[#allocation7 + $0x768] sm:$0xff]
    %v1255 = vld [vmem:[#allocation7 + $0x770] sm:$0xff]
    %v1256 = vld [vmem:[#allocation7 + $0x778] sm:$0xff]
    %v1257 = vld [vmem:[#allocation7 + $0x780] sm:$0xff]
    %v1258 = vld [vmem:[#allocation7 + $0x788] sm:$0xff]
    %v1259 = vld [vmem:[#allocation7 + $0x790] sm:$0xff]
    %v1260 = vld [vmem:[#allocation7 + $0x798] sm:$0xff]
    %v1261 = vld [vmem:[#allocation7 + $0x7a0] sm:$0xff]
    %v1262 = vld [vmem:[#allocation7 + $0x7a8] sm:$0xff]
    %v1263 = vld [vmem:[#allocation7 + $0x7b0] sm:$0xff]
    %v1264 = vld [vmem:[#allocation7 + $0x7b8] sm:$0xff]
    %v1265 = vld [vmem:[#allocation7 + $0x7c0] sm:$0xff]
    %v1266 = vld [vmem:[#allocation7 + $0x7c8] sm:$0xff]
    %v1267 = vld [vmem:[#allocation7 + $0x7d0] sm:$0xff]
    %v1268 = vld [vmem:[#allocation7 + $0x7d8] sm:$0xff]
    %v1269 = vld [vmem:[#allocation7 + $0x7e0] sm:$0xff]
    %v1270 = vld [vmem:[#allocation7 + $0x7e8] sm:$0xff]
    %v1271 = vld [vmem:[#allocation7 + $0x7f0] sm:$0xff]
    %v1272 = vld [vmem:[#allocation7 + $0x7f8] sm:$0xff]
    %v1273 = vld [vmem:[#allocation7 + $0x800] sm:$0xff]
    %v1274 = vld [vmem:[#allocation7 + $0x808] sm:$0xff]
    %v1275 = vld [vmem:[#allocation7 + $0x810] sm:$0xff]
    %v1276 = vld [vmem:[#allocation7 + $0x818] sm:$0xff]
    %v1277 = vld [vmem:[#allocation7 + $0x820] sm:$0xff]
    %v1278 = vld [vmem:[#allocation7 + $0x828] sm:$0xff]
    %v1279 = vld [vmem:[#allocation7 + $0x830] sm:$0xff]
    %v1280 = vld [vmem:[#allocation7 + $0x838] sm:$0xff]
    %v1281 = vld [vmem:[#allocation7 + $0x840] sm:$0xff]
    %v1282 = vld [vmem:[#allocation7 + $0x848] sm:$0xff]
    %v1283 = vld [vmem:[#allocation7 + $0x850] sm:$0xff]
    %v1284 = vld [vmem:[#allocation7 + $0x858] sm:$0xff]
    %v1285 = vld [vmem:[#allocation7 + $0x860] sm:$0xff]
    %v1286 = vld [vmem:[#allocation7 + $0x868] sm:$0xff]
    %v1287 = vld [vmem:[#allocation7 + $0x870] sm:$0xff]
    %v1288 = vld [vmem:[#allocation7 + $0x878] sm:$0xff]
    %v1289 = vld [vmem:[#allocation7 + $0x880] sm:$0xff]
    %v1290 = vld [vmem:[#allocation7 + $0x888] sm:$0xff]
    %v1291 = vld [vmem:[#allocation7 + $0x890] sm:$0xff]
    %v1292 = vld [vmem:[#allocation7 + $0x898] sm:$0xff]
    %v1293 = vld [vmem:[#allocation7 + $0x8a0] sm:$0xff]
    %v1294 = vld [vmem:[#allocation7 + $0x8a8] sm:$0xff]
    %v1295 = vld [vmem:[#allocation7 + $0x8b0] sm:$0xff]
    %v1296 = vld [vmem:[#allocation7 + $0x8b8] sm:$0xff]
    %v1297 = vld [vmem:[#allocation7 + $0x8c0] sm:$0xff]
    %v1298 = vld [vmem:[#allocation7 + $0x8c8] sm:$0xff]
    %v1299 = vld [vmem:[#allocation7 + $0x8d0] sm:$0xff]
    %v1300 = vld [vmem:[#allocation7 + $0x8d8] sm:$0xff]
    %v1301 = vld [vmem:[#allocation7 + $0x8e0] sm:$0xff]
    %v1302 = vld [vmem:[#allocation7 + $0x8e8] sm:$0xff]
    %v1303 = vld [vmem:[#allocation7 + $0x8f0] sm:$0xff]
    %v1304 = vld [vmem:[#allocation7 + $0x8f8] sm:$0xff]
    %v1305 = vld [vmem:[#allocation7 + $0x900] sm:$0xff]
    %v1306 = vld [vmem:[#allocation7 + $0x908] sm:$0xff]
    %v1307 = vld [vmem:[#allocation7 + $0x910] sm:$0xff]
    %v1308 = vld [vmem:[#allocation7 + $0x918] sm:$0xff]
    %v1309 = vld [vmem:[#allocation7 + $0x920] sm:$0xff]
    %v1310 = vld [vmem:[#allocation7 + $0x928] sm:$0xff]
    %v1311 = vld [vmem:[#allocation7 + $0x930] sm:$0xff]
    %v1312 = vld [vmem:[#allocation7 + $0x938] sm:$0xff]
    %v1313 = vld [vmem:[#allocation7 + $0x940] sm:$0xff]
    %v1314 = vld [vmem:[#allocation7 + $0x948] sm:$0xff]
    %v1315 = vld [vmem:[#allocation7 + $0x950] sm:$0xff]
    %v1316 = vld [vmem:[#allocation7 + $0x958] sm:$0xff]
    %v1317 = vld [vmem:[#allocation7 + $0x960] sm:$0xff]
    %v1318 = vld [vmem:[#allocation7 + $0x968] sm:$0xff]
    %v1319 = vld [vmem:[#allocation7 + $0x970] sm:$0xff]
    %v1320 = vld [vmem:[#allocation7 + $0x978] sm:$0xff]
    %v1321 = vld [vmem:[#allocation7 + $0x980] sm:$0xff]
    %v1322 = vld [vmem:[#allocation7 + $0x988] sm:$0xff]
    %v1323 = vld [vmem:[#allocation7 + $0x990] sm:$0xff]
    %v1324 = vld [vmem:[#allocation7 + $0x998] sm:$0xff]
    %v1325 = vld [vmem:[#allocation7 + $0x9a0] sm:$0xff]
    %v1326 = vld [vmem:[#allocation7 + $0x9a8] sm:$0xff]
    %v1327 = vld [vmem:[#allocation7 + $0x9b0] sm:$0xff]
    %v1328 = vld [vmem:[#allocation7 + $0x9b8] sm:$0xff]
    %v1329 = vld [vmem:[#allocation7 + $0x9c0] sm:$0xff]
    %v1330 = vld [vmem:[#allocation7 + $0x9c8] sm:$0xff]
    %v1331 = vld [vmem:[#allocation7 + $0x9d0] sm:$0xff]
    %v1332 = vld [vmem:[#allocation7 + $0x9d8] sm:$0xff]
    %v1333 = vld [vmem:[#allocation7 + $0x9e0] sm:$0xff]
    %v1334 = vld [vmem:[#allocation7 + $0x9e8] sm:$0xff]
    %v1335 = vld [vmem:[#allocation7 + $0x9f0] sm:$0xff]
    %v1336 = vld [vmem:[#allocation7 + $0x9f8] sm:$0xff]
    %v1337 = vld [vmem:[#allocation7 + $0xa00] sm:$0xff]
    %v1338 = vld [vmem:[#allocation7 + $0xa08] sm:$0xff]
    %v1339 = vld [vmem:[#allocation7 + $0xa10] sm:$0xff]
    %v1340 = vld [vmem:[#allocation7 + $0xa18] sm:$0xff]
    %v1341 = vld [vmem:[#allocation7 + $0xa20] sm:$0xff]
    %v1342 = vld [vmem:[#allocation7 + $0xa28] sm:$0xff]
    %v1343 = vld [vmem:[#allocation7 + $0xa30] sm:$0xff]
    %v1344 = vld [vmem:[#allocation7 + $0xa38] sm:$0xff]
    %v1345 = vld [vmem:[#allocation7 + $0xa40] sm:$0xff]
    %v1346 = vld [vmem:[#allocation7 + $0xa48] sm:$0xff]
    %v1347 = vld [vmem:[#allocation7 + $0xa50] sm:$0xff]
    %v1348 = vld [vmem:[#allocation7 + $0xa58] sm:$0xff]
    %v1349 = vld [vmem:[#allocation7 + $0xa60] sm:$0xff]
    %v1350 = vld [vmem:[#allocation7 + $0xa68] sm:$0xff]
    %v1351 = vld [vmem:[#allocation7 + $0xa70] sm:$0xff]
    %v1352 = vld [vmem:[#allocation7 + $0xa78] sm:$0xff]
    %v1353 = vld [vmem:[#allocation7 + $0xa80] sm:$0xff]
    %v1354 = vld [vmem:[#allocation7 + $0xa88] sm:$0xff]
    %v1355 = vld [vmem:[#allocation7 + $0xa90] sm:$0xff]
    %v1356 = vld [vmem:[#allocation7 + $0xa98] sm:$0xff]
    %v1357 = vld [vmem:[#allocation7 + $0xaa0] sm:$0xff]
    %v1358 = vld [vmem:[#allocation7 + $0xaa8] sm:$0xff]
    %v1359 = vld [vmem:[#allocation7 + $0xab0] sm:$0xff]
    %v1360 = vld [vmem:[#allocation7 + $0xab8] sm:$0xff]
    %v1361 = vld [vmem:[#allocation7 + $0xac0] sm:$0xff]
    %v1362 = vld [vmem:[#allocation7 + $0xac8] sm:$0xff]
    %v1363 = vld [vmem:[#allocation7 + $0xad0] sm:$0xff]
    %v1364 = vld [vmem:[#allocation7 + $0xad8] sm:$0xff]
    %v1365 = vld [vmem:[#allocation7 + $0xae0] sm:$0xff]
    %v1366 = vld [vmem:[#allocation7 + $0xae8] sm:$0xff]
    %v1367 = vld [vmem:[#allocation7 + $0xaf0] sm:$0xff]
    %v1368 = vld [vmem:[#allocation7 + $0xaf8] sm:$0xff]
    %v1369 = vld [vmem:[#allocation7 + $0xb00] sm:$0xff]
    %v1370 = vld [vmem:[#allocation7 + $0xb08] sm:$0xff]
    %v1371 = vld [vmem:[#allocation7 + $0xb10] sm:$0xff]
    %v1372 = vld [vmem:[#allocation7 + $0xb18] sm:$0xff]
    %v1373 = vld [vmem:[#allocation7 + $0xb20] sm:$0xff]
    %v1374 = vld [vmem:[#allocation7 + $0xb28] sm:$0xff]
    %v1375 = vld [vmem:[#allocation7 + $0xb30] sm:$0xff]
    %v1376 = vld [vmem:[#allocation7 + $0xb38] sm:$0xff]
    %v1377 = vld [vmem:[#allocation7 + $0xb40] sm:$0xff]
    %v1378 = vld [vmem:[#allocation7 + $0xb48] sm:$0xff]
    %v1379 = vld [vmem:[#allocation7 + $0xb50] sm:$0xff]
    %v1380 = vld [vmem:[#allocation7 + $0xb58] sm:$0xff]
    %v1381 = vld [vmem:[#allocation7 + $0xb60] sm:$0xff]
    %v1382 = vld [vmem:[#allocation7 + $0xb68] sm:$0xff]
    %v1383 = vld [vmem:[#allocation7 + $0xb70] sm:$0xff]
    %v1384 = vld [vmem:[#allocation7 + $0xb78] sm:$0xff]
    %v1385 = vld [vmem:[#allocation7 + $0xb80] sm:$0xff]
    %v1386 = vld [vmem:[#allocation7 + $0xb88] sm:$0xff]
    %v1387 = vld [vmem:[#allocation7 + $0xb90] sm:$0xff]
    %v1388 = vld [vmem:[#allocation7 + $0xb98] sm:$0xff]
    %v1389 = vld [vmem:[#allocation7 + $0xba0] sm:$0xff]
    %v1390 = vld [vmem:[#allocation7 + $0xba8] sm:$0xff]
    %v1391 = vld [vmem:[#allocation7 + $0xbb0] sm:$0xff]
    %v1392 = vld [vmem:[#allocation7 + $0xbb8] sm:$0xff]
    %v1393 = vld [vmem:[#allocation7 + $0xbc0] sm:$0xff]
    %v1394 = vld [vmem:[#allocation7 + $0xbc8] sm:$0xff]
    %v1395 = vld [vmem:[#allocation7 + $0xbd0] sm:$0xff]
    %v1396 = vld [vmem:[#allocation7 + $0xbd8] sm:$0xff]
    %v1397 = vld [vmem:[#allocation7 + $0xbe0] sm:$0xff]
    %v1398 = vld [vmem:[#allocation7 + $0xbe8] sm:$0xff]
    %v1399 = vld [vmem:[#allocation7 + $0xbf0] sm:$0xff]
    %v1400 = vld [vmem:[#allocation7 + $0xbf8] sm:$0xff]
    %v1401 = vld [vmem:[#allocation7 + $0xc00] sm:$0xff]
    %v1402 = vld [vmem:[#allocation7 + $0xc08] sm:$0xff]
    %v1403 = vld [vmem:[#allocation7 + $0xc10] sm:$0xff]
    %v1404 = vld [vmem:[#allocation7 + $0xc18] sm:$0xff]
    %v1405 = vld [vmem:[#allocation7 + $0xc20] sm:$0xff]
    %v1406 = vld [vmem:[#allocation7 + $0xc28] sm:$0xff]
    %v1407 = vld [vmem:[#allocation7 + $0xc30] sm:$0xff]
    %v1408 = vld [vmem:[#allocation7 + $0xc38] sm:$0xff]
    %v1409 = vld [vmem:[#allocation7 + $0xc40] sm:$0xff]
    %v1410 = vld [vmem:[#allocation7 + $0xc48] sm:$0xff]
    %v1411 = vld [vmem:[#allocation7 + $0xc50] sm:$0xff]
    %v1412 = vld [vmem:[#allocation7 + $0xc58] sm:$0xff]
    %v1413 = vld [vmem:[#allocation7 + $0xc60] sm:$0xff]
    %v1414 = vld [vmem:[#allocation7 + $0xc68] sm:$0xff]
    %v1415 = vld [vmem:[#allocation7 + $0xc70] sm:$0xff]
    %v1416 = vld [vmem:[#allocation7 + $0xc78] sm:$0xff]
    %v1417 = vld [vmem:[#allocation7 + $0xc80] sm:$0xff]
    %v1418 = vld [vmem:[#allocation7 + $0xc88] sm:$0xff]
    %v1419 = vld [vmem:[#allocation7 + $0xc90] sm:$0xff]
    %v1420 = vld [vmem:[#allocation7 + $0xc98] sm:$0xff]
    %v1421 = vld [vmem:[#allocation7 + $0xca0] sm:$0xff]
    %v1422 = vld [vmem:[#allocation7 + $0xca8] sm:$0xff]
    %v1423 = vld [vmem:[#allocation7 + $0xcb0] sm:$0xff]
    %v1424 = vld [vmem:[#allocation7 + $0xcb8] sm:$0xff]
    %v1425 = vld [vmem:[#allocation7 + $0xcc0] sm:$0xff]
    %v1426 = vld [vmem:[#allocation7 + $0xcc8] sm:$0xff]
    %v1427 = vld [vmem:[#allocation7 + $0xcd0] sm:$0xff]
    %v1428 = vld [vmem:[#allocation7 + $0xcd8] sm:$0xff]
    %v1429 = vld [vmem:[#allocation7 + $0xce0] sm:$0xff]
    %v1430 = vld [vmem:[#allocation7 + $0xce8] sm:$0xff]
    %v1431 = vld [vmem:[#allocation7 + $0xcf0] sm:$0xff]
    %v1432 = vld [vmem:[#allocation7 + $0xcf8] sm:$0xff]
    %v1433 = vld [vmem:[#allocation7 + $0xd00] sm:$0xff]
    %v1434 = vld [vmem:[#allocation7 + $0xd08] sm:$0xff]
    %v1435 = vld [vmem:[#allocation7 + $0xd10] sm:$0xff]
    %v1436 = vld [vmem:[#allocation7 + $0xd18] sm:$0xff]
    %v1437 = vld [vmem:[#allocation7 + $0xd20] sm:$0xff]
    %v1438 = vld [vmem:[#allocation7 + $0xd28] sm:$0xff]
    %v1439 = vld [vmem:[#allocation7 + $0xd30] sm:$0xff]
    %v1440 = vld [vmem:[#allocation7 + $0xd38] sm:$0xff]
    %v1441 = vld [vmem:[#allocation7 + $0xd40] sm:$0xff]
    %v1442 = vld [vmem:[#allocation7 + $0xd48] sm:$0xff]
    %v1443 = vld [vmem:[#allocation7 + $0xd50] sm:$0xff]
    %v1444 = vld [vmem:[#allocation7 + $0xd58] sm:$0xff]
    %v1445 = vld [vmem:[#allocation7 + $0xd60] sm:$0xff]
    %v1446 = vld [vmem:[#allocation7 + $0xd68] sm:$0xff]
    %v1447 = vld [vmem:[#allocation7 + $0xd70] sm:$0xff]
    %v1448 = vld [vmem:[#allocation7 + $0xd78] sm:$0xff]
    %v1449 = vld [vmem:[#allocation7 + $0xd80] sm:$0xff]
    %v1450 = vld [vmem:[#allocation7 + $0xd88] sm:$0xff]
    %v1451 = vld [vmem:[#allocation7 + $0xd90] sm:$0xff]
    %v1452 = vld [vmem:[#allocation7 + $0xd98] sm:$0xff]
    %v1453 = vld [vmem:[#allocation7 + $0xda0] sm:$0xff]
    %v1454 = vld [vmem:[#allocation7 + $0xda8] sm:$0xff]
    %v1455 = vld [vmem:[#allocation7 + $0xdb0] sm:$0xff]
    %v1456 = vld [vmem:[#allocation7 + $0xdb8] sm:$0xff]
    %v1457 = vld [vmem:[#allocation7 + $0xdc0] sm:$0xff]
    %v1458 = vld [vmem:[#allocation7 + $0xdc8] sm:$0xff]
    %v1459 = vld [vmem:[#allocation7 + $0xdd0] sm:$0xff]
    %v1460 = vld [vmem:[#allocation7 + $0xdd8] sm:$0xff]
    %v1461 = vld [vmem:[#allocation7 + $0xde0] sm:$0xff]
    %v1462 = vld [vmem:[#allocation7 + $0xde8] sm:$0xff]
    %v1463 = vld [vmem:[#allocation7 + $0xdf0] sm:$0xff]
    %v1464 = vld [vmem:[#allocation7 + $0xdf8] sm:$0xff]
    %v1465 = vld [vmem:[#allocation7 + $0xe00] sm:$0xff]
    %v1466 = vld [vmem:[#allocation7 + $0xe08] sm:$0xff]
    %v1467 = vld [vmem:[#allocation7 + $0xe10] sm:$0xff]
    %v1468 = vld [vmem:[#allocation7 + $0xe18] sm:$0xff]
    %v1469 = vld [vmem:[#allocation7 + $0xe20] sm:$0xff]
    %v1470 = vld [vmem:[#allocation7 + $0xe28] sm:$0xff]
    %v1471 = vld [vmem:[#allocation7 + $0xe30] sm:$0xff]
    %v1472 = vld [vmem:[#allocation7 + $0xe38] sm:$0xff]
    %v1473 = vld [vmem:[#allocation7 + $0xe40] sm:$0xff]
    %v1474 = vld [vmem:[#allocation7 + $0xe48] sm:$0xff]
    %v1475 = vld [vmem:[#allocation7 + $0xe50] sm:$0xff]
    %v1476 = vld [vmem:[#allocation7 + $0xe58] sm:$0xff]
    %v1477 = vld [vmem:[#allocation7 + $0xe60] sm:$0xff]
    %v1478 = vld [vmem:[#allocation7 + $0xe68] sm:$0xff]
    %v1479 = vld [vmem:[#allocation7 + $0xe70] sm:$0xff]
    %v1480 = vld [vmem:[#allocation7 + $0xe78] sm:$0xff]
    %v1481 = vld [vmem:[#allocation7 + $0xe80] sm:$0xff]
    %v1482 = vld [vmem:[#allocation7 + $0xe88] sm:$0xff]
    %v1483 = vld [vmem:[#allocation7 + $0xe90] sm:$0xff]
    %v1484 = vld [vmem:[#allocation7 + $0xe98] sm:$0xff]
    %v1485 = vld [vmem:[#allocation7 + $0xea0] sm:$0xff]
    %v1486 = vld [vmem:[#allocation7 + $0xea8] sm:$0xff]
    %v1487 = vld [vmem:[#allocation7 + $0xeb0] sm:$0xff]
    %v1488 = vld [vmem:[#allocation7 + $0xeb8] sm:$0xff]
    %v1489 = vld [vmem:[#allocation7 + $0xec0] sm:$0xff]
    %v1490 = vld [vmem:[#allocation7 + $0xec8] sm:$0xff]
    %v1491 = vld [vmem:[#allocation7 + $0xed0] sm:$0xff]
    %v1492 = vld [vmem:[#allocation7 + $0xed8] sm:$0xff]
    %v1493 = vunpack.c.l.s8.bf16 %v1017
    %v1494 = vunpack.c.l.s8.bf16 %v1018
    %v1495 = vunpack.c.l.s8.bf16 %v1019
    %v1496 = vunpack.c.l.s8.bf16 %v1020
    %v1497 = vunpack.c.l.s8.bf16 %v1021
    %v1498 = vunpack.c.l.s8.bf16 %v1022
    %v1499 = vunpack.c.l.s8.bf16 %v1023
    %v1500 = vunpack.c.h.s8.bf16 %v1017
    %v1501 = vunpack.c.h.s8.bf16 %v1018
    %v1502 = vunpack.c.h.s8.bf16 %v1019
    %v1503 = vunpack.c.h.s8.bf16 %v1020
    %v1504 = vunpack.c.h.s8.bf16 %v1021
    %v1505 = vunpack.c.h.s8.bf16 %v1022
    %v1506 = vunpack.c.h.s8.bf16 %v1023
    %v1507 = vunpack.c.l.s8.bf16 %v1024
    %v1508 = vunpack.c.l.s8.bf16 %v1025
    %v1509 = vunpack.c.l.s8.bf16 %v1026
    %v1510 = vunpack.c.l.s8.bf16 %v1027
    %v1511 = vunpack.c.l.s8.bf16 %v1028
    %v1512 = vunpack.c.l.s8.bf16 %v1029
    %v1513 = vunpack.c.l.s8.bf16 %v1030
    %v1514 = vunpack.c.h.s8.bf16 %v1024
    %v1515 = vunpack.c.h.s8.bf16 %v1025
    %v1516 = vunpack.c.h.s8.bf16 %v1026
    %v1517 = vunpack.c.h.s8.bf16 %v1027
    %v1518 = vunpack.c.h.s8.bf16 %v1028
    %v1519 = vunpack.c.h.s8.bf16 %v1029
    %v1520 = vunpack.c.h.s8.bf16 %v1030
    %v1521 = vunpack.c.l.s8.bf16 %v1031
    %v1522 = vunpack.c.l.s8.bf16 %v1032
    %v1523 = vunpack.c.l.s8.bf16 %v1033
    %v1524 = vunpack.c.l.s8.bf16 %v1034
    %v1525 = vunpack.c.l.s8.bf16 %v1035
    %v1526 = vunpack.c.l.s8.bf16 %v1036
    %v1527 = vunpack.c.l.s8.bf16 %v1037
    %v1528 = vunpack.c.h.s8.bf16 %v1031
    %v1529 = vunpack.c.h.s8.bf16 %v1032
    %v1530 = vunpack.c.h.s8.bf16 %v1033
    %v1531 = vunpack.c.h.s8.bf16 %v1034
    %v1532 = vunpack.c.h.s8.bf16 %v1035
    %v1533 = vunpack.c.h.s8.bf16 %v1036
    %v1534 = vunpack.c.h.s8.bf16 %v1037
    %v1535 = vunpack.c.l.s8.bf16 %v1038
    %v1536 = vunpack.c.l.s8.bf16 %v1039
    %v1537 = vunpack.c.l.s8.bf16 %v1040
    %v1538 = vunpack.c.l.s8.bf16 %v1041
    %v1539 = vunpack.c.l.s8.bf16 %v1042
    %v1540 = vunpack.c.l.s8.bf16 %v1043
    %v1541 = vunpack.c.l.s8.bf16 %v1044
    %v1542 = vunpack.c.h.s8.bf16 %v1038
    %v1543 = vunpack.c.h.s8.bf16 %v1039
    %v1544 = vunpack.c.h.s8.bf16 %v1040
    %v1545 = vunpack.c.h.s8.bf16 %v1041
    %v1546 = vunpack.c.h.s8.bf16 %v1042
    %v1547 = vunpack.c.h.s8.bf16 %v1043
    %v1548 = vunpack.c.h.s8.bf16 %v1044
    %v1549 = vunpack.c.l.s8.bf16 %v1045
    %v1550 = vunpack.c.l.s8.bf16 %v1046
    %v1551 = vunpack.c.l.s8.bf16 %v1047
    %v1552 = vunpack.c.l.s8.bf16 %v1048
    %v1553 = vunpack.c.l.s8.bf16 %v1049
    %v1554 = vunpack.c.l.s8.bf16 %v1050
    %v1555 = vunpack.c.l.s8.bf16 %v1051
    %v1556 = vunpack.c.h.s8.bf16 %v1045
    %v1557 = vunpack.c.h.s8.bf16 %v1046
    %v1558 = vunpack.c.h.s8.bf16 %v1047
    %v1559 = vunpack.c.h.s8.bf16 %v1048
    %v1560 = vunpack.c.h.s8.bf16 %v1049
    %v1561 = vunpack.c.h.s8.bf16 %v1050
    %v1562 = vunpack.c.h.s8.bf16 %v1051
    %v1563 = vunpack.c.l.s8.bf16 %v1052
    %v1564 = vunpack.c.l.s8.bf16 %v1053
    %v1565 = vunpack.c.l.s8.bf16 %v1054
    %v1566 = vunpack.c.l.s8.bf16 %v1055
    %v1567 = vunpack.c.l.s8.bf16 %v1056
    %v1568 = vunpack.c.l.s8.bf16 %v1057
    %v1569 = vunpack.c.l.s8.bf16 %v1058
    %v1570 = vunpack.c.h.s8.bf16 %v1052
    %v1571 = vunpack.c.h.s8.bf16 %v1053
    %v1572 = vunpack.c.h.s8.bf16 %v1054
    %v1573 = vunpack.c.h.s8.bf16 %v1055
    %v1574 = vunpack.c.h.s8.bf16 %v1056
    %v1575 = vunpack.c.h.s8.bf16 %v1057
    %v1576 = vunpack.c.h.s8.bf16 %v1058
    %v1577 = vunpack.c.l.s8.bf16 %v1059
    %v1578 = vunpack.c.l.s8.bf16 %v1060
    %v1579 = vunpack.c.l.s8.bf16 %v1061
    %v1580 = vunpack.c.l.s8.bf16 %v1062
    %v1581 = vunpack.c.l.s8.bf16 %v1063
    %v1582 = vunpack.c.l.s8.bf16 %v1064
    %v1583 = vunpack.c.l.s8.bf16 %v1065
    %v1584 = vunpack.c.h.s8.bf16 %v1059
    %v1585 = vunpack.c.h.s8.bf16 %v1060
    %v1586 = vunpack.c.h.s8.bf16 %v1061
    %v1587 = vunpack.c.h.s8.bf16 %v1062
    %v1588 = vunpack.c.h.s8.bf16 %v1063
    %v1589 = vunpack.c.h.s8.bf16 %v1064
    %v1590 = vunpack.c.h.s8.bf16 %v1065
    %v1591 = vunpack.c.l.s8.bf16 %v1066
    %v1592 = vunpack.c.l.s8.bf16 %v1067
    %v1593 = vunpack.c.l.s8.bf16 %v1068
    %v1594 = vunpack.c.l.s8.bf16 %v1069
    %v1595 = vunpack.c.l.s8.bf16 %v1070
    %v1596 = vunpack.c.l.s8.bf16 %v1071
    %v1597 = vunpack.c.l.s8.bf16 %v1072
    %v1598 = vunpack.c.h.s8.bf16 %v1066
    %v1599 = vunpack.c.h.s8.bf16 %v1067
    %v1600 = vunpack.c.h.s8.bf16 %v1068
    %v1601 = vunpack.c.h.s8.bf16 %v1069
    %v1602 = vunpack.c.h.s8.bf16 %v1070
    %v1603 = vunpack.c.h.s8.bf16 %v1071
    %v1604 = vunpack.c.h.s8.bf16 %v1072
    %v1605 = vunpack.c.l.s8.bf16 %v1073
    %v1606 = vunpack.c.l.s8.bf16 %v1074
    %v1607 = vunpack.c.l.s8.bf16 %v1075
    %v1608 = vunpack.c.l.s8.bf16 %v1076
    %v1609 = vunpack.c.l.s8.bf16 %v1077
    %v1610 = vunpack.c.l.s8.bf16 %v1078
    %v1611 = vunpack.c.l.s8.bf16 %v1079
    %v1612 = vunpack.c.h.s8.bf16 %v1073
    %v1613 = vunpack.c.h.s8.bf16 %v1074
    %v1614 = vunpack.c.h.s8.bf16 %v1075
    %v1615 = vunpack.c.h.s8.bf16 %v1076
    %v1616 = vunpack.c.h.s8.bf16 %v1077
    %v1617 = vunpack.c.h.s8.bf16 %v1078
    %v1618 = vunpack.c.h.s8.bf16 %v1079
    %v1619 = vunpack.c.l.s8.bf16 %v1080
    %v1620 = vunpack.c.l.s8.bf16 %v1081
    %v1621 = vunpack.c.l.s8.bf16 %v1082
    %v1622 = vunpack.c.l.s8.bf16 %v1083
    %v1623 = vunpack.c.l.s8.bf16 %v1084
    %v1624 = vunpack.c.l.s8.bf16 %v1085
    %v1625 = vunpack.c.l.s8.bf16 %v1086
    %v1626 = vunpack.c.h.s8.bf16 %v1080
    %v1627 = vunpack.c.h.s8.bf16 %v1081
    %v1628 = vunpack.c.h.s8.bf16 %v1082
    %v1629 = vunpack.c.h.s8.bf16 %v1083
    %v1630 = vunpack.c.h.s8.bf16 %v1084
    %v1631 = vunpack.c.h.s8.bf16 %v1085
    %v1632 = vunpack.c.h.s8.bf16 %v1086
    %v1633 = vunpack.c.l.s8.bf16 %v1087
    %v1634 = vunpack.c.l.s8.bf16 %v1088
    %v1635 = vunpack.c.l.s8.bf16 %v1089
    %v1636 = vunpack.c.l.s8.bf16 %v1090
    %v1637 = vunpack.c.l.s8.bf16 %v1091
    %v1638 = vunpack.c.l.s8.bf16 %v1092
    %v1639 = vunpack.c.l.s8.bf16 %v1093
    %v1640 = vunpack.c.h.s8.bf16 %v1087
    %v1641 = vunpack.c.h.s8.bf16 %v1088
    %v1642 = vunpack.c.h.s8.bf16 %v1089
    %v1643 = vunpack.c.h.s8.bf16 %v1090
    %v1644 = vunpack.c.h.s8.bf16 %v1091
    %v1645 = vunpack.c.h.s8.bf16 %v1092
    %v1646 = vunpack.c.h.s8.bf16 %v1093
    %v1647 = vunpack.c.l.s8.bf16 %v1094
    %v1648 = vunpack.c.l.s8.bf16 %v1095
    %v1649 = vunpack.c.l.s8.bf16 %v1096
    %v1650 = vunpack.c.l.s8.bf16 %v1097
    %v1651 = vunpack.c.l.s8.bf16 %v1098
    %v1652 = vunpack.c.l.s8.bf16 %v1099
    %v1653 = vunpack.c.l.s8.bf16 %v1100
    %v1654 = vunpack.c.h.s8.bf16 %v1094
    %v1655 = vunpack.c.h.s8.bf16 %v1095
    %v1656 = vunpack.c.h.s8.bf16 %v1096
    %v1657 = vunpack.c.h.s8.bf16 %v1097
    %v1658 = vunpack.c.h.s8.bf16 %v1098
    %v1659 = vunpack.c.h.s8.bf16 %v1099
    %v1660 = vunpack.c.h.s8.bf16 %v1100
    %v1661 = vunpack.c.l.s8.bf16 %v1101
    %v1662 = vunpack.c.l.s8.bf16 %v1102
    %v1663 = vunpack.c.l.s8.bf16 %v1103
    %v1664 = vunpack.c.l.s8.bf16 %v1104
    %v1665 = vunpack.c.l.s8.bf16 %v1105
    %v1666 = vunpack.c.l.s8.bf16 %v1106
    %v1667 = vunpack.c.l.s8.bf16 %v1107
    %v1668 = vunpack.c.h.s8.bf16 %v1101
    %v1669 = vunpack.c.h.s8.bf16 %v1102
    %v1670 = vunpack.c.h.s8.bf16 %v1103
    %v1671 = vunpack.c.h.s8.bf16 %v1104
    %v1672 = vunpack.c.h.s8.bf16 %v1105
    %v1673 = vunpack.c.h.s8.bf16 %v1106
    %v1674 = vunpack.c.h.s8.bf16 %v1107
    %v1675 = vunpack.c.l.s8.bf16 %v1108
    %v1676 = vunpack.c.l.s8.bf16 %v1109
    %v1677 = vunpack.c.l.s8.bf16 %v1110
    %v1678 = vunpack.c.l.s8.bf16 %v1111
    %v1679 = vunpack.c.l.s8.bf16 %v1112
    %v1680 = vunpack.c.l.s8.bf16 %v1113
    %v1681 = vunpack.c.l.s8.bf16 %v1114
    %v1682 = vunpack.c.h.s8.bf16 %v1108
    %v1683 = vunpack.c.h.s8.bf16 %v1109
    %v1684 = vunpack.c.h.s8.bf16 %v1110
    %v1685 = vunpack.c.h.s8.bf16 %v1111
    %v1686 = vunpack.c.h.s8.bf16 %v1112
    %v1687 = vunpack.c.h.s8.bf16 %v1113
    %v1688 = vunpack.c.h.s8.bf16 %v1114
    %v1689 = vunpack.c.l.s8.bf16 %v1115
    %v1690 = vunpack.c.l.s8.bf16 %v1116
    %v1691 = vunpack.c.l.s8.bf16 %v1117
    %v1692 = vunpack.c.l.s8.bf16 %v1118
    %v1693 = vunpack.c.l.s8.bf16 %v1119
    %v1694 = vunpack.c.l.s8.bf16 %v1120
    %v1695 = vunpack.c.l.s8.bf16 %v1121
    %v1696 = vunpack.c.h.s8.bf16 %v1115
    %v1697 = vunpack.c.h.s8.bf16 %v1116
    %v1698 = vunpack.c.h.s8.bf16 %v1117
    %v1699 = vunpack.c.h.s8.bf16 %v1118
    %v1700 = vunpack.c.h.s8.bf16 %v1119
    %v1701 = vunpack.c.h.s8.bf16 %v1120
    %v1702 = vunpack.c.h.s8.bf16 %v1121
    %v1703 = vunpack.c.l.s8.bf16 %v1122
    %v1704 = vunpack.c.l.s8.bf16 %v1123
    %v1705 = vunpack.c.l.s8.bf16 %v1124
    %v1706 = vunpack.c.l.s8.bf16 %v1125
    %v1707 = vunpack.c.l.s8.bf16 %v1126
    %v1708 = vunpack.c.l.s8.bf16 %v1127
    %v1709 = vunpack.c.l.s8.bf16 %v1128
    %v1710 = vunpack.c.h.s8.bf16 %v1122
    %v1711 = vunpack.c.h.s8.bf16 %v1123
    %v1712 = vunpack.c.h.s8.bf16 %v1124
    %v1713 = vunpack.c.h.s8.bf16 %v1125
    %v1714 = vunpack.c.h.s8.bf16 %v1126
    %v1715 = vunpack.c.h.s8.bf16 %v1127
    %v1716 = vunpack.c.h.s8.bf16 %v1128
    %v1717 = vunpack.c.l.s8.bf16 %v1129
    %v1718 = vunpack.c.l.s8.bf16 %v1130
    %v1719 = vunpack.c.l.s8.bf16 %v1131
    %v1720 = vunpack.c.l.s8.bf16 %v1132
    %v1721 = vunpack.c.l.s8.bf16 %v1133
    %v1722 = vunpack.c.l.s8.bf16 %v1134
    %v1723 = vunpack.c.l.s8.bf16 %v1135
    %v1724 = vunpack.c.h.s8.bf16 %v1129
    %v1725 = vunpack.c.h.s8.bf16 %v1130
    %v1726 = vunpack.c.h.s8.bf16 %v1131
    %v1727 = vunpack.c.h.s8.bf16 %v1132
    %v1728 = vunpack.c.h.s8.bf16 %v1133
    %v1729 = vunpack.c.h.s8.bf16 %v1134
    %v1730 = vunpack.c.h.s8.bf16 %v1135
    %v1731 = vunpack.c.l.s8.bf16 %v1136
    %v1732 = vunpack.c.l.s8.bf16 %v1137
    %v1733 = vunpack.c.l.s8.bf16 %v1138
    %v1734 = vunpack.c.l.s8.bf16 %v1139
    %v1735 = vunpack.c.l.s8.bf16 %v1140
    %v1736 = vunpack.c.l.s8.bf16 %v1141
    %v1737 = vunpack.c.l.s8.bf16 %v1142
    %v1738 = vunpack.c.h.s8.bf16 %v1136
    %v1739 = vunpack.c.h.s8.bf16 %v1137
    %v1740 = vunpack.c.h.s8.bf16 %v1138
    %v1741 = vunpack.c.h.s8.bf16 %v1139
    %v1742 = vunpack.c.h.s8.bf16 %v1140
    %v1743 = vunpack.c.h.s8.bf16 %v1141
    %v1744 = vunpack.c.h.s8.bf16 %v1142
    %v1745 = vunpack.c.l.s8.bf16 %v1143
    %v1746 = vunpack.c.l.s8.bf16 %v1144
    %v1747 = vunpack.c.l.s8.bf16 %v1145
    %v1748 = vunpack.c.l.s8.bf16 %v1146
    %v1749 = vunpack.c.l.s8.bf16 %v1147
    %v1750 = vunpack.c.l.s8.bf16 %v1148
    %v1751 = vunpack.c.l.s8.bf16 %v1149
    %v1752 = vunpack.c.h.s8.bf16 %v1143
    %v1753 = vunpack.c.h.s8.bf16 %v1144
    %v1754 = vunpack.c.h.s8.bf16 %v1145
    %v1755 = vunpack.c.h.s8.bf16 %v1146
    %v1756 = vunpack.c.h.s8.bf16 %v1147
    %v1757 = vunpack.c.h.s8.bf16 %v1148
    %v1758 = vunpack.c.h.s8.bf16 %v1149
    %v1759 = vunpack.c.l.s8.bf16 %v1150
    %v1760 = vunpack.c.l.s8.bf16 %v1151
    %v1761 = vunpack.c.l.s8.bf16 %v1152
    %v1762 = vunpack.c.l.s8.bf16 %v1153
    %v1763 = vunpack.c.l.s8.bf16 %v1154
    %v1764 = vunpack.c.l.s8.bf16 %v1155
    %v1765 = vunpack.c.l.s8.bf16 %v1156
    %v1766 = vunpack.c.h.s8.bf16 %v1150
    %v1767 = vunpack.c.h.s8.bf16 %v1151
    %v1768 = vunpack.c.h.s8.bf16 %v1152
    %v1769 = vunpack.c.h.s8.bf16 %v1153
    %v1770 = vunpack.c.h.s8.bf16 %v1154
    %v1771 = vunpack.c.h.s8.bf16 %v1155
    %v1772 = vunpack.c.h.s8.bf16 %v1156
    %v1773 = vunpack.c.l.s8.bf16 %v1157
    %v1774 = vunpack.c.l.s8.bf16 %v1158
    %v1775 = vunpack.c.l.s8.bf16 %v1159
    %v1776 = vunpack.c.l.s8.bf16 %v1160
    %v1777 = vunpack.c.l.s8.bf16 %v1161
    %v1778 = vunpack.c.l.s8.bf16 %v1162
    %v1779 = vunpack.c.l.s8.bf16 %v1163
    %v1780 = vunpack.c.h.s8.bf16 %v1157
    %v1781 = vunpack.c.h.s8.bf16 %v1158
    %v1782 = vunpack.c.h.s8.bf16 %v1159
    %v1783 = vunpack.c.h.s8.bf16 %v1160
    %v1784 = vunpack.c.h.s8.bf16 %v1161
    %v1785 = vunpack.c.h.s8.bf16 %v1162
    %v1786 = vunpack.c.h.s8.bf16 %v1163
    %v1787 = vunpack.c.l.s8.bf16 %v1164
    %v1788 = vunpack.c.l.s8.bf16 %v1165
    %v1789 = vunpack.c.l.s8.bf16 %v1166
    %v1790 = vunpack.c.l.s8.bf16 %v1167
    %v1791 = vunpack.c.l.s8.bf16 %v1168
    %v1792 = vunpack.c.l.s8.bf16 %v1169
    %v1793 = vunpack.c.l.s8.bf16 %v1170
    %v1794 = vunpack.c.h.s8.bf16 %v1164
    %v1795 = vunpack.c.h.s8.bf16 %v1165
    %v1796 = vunpack.c.h.s8.bf16 %v1166
    %v1797 = vunpack.c.h.s8.bf16 %v1167
    %v1798 = vunpack.c.h.s8.bf16 %v1168
    %v1799 = vunpack.c.h.s8.bf16 %v1169
    %v1800 = vunpack.c.h.s8.bf16 %v1170
    %v1801 = vunpack.c.l.s8.bf16 %v1171
    %v1802 = vunpack.c.l.s8.bf16 %v1172
    %v1803 = vunpack.c.l.s8.bf16 %v1173
    %v1804 = vunpack.c.l.s8.bf16 %v1174
    %v1805 = vunpack.c.l.s8.bf16 %v1175
    %v1806 = vunpack.c.l.s8.bf16 %v1176
    %v1807 = vunpack.c.l.s8.bf16 %v1177
    %v1808 = vunpack.c.h.s8.bf16 %v1171
    %v1809 = vunpack.c.h.s8.bf16 %v1172
    %v1810 = vunpack.c.h.s8.bf16 %v1173
    %v1811 = vunpack.c.h.s8.bf16 %v1174
    %v1812 = vunpack.c.h.s8.bf16 %v1175
    %v1813 = vunpack.c.h.s8.bf16 %v1176
    %v1814 = vunpack.c.h.s8.bf16 %v1177
    %v1815 = vunpack.c.l.s8.bf16 %v1178
    %v1816 = vunpack.c.l.s8.bf16 %v1179
    %v1817 = vunpack.c.l.s8.bf16 %v1180
    %v1818 = vunpack.c.l.s8.bf16 %v1181
    %v1819 = vunpack.c.l.s8.bf16 %v1182
    %v1820 = vunpack.c.l.s8.bf16 %v1183
    %v1821 = vunpack.c.l.s8.bf16 %v1184
    %v1822 = vunpack.c.h.s8.bf16 %v1178
    %v1823 = vunpack.c.h.s8.bf16 %v1179
    %v1824 = vunpack.c.h.s8.bf16 %v1180
    %v1825 = vunpack.c.h.s8.bf16 %v1181
    %v1826 = vunpack.c.h.s8.bf16 %v1182
    %v1827 = vunpack.c.h.s8.bf16 %v1183
    %v1828 = vunpack.c.h.s8.bf16 %v1184
    %v1829 = vunpack.c.l.s8.bf16 %v1185
    %v1830 = vunpack.c.l.s8.bf16 %v1186
    %v1831 = vunpack.c.l.s8.bf16 %v1187
    %v1832 = vunpack.c.l.s8.bf16 %v1188
    %v1833 = vunpack.c.l.s8.bf16 %v1189
    %v1834 = vunpack.c.l.s8.bf16 %v1190
    %v1835 = vunpack.c.l.s8.bf16 %v1191
    %v1836 = vunpack.c.h.s8.bf16 %v1185
    %v1837 = vunpack.c.h.s8.bf16 %v1186
    %v1838 = vunpack.c.h.s8.bf16 %v1187
    %v1839 = vunpack.c.h.s8.bf16 %v1188
    %v1840 = vunpack.c.h.s8.bf16 %v1189
    %v1841 = vunpack.c.h.s8.bf16 %v1190
    %v1842 = vunpack.c.h.s8.bf16 %v1191
    %v1843 = vunpack.c.l.s8.bf16 %v1192
    %v1844 = vunpack.c.l.s8.bf16 %v1193
    %v1845 = vunpack.c.l.s8.bf16 %v1194
    %v1846 = vunpack.c.l.s8.bf16 %v1195
    %v1847 = vunpack.c.l.s8.bf16 %v1196
    %v1848 = vunpack.c.l.s8.bf16 %v1197
    %v1849 = vunpack.c.l.s8.bf16 %v1198
    %v1850 = vunpack.c.h.s8.bf16 %v1192
    %v1851 = vunpack.c.h.s8.bf16 %v1193
    %v1852 = vunpack.c.h.s8.bf16 %v1194
    %v1853 = vunpack.c.h.s8.bf16 %v1195
    %v1854 = vunpack.c.h.s8.bf16 %v1196
    %v1855 = vunpack.c.h.s8.bf16 %v1197
    %v1856 = vunpack.c.h.s8.bf16 %v1198
    %v1857 = vunpack.c.l.s8.bf16 %v1199
    %v1858 = vunpack.c.l.s8.bf16 %v1200
    %v1859 = vunpack.c.l.s8.bf16 %v1201
    %v1860 = vunpack.c.l.s8.bf16 %v1202
    %v1861 = vunpack.c.l.s8.bf16 %v1203
    %v1862 = vunpack.c.l.s8.bf16 %v1204
    %v1863 = vunpack.c.l.s8.bf16 %v1205
    %v1864 = vunpack.c.h.s8.bf16 %v1199
    %v1865 = vunpack.c.h.s8.bf16 %v1200
    %v1866 = vunpack.c.h.s8.bf16 %v1201
    %v1867 = vunpack.c.h.s8.bf16 %v1202
    %v1868 = vunpack.c.h.s8.bf16 %v1203
    %v1869 = vunpack.c.h.s8.bf16 %v1204
    %v1870 = vunpack.c.h.s8.bf16 %v1205
    %v1871 = vunpack.c.l.s8.bf16 %v1206
    %v1872 = vunpack.c.l.s8.bf16 %v1207
    %v1873 = vunpack.c.l.s8.bf16 %v1208
    %v1874 = vunpack.c.l.s8.bf16 %v1209
    %v1875 = vunpack.c.l.s8.bf16 %v1210
    %v1876 = vunpack.c.l.s8.bf16 %v1211
    %v1877 = vunpack.c.l.s8.bf16 %v1212
    %v1878 = vunpack.c.h.s8.bf16 %v1206
    %v1879 = vunpack.c.h.s8.bf16 %v1207
    %v1880 = vunpack.c.h.s8.bf16 %v1208
    %v1881 = vunpack.c.h.s8.bf16 %v1209
    %v1882 = vunpack.c.h.s8.bf16 %v1210
    %v1883 = vunpack.c.h.s8.bf16 %v1211
    %v1884 = vunpack.c.h.s8.bf16 %v1212
    %v1885 = vunpack.c.l.s8.bf16 %v1213
    %v1886 = vunpack.c.l.s8.bf16 %v1214
    %v1887 = vunpack.c.l.s8.bf16 %v1215
    %v1888 = vunpack.c.l.s8.bf16 %v1216
    %v1889 = vunpack.c.l.s8.bf16 %v1217
    %v1890 = vunpack.c.l.s8.bf16 %v1218
    %v1891 = vunpack.c.l.s8.bf16 %v1219
    %v1892 = vunpack.c.h.s8.bf16 %v1213
    %v1893 = vunpack.c.h.s8.bf16 %v1214
    %v1894 = vunpack.c.h.s8.bf16 %v1215
    %v1895 = vunpack.c.h.s8.bf16 %v1216
    %v1896 = vunpack.c.h.s8.bf16 %v1217
    %v1897 = vunpack.c.h.s8.bf16 %v1218
    %v1898 = vunpack.c.h.s8.bf16 %v1219
    %v1899 = vunpack.c.l.s8.bf16 %v1220
    %v1900 = vunpack.c.l.s8.bf16 %v1221
    %v1901 = vunpack.c.l.s8.bf16 %v1222
    %v1902 = vunpack.c.l.s8.bf16 %v1223
    %v1903 = vunpack.c.l.s8.bf16 %v1224
    %v1904 = vunpack.c.l.s8.bf16 %v1225
    %v1905 = vunpack.c.l.s8.bf16 %v1226
    %v1906 = vunpack.c.h.s8.bf16 %v1220
    %v1907 = vunpack.c.h.s8.bf16 %v1221
    %v1908 = vunpack.c.h.s8.bf16 %v1222
    %v1909 = vunpack.c.h.s8.bf16 %v1223
    %v1910 = vunpack.c.h.s8.bf16 %v1224
    %v1911 = vunpack.c.h.s8.bf16 %v1225
    %v1912 = vunpack.c.h.s8.bf16 %v1226
    %v1913 = vunpack.c.l.s8.bf16 %v1227
    %v1914 = vunpack.c.l.s8.bf16 %v1228
    %v1915 = vunpack.c.l.s8.bf16 %v1229
    %v1916 = vunpack.c.l.s8.bf16 %v1230
    %v1917 = vunpack.c.l.s8.bf16 %v1231
    %v1918 = vunpack.c.l.s8.bf16 %v1232
    %v1919 = vunpack.c.l.s8.bf16 %v1233
    %v1920 = vunpack.c.h.s8.bf16 %v1227
    %v1921 = vunpack.c.h.s8.bf16 %v1228
    %v1922 = vunpack.c.h.s8.bf16 %v1229
    %v1923 = vunpack.c.h.s8.bf16 %v1230
    %v1924 = vunpack.c.h.s8.bf16 %v1231
    %v1925 = vunpack.c.h.s8.bf16 %v1232
    %v1926 = vunpack.c.h.s8.bf16 %v1233
    %v1927 = vunpack.c.l.s8.bf16 %v1234
    %v1928 = vunpack.c.l.s8.bf16 %v1235
    %v1929 = vunpack.c.l.s8.bf16 %v1236
    %v1930 = vunpack.c.l.s8.bf16 %v1237
    %v1931 = vunpack.c.l.s8.bf16 %v1238
    %v1932 = vunpack.c.l.s8.bf16 %v1239
    %v1933 = vunpack.c.l.s8.bf16 %v1240
    %v1934 = vunpack.c.h.s8.bf16 %v1234
    %v1935 = vunpack.c.h.s8.bf16 %v1235
    %v1936 = vunpack.c.h.s8.bf16 %v1236
    %v1937 = vunpack.c.h.s8.bf16 %v1237
    %v1938 = vunpack.c.h.s8.bf16 %v1238
    %v1939 = vunpack.c.h.s8.bf16 %v1239
    %v1940 = vunpack.c.h.s8.bf16 %v1240
    %v1941 = vunpack.c.l.s8.bf16 %v1241
    %v1942 = vunpack.c.l.s8.bf16 %v1242
    %v1943 = vunpack.c.l.s8.bf16 %v1243
    %v1944 = vunpack.c.l.s8.bf16 %v1244
    %v1945 = vunpack.c.l.s8.bf16 %v1245
    %v1946 = vunpack.c.l.s8.bf16 %v1246
    %v1947 = vunpack.c.l.s8.bf16 %v1247
    %v1948 = vunpack.c.h.s8.bf16 %v1241
    %v1949 = vunpack.c.h.s8.bf16 %v1242
    %v1950 = vunpack.c.h.s8.bf16 %v1243
    %v1951 = vunpack.c.h.s8.bf16 %v1244
    %v1952 = vunpack.c.h.s8.bf16 %v1245
    %v1953 = vunpack.c.h.s8.bf16 %v1246
    %v1954 = vunpack.c.h.s8.bf16 %v1247
    %v1955 = vunpack.c.l.s8.bf16 %v1248
    %v1956 = vunpack.c.l.s8.bf16 %v1249
    %v1957 = vunpack.c.l.s8.bf16 %v1250
    %v1958 = vunpack.c.l.s8.bf16 %v1251
    %v1959 = vunpack.c.l.s8.bf16 %v1252
    %v1960 = vunpack.c.l.s8.bf16 %v1253
    %v1961 = vunpack.c.l.s8.bf16 %v1254
    %v1962 = vunpack.c.h.s8.bf16 %v1248
    %v1963 = vunpack.c.h.s8.bf16 %v1249
    %v1964 = vunpack.c.h.s8.bf16 %v1250
    %v1965 = vunpack.c.h.s8.bf16 %v1251
    %v1966 = vunpack.c.h.s8.bf16 %v1252
    %v1967 = vunpack.c.h.s8.bf16 %v1253
    %v1968 = vunpack.c.h.s8.bf16 %v1254
    %v1969 = vunpack.c.l.s8.bf16 %v1255
    %v1970 = vunpack.c.l.s8.bf16 %v1256
    %v1971 = vunpack.c.l.s8.bf16 %v1257
    %v1972 = vunpack.c.l.s8.bf16 %v1258
    %v1973 = vunpack.c.l.s8.bf16 %v1259
    %v1974 = vunpack.c.l.s8.bf16 %v1260
    %v1975 = vunpack.c.l.s8.bf16 %v1261
    %v1976 = vunpack.c.h.s8.bf16 %v1255
    %v1977 = vunpack.c.h.s8.bf16 %v1256
    %v1978 = vunpack.c.h.s8.bf16 %v1257
    %v1979 = vunpack.c.h.s8.bf16 %v1258
    %v1980 = vunpack.c.h.s8.bf16 %v1259
    %v1981 = vunpack.c.h.s8.bf16 %v1260
    %v1982 = vunpack.c.h.s8.bf16 %v1261
    %v1983 = vunpack.c.l.s8.bf16 %v1262
    %v1984 = vunpack.c.l.s8.bf16 %v1263
    %v1985 = vunpack.c.l.s8.bf16 %v1264
    %v1986 = vunpack.c.l.s8.bf16 %v1265
    %v1987 = vunpack.c.l.s8.bf16 %v1266
    %v1988 = vunpack.c.l.s8.bf16 %v1267
    %v1989 = vunpack.c.l.s8.bf16 %v1268
    %v1990 = vunpack.c.h.s8.bf16 %v1262
    %v1991 = vunpack.c.h.s8.bf16 %v1263
    %v1992 = vunpack.c.h.s8.bf16 %v1264
    %v1993 = vunpack.c.h.s8.bf16 %v1265
    %v1994 = vunpack.c.h.s8.bf16 %v1266
    %v1995 = vunpack.c.h.s8.bf16 %v1267
    %v1996 = vunpack.c.h.s8.bf16 %v1268
    %v1997 = vunpack.c.l.s8.bf16 %v1269
    %v1998 = vunpack.c.l.s8.bf16 %v1270
    %v1999 = vunpack.c.l.s8.bf16 %v1271
    %v2000 = vunpack.c.l.s8.bf16 %v1272
    %v2001 = vunpack.c.l.s8.bf16 %v1273
    %v2002 = vunpack.c.l.s8.bf16 %v1274
    %v2003 = vunpack.c.l.s8.bf16 %v1275
    %v2004 = vunpack.c.h.s8.bf16 %v1269
    %v2005 = vunpack.c.h.s8.bf16 %v1270
    %v2006 = vunpack.c.h.s8.bf16 %v1271
    %v2007 = vunpack.c.h.s8.bf16 %v1272
    %v2008 = vunpack.c.h.s8.bf16 %v1273
    %v2009 = vunpack.c.h.s8.bf16 %v1274
    %v2010 = vunpack.c.h.s8.bf16 %v1275
    %v2011 = vunpack.c.l.s8.bf16 %v1276
    %v2012 = vunpack.c.l.s8.bf16 %v1277
    %v2013 = vunpack.c.l.s8.bf16 %v1278
    %v2014 = vunpack.c.l.s8.bf16 %v1279
    %v2015 = vunpack.c.l.s8.bf16 %v1280
    %v2016 = vunpack.c.l.s8.bf16 %v1281
    %v2017 = vunpack.c.l.s8.bf16 %v1282
    %v2018 = vunpack.c.h.s8.bf16 %v1276
    %v2019 = vunpack.c.h.s8.bf16 %v1277
    %v2020 = vunpack.c.h.s8.bf16 %v1278
    %v2021 = vunpack.c.h.s8.bf16 %v1279
    %v2022 = vunpack.c.h.s8.bf16 %v1280
    %v2023 = vunpack.c.h.s8.bf16 %v1281
    %v2024 = vunpack.c.h.s8.bf16 %v1282
    %v2025 = vunpack.c.l.s8.bf16 %v1283
    %v2026 = vunpack.c.l.s8.bf16 %v1284
    %v2027 = vunpack.c.l.s8.bf16 %v1285
    %v2028 = vunpack.c.l.s8.bf16 %v1286
    %v2029 = vunpack.c.l.s8.bf16 %v1287
    %v2030 = vunpack.c.l.s8.bf16 %v1288
    %v2031 = vunpack.c.l.s8.bf16 %v1289
    %v2032 = vunpack.c.h.s8.bf16 %v1283
    %v2033 = vunpack.c.h.s8.bf16 %v1284
    %v2034 = vunpack.c.h.s8.bf16 %v1285
    %v2035 = vunpack.c.h.s8.bf16 %v1286
    %v2036 = vunpack.c.h.s8.bf16 %v1287
    %v2037 = vunpack.c.h.s8.bf16 %v1288
    %v2038 = vunpack.c.h.s8.bf16 %v1289
    %v2039 = vunpack.c.l.s8.bf16 %v1290
    %v2040 = vunpack.c.l.s8.bf16 %v1291
    %v2041 = vunpack.c.l.s8.bf16 %v1292
    %v2042 = vunpack.c.l.s8.bf16 %v1293
    %v2043 = vunpack.c.l.s8.bf16 %v1294
    %v2044 = vunpack.c.l.s8.bf16 %v1295
    %v2045 = vunpack.c.l.s8.bf16 %v1296
    %v2046 = vunpack.c.h.s8.bf16 %v1290
    %v2047 = vunpack.c.h.s8.bf16 %v1291
    %v2048 = vunpack.c.h.s8.bf16 %v1292
    %v2049 = vunpack.c.h.s8.bf16 %v1293
    %v2050 = vunpack.c.h.s8.bf16 %v1294
    %v2051 = vunpack.c.h.s8.bf16 %v1295
    %v2052 = vunpack.c.h.s8.bf16 %v1296
    %v2053 = vunpack.c.l.s8.bf16 %v1297
    %v2054 = vunpack.c.l.s8.bf16 %v1298
    %v2055 = vunpack.c.l.s8.bf16 %v1299
    %v2056 = vunpack.c.l.s8.bf16 %v1300
    %v2057 = vunpack.c.l.s8.bf16 %v1301
    %v2058 = vunpack.c.l.s8.bf16 %v1302
    %v2059 = vunpack.c.l.s8.bf16 %v1303
    %v2060 = vunpack.c.h.s8.bf16 %v1297
    %v2061 = vunpack.c.h.s8.bf16 %v1298
    %v2062 = vunpack.c.h.s8.bf16 %v1299
    %v2063 = vunpack.c.h.s8.bf16 %v1300
    %v2064 = vunpack.c.h.s8.bf16 %v1301
    %v2065 = vunpack.c.h.s8.bf16 %v1302
    %v2066 = vunpack.c.h.s8.bf16 %v1303
    %v2067 = vunpack.c.l.s8.bf16 %v1304
    %v2068 = vunpack.c.l.s8.bf16 %v1305
    %v2069 = vunpack.c.l.s8.bf16 %v1306
    %v2070 = vunpack.c.l.s8.bf16 %v1307
    %v2071 = vunpack.c.l.s8.bf16 %v1308
    %v2072 = vunpack.c.l.s8.bf16 %v1309
    %v2073 = vunpack.c.l.s8.bf16 %v1310
    %v2074 = vunpack.c.h.s8.bf16 %v1304
    %v2075 = vunpack.c.h.s8.bf16 %v1305
    %v2076 = vunpack.c.h.s8.bf16 %v1306
    %v2077 = vunpack.c.h.s8.bf16 %v1307
    %v2078 = vunpack.c.h.s8.bf16 %v1308
    %v2079 = vunpack.c.h.s8.bf16 %v1309
    %v2080 = vunpack.c.h.s8.bf16 %v1310
    %v2081 = vunpack.c.l.s8.bf16 %v1311
    %v2082 = vunpack.c.l.s8.bf16 %v1312
    %v2083 = vunpack.c.l.s8.bf16 %v1313
    %v2084 = vunpack.c.l.s8.bf16 %v1314
    %v2085 = vunpack.c.l.s8.bf16 %v1315
    %v2086 = vunpack.c.l.s8.bf16 %v1316
    %v2087 = vunpack.c.l.s8.bf16 %v1317
    %v2088 = vunpack.c.h.s8.bf16 %v1311
    %v2089 = vunpack.c.h.s8.bf16 %v1312
    %v2090 = vunpack.c.h.s8.bf16 %v1313
    %v2091 = vunpack.c.h.s8.bf16 %v1314
    %v2092 = vunpack.c.h.s8.bf16 %v1315
    %v2093 = vunpack.c.h.s8.bf16 %v1316
    %v2094 = vunpack.c.h.s8.bf16 %v1317
    %v2095 = vunpack.c.l.s8.bf16 %v1318
    %v2096 = vunpack.c.l.s8.bf16 %v1319
    %v2097 = vunpack.c.l.s8.bf16 %v1320
    %v2098 = vunpack.c.l.s8.bf16 %v1321
    %v2099 = vunpack.c.l.s8.bf16 %v1322
    %v2100 = vunpack.c.l.s8.bf16 %v1323
    %v2101 = vunpack.c.l.s8.bf16 %v1324
    %v2102 = vunpack.c.h.s8.bf16 %v1318
    %v2103 = vunpack.c.h.s8.bf16 %v1319
    %v2104 = vunpack.c.h.s8.bf16 %v1320
    %v2105 = vunpack.c.h.s8.bf16 %v1321
    %v2106 = vunpack.c.h.s8.bf16 %v1322
    %v2107 = vunpack.c.h.s8.bf16 %v1323
    %v2108 = vunpack.c.h.s8.bf16 %v1324
    %v2109 = vunpack.c.l.s8.bf16 %v1325
    %v2110 = vunpack.c.l.s8.bf16 %v1326
    %v2111 = vunpack.c.l.s8.bf16 %v1327
    %v2112 = vunpack.c.l.s8.bf16 %v1328
    %v2113 = vunpack.c.l.s8.bf16 %v1329
    %v2114 = vunpack.c.l.s8.bf16 %v1330
    %v2115 = vunpack.c.l.s8.bf16 %v1331
    %v2116 = vunpack.c.h.s8.bf16 %v1325
    %v2117 = vunpack.c.h.s8.bf16 %v1326
    %v2118 = vunpack.c.h.s8.bf16 %v1327
    %v2119 = vunpack.c.h.s8.bf16 %v1328
    %v2120 = vunpack.c.h.s8.bf16 %v1329
    %v2121 = vunpack.c.h.s8.bf16 %v1330
    %v2122 = vunpack.c.h.s8.bf16 %v1331
    %v2123 = vunpack.c.l.s8.bf16 %v1332
    %v2124 = vunpack.c.l.s8.bf16 %v1333
    %v2125 = vunpack.c.l.s8.bf16 %v1334
    %v2126 = vunpack.c.l.s8.bf16 %v1335
    %v2127 = vunpack.c.l.s8.bf16 %v1336
    %v2128 = vunpack.c.l.s8.bf16 %v1337
    %v2129 = vunpack.c.l.s8.bf16 %v1338
    %v2130 = vunpack.c.h.s8.bf16 %v1332
    %v2131 = vunpack.c.h.s8.bf16 %v1333
    %v2132 = vunpack.c.h.s8.bf16 %v1334
    %v2133 = vunpack.c.h.s8.bf16 %v1335
    %v2134 = vunpack.c.h.s8.bf16 %v1336
    %v2135 = vunpack.c.h.s8.bf16 %v1337
    %v2136 = vunpack.c.h.s8.bf16 %v1338
    %v2137 = vunpack.c.l.s8.bf16 %v1339
    %v2138 = vunpack.c.l.s8.bf16 %v1340
    %v2139 = vunpack.c.l.s8.bf16 %v1341
    %v2140 = vunpack.c.l.s8.bf16 %v1342
    %v2141 = vunpack.c.l.s8.bf16 %v1343
    %v2142 = vunpack.c.l.s8.bf16 %v1344
    %v2143 = vunpack.c.l.s8.bf16 %v1345
    %v2144 = vunpack.c.h.s8.bf16 %v1339
    %v2145 = vunpack.c.h.s8.bf16 %v1340
    %v2146 = vunpack.c.h.s8.bf16 %v1341
    %v2147 = vunpack.c.h.s8.bf16 %v1342
    %v2148 = vunpack.c.h.s8.bf16 %v1343
    %v2149 = vunpack.c.h.s8.bf16 %v1344
    %v2150 = vunpack.c.h.s8.bf16 %v1345
    %v2151 = vunpack.c.l.s8.bf16 %v1346
    %v2152 = vunpack.c.l.s8.bf16 %v1347
    %v2153 = vunpack.c.l.s8.bf16 %v1348
    %v2154 = vunpack.c.l.s8.bf16 %v1349
    %v2155 = vunpack.c.l.s8.bf16 %v1350
    %v2156 = vunpack.c.l.s8.bf16 %v1351
    %v2157 = vunpack.c.l.s8.bf16 %v1352
    %v2158 = vunpack.c.h.s8.bf16 %v1346
    %v2159 = vunpack.c.h.s8.bf16 %v1347
    %v2160 = vunpack.c.h.s8.bf16 %v1348
    %v2161 = vunpack.c.h.s8.bf16 %v1349
    %v2162 = vunpack.c.h.s8.bf16 %v1350
    %v2163 = vunpack.c.h.s8.bf16 %v1351
    %v2164 = vunpack.c.h.s8.bf16 %v1352
    %v2165 = vunpack.c.l.s8.bf16 %v1353
    %v2166 = vunpack.c.l.s8.bf16 %v1354
    %v2167 = vunpack.c.l.s8.bf16 %v1355
    %v2168 = vunpack.c.l.s8.bf16 %v1356
    %v2169 = vunpack.c.l.s8.bf16 %v1357
    %v2170 = vunpack.c.l.s8.bf16 %v1358
    %v2171 = vunpack.c.l.s8.bf16 %v1359
    %v2172 = vunpack.c.h.s8.bf16 %v1353
    %v2173 = vunpack.c.h.s8.bf16 %v1354
    %v2174 = vunpack.c.h.s8.bf16 %v1355
    %v2175 = vunpack.c.h.s8.bf16 %v1356
    %v2176 = vunpack.c.h.s8.bf16 %v1357
    %v2177 = vunpack.c.h.s8.bf16 %v1358
    %v2178 = vunpack.c.h.s8.bf16 %v1359
    %v2179 = vunpack.c.l.s8.bf16 %v1360
    %v2180 = vunpack.c.l.s8.bf16 %v1361
    %v2181 = vunpack.c.l.s8.bf16 %v1362
    %v2182 = vunpack.c.l.s8.bf16 %v1363
    %v2183 = vunpack.c.l.s8.bf16 %v1364
    %v2184 = vunpack.c.l.s8.bf16 %v1365
    %v2185 = vunpack.c.l.s8.bf16 %v1366
    %v2186 = vunpack.c.h.s8.bf16 %v1360
    %v2187 = vunpack.c.h.s8.bf16 %v1361
    %v2188 = vunpack.c.h.s8.bf16 %v1362
    %v2189 = vunpack.c.h.s8.bf16 %v1363
    %v2190 = vunpack.c.h.s8.bf16 %v1364
    %v2191 = vunpack.c.h.s8.bf16 %v1365
    %v2192 = vunpack.c.h.s8.bf16 %v1366
    %v2193 = vunpack.c.l.s8.bf16 %v1367
    %v2194 = vunpack.c.l.s8.bf16 %v1368
    %v2195 = vunpack.c.l.s8.bf16 %v1369
    %v2196 = vunpack.c.l.s8.bf16 %v1370
    %v2197 = vunpack.c.l.s8.bf16 %v1371
    %v2198 = vunpack.c.l.s8.bf16 %v1372
    %v2199 = vunpack.c.l.s8.bf16 %v1373
    %v2200 = vunpack.c.h.s8.bf16 %v1367
    %v2201 = vunpack.c.h.s8.bf16 %v1368
    %v2202 = vunpack.c.h.s8.bf16 %v1369
    %v2203 = vunpack.c.h.s8.bf16 %v1370
    %v2204 = vunpack.c.h.s8.bf16 %v1371
    %v2205 = vunpack.c.h.s8.bf16 %v1372
    %v2206 = vunpack.c.h.s8.bf16 %v1373
    %v2207 = vunpack.c.l.s8.bf16 %v1374
    %v2208 = vunpack.c.l.s8.bf16 %v1375
    %v2209 = vunpack.c.l.s8.bf16 %v1376
    %v2210 = vunpack.c.l.s8.bf16 %v1377
    %v2211 = vunpack.c.l.s8.bf16 %v1378
    %v2212 = vunpack.c.l.s8.bf16 %v1379
    %v2213 = vunpack.c.l.s8.bf16 %v1380
    %v2214 = vunpack.c.h.s8.bf16 %v1374
    %v2215 = vunpack.c.h.s8.bf16 %v1375
    %v2216 = vunpack.c.h.s8.bf16 %v1376
    %v2217 = vunpack.c.h.s8.bf16 %v1377
    %v2218 = vunpack.c.h.s8.bf16 %v1378
    %v2219 = vunpack.c.h.s8.bf16 %v1379
    %v2220 = vunpack.c.h.s8.bf16 %v1380
    %v2221 = vunpack.c.l.s8.bf16 %v1381
    %v2222 = vunpack.c.l.s8.bf16 %v1382
    %v2223 = vunpack.c.l.s8.bf16 %v1383
    %v2224 = vunpack.c.l.s8.bf16 %v1384
    %v2225 = vunpack.c.l.s8.bf16 %v1385
    %v2226 = vunpack.c.l.s8.bf16 %v1386
    %v2227 = vunpack.c.l.s8.bf16 %v1387
    %v2228 = vunpack.c.h.s8.bf16 %v1381
    %v2229 = vunpack.c.h.s8.bf16 %v1382
    %v2230 = vunpack.c.h.s8.bf16 %v1383
    %v2231 = vunpack.c.h.s8.bf16 %v1384
    %v2232 = vunpack.c.h.s8.bf16 %v1385
    %v2233 = vunpack.c.h.s8.bf16 %v1386
    %v2234 = vunpack.c.h.s8.bf16 %v1387
    %v2235 = vunpack.c.l.s8.bf16 %v1388
    %v2236 = vunpack.c.l.s8.bf16 %v1389
    %v2237 = vunpack.c.l.s8.bf16 %v1390
    %v2238 = vunpack.c.l.s8.bf16 %v1391
    %v2239 = vunpack.c.l.s8.bf16 %v1392
    %v2240 = vunpack.c.l.s8.bf16 %v1393
    %v2241 = vunpack.c.l.s8.bf16 %v1394
    %v2242 = vunpack.c.h.s8.bf16 %v1388
    %v2243 = vunpack.c.h.s8.bf16 %v1389
    %v2244 = vunpack.c.h.s8.bf16 %v1390
    %v2245 = vunpack.c.h.s8.bf16 %v1391
    %v2246 = vunpack.c.h.s8.bf16 %v1392
    %v2247 = vunpack.c.h.s8.bf16 %v1393
    %v2248 = vunpack.c.h.s8.bf16 %v1394
    %v2249 = vunpack.c.l.s8.bf16 %v1395
    %v2250 = vunpack.c.l.s8.bf16 %v1396
    %v2251 = vunpack.c.l.s8.bf16 %v1397
    %v2252 = vunpack.c.l.s8.bf16 %v1398
    %v2253 = vunpack.c.l.s8.bf16 %v1399
    %v2254 = vunpack.c.l.s8.bf16 %v1400
    %v2255 = vunpack.c.l.s8.bf16 %v1401
    %v2256 = vunpack.c.h.s8.bf16 %v1395
    %v2257 = vunpack.c.h.s8.bf16 %v1396
    %v2258 = vunpack.c.h.s8.bf16 %v1397
    %v2259 = vunpack.c.h.s8.bf16 %v1398
    %v2260 = vunpack.c.h.s8.bf16 %v1399
    %v2261 = vunpack.c.h.s8.bf16 %v1400
    %v2262 = vunpack.c.h.s8.bf16 %v1401
    %v2263 = vunpack.c.l.s8.bf16 %v1402
    %v2264 = vunpack.c.l.s8.bf16 %v1403
    %v2265 = vunpack.c.l.s8.bf16 %v1404
    %v2266 = vunpack.c.l.s8.bf16 %v1405
    %v2267 = vunpack.c.l.s8.bf16 %v1406
    %v2268 = vunpack.c.l.s8.bf16 %v1407
    %v2269 = vunpack.c.l.s8.bf16 %v1408
    %v2270 = vunpack.c.h.s8.bf16 %v1402
    %v2271 = vunpack.c.h.s8.bf16 %v1403
    %v2272 = vunpack.c.h.s8.bf16 %v1404
    %v2273 = vunpack.c.h.s8.bf16 %v1405
    %v2274 = vunpack.c.h.s8.bf16 %v1406
    %v2275 = vunpack.c.h.s8.bf16 %v1407
    %v2276 = vunpack.c.h.s8.bf16 %v1408
    %v2277 = vunpack.c.l.s8.bf16 %v1409
    %v2278 = vunpack.c.l.s8.bf16 %v1410
    %v2279 = vunpack.c.l.s8.bf16 %v1411
    %v2280 = vunpack.c.l.s8.bf16 %v1412
    %v2281 = vunpack.c.l.s8.bf16 %v1413
    %v2282 = vunpack.c.l.s8.bf16 %v1414
    %v2283 = vunpack.c.l.s8.bf16 %v1415
    %v2284 = vunpack.c.h.s8.bf16 %v1409
    %v2285 = vunpack.c.h.s8.bf16 %v1410
    %v2286 = vunpack.c.h.s8.bf16 %v1411
    %v2287 = vunpack.c.h.s8.bf16 %v1412
    %v2288 = vunpack.c.h.s8.bf16 %v1413
    %v2289 = vunpack.c.h.s8.bf16 %v1414
    %v2290 = vunpack.c.h.s8.bf16 %v1415
    %v2291 = vunpack.c.l.s8.bf16 %v1416
    %v2292 = vunpack.c.l.s8.bf16 %v1417
    %v2293 = vunpack.c.l.s8.bf16 %v1418
    %v2294 = vunpack.c.l.s8.bf16 %v1419
    %v2295 = vunpack.c.l.s8.bf16 %v1420
    %v2296 = vunpack.c.l.s8.bf16 %v1421
    %v2297 = vunpack.c.l.s8.bf16 %v1422
    %v2298 = vunpack.c.h.s8.bf16 %v1416
    %v2299 = vunpack.c.h.s8.bf16 %v1417
    %v2300 = vunpack.c.h.s8.bf16 %v1418
    %v2301 = vunpack.c.h.s8.bf16 %v1419
    %v2302 = vunpack.c.h.s8.bf16 %v1420
    %v2303 = vunpack.c.h.s8.bf16 %v1421
    %v2304 = vunpack.c.h.s8.bf16 %v1422
    %v2305 = vunpack.c.l.s8.bf16 %v1423
    %v2306 = vunpack.c.l.s8.bf16 %v1424
    %v2307 = vunpack.c.l.s8.bf16 %v1425
    %v2308 = vunpack.c.l.s8.bf16 %v1426
    %v2309 = vunpack.c.l.s8.bf16 %v1427
    %v2310 = vunpack.c.l.s8.bf16 %v1428
    %v2311 = vunpack.c.l.s8.bf16 %v1429
    %v2312 = vunpack.c.h.s8.bf16 %v1423
    %v2313 = vunpack.c.h.s8.bf16 %v1424
    %v2314 = vunpack.c.h.s8.bf16 %v1425
    %v2315 = vunpack.c.h.s8.bf16 %v1426
    %v2316 = vunpack.c.h.s8.bf16 %v1427
    %v2317 = vunpack.c.h.s8.bf16 %v1428
    %v2318 = vunpack.c.h.s8.bf16 %v1429
    %v2319 = vunpack.c.l.s8.bf16 %v1430
    %v2320 = vunpack.c.l.s8.bf16 %v1431
    %v2321 = vunpack.c.l.s8.bf16 %v1432
    %v2322 = vunpack.c.l.s8.bf16 %v1433
    %v2323 = vunpack.c.l.s8.bf16 %v1434
    %v2324 = vunpack.c.l.s8.bf16 %v1435
    %v2325 = vunpack.c.l.s8.bf16 %v1436
    %v2326 = vunpack.c.h.s8.bf16 %v1430
    %v2327 = vunpack.c.h.s8.bf16 %v1431
    %v2328 = vunpack.c.h.s8.bf16 %v1432
    %v2329 = vunpack.c.h.s8.bf16 %v1433
    %v2330 = vunpack.c.h.s8.bf16 %v1434
    %v2331 = vunpack.c.h.s8.bf16 %v1435
    %v2332 = vunpack.c.h.s8.bf16 %v1436
    %v2333 = vunpack.c.l.s8.bf16 %v1437
    %v2334 = vunpack.c.l.s8.bf16 %v1438
    %v2335 = vunpack.c.l.s8.bf16 %v1439
    %v2336 = vunpack.c.l.s8.bf16 %v1440
    %v2337 = vunpack.c.l.s8.bf16 %v1441
    %v2338 = vunpack.c.l.s8.bf16 %v1442
    %v2339 = vunpack.c.l.s8.bf16 %v1443
    %v2340 = vunpack.c.h.s8.bf16 %v1437
    %v2341 = vunpack.c.h.s8.bf16 %v1438
    %v2342 = vunpack.c.h.s8.bf16 %v1439
    %v2343 = vunpack.c.h.s8.bf16 %v1440
    %v2344 = vunpack.c.h.s8.bf16 %v1441
    %v2345 = vunpack.c.h.s8.bf16 %v1442
    %v2346 = vunpack.c.h.s8.bf16 %v1443
    %v2347 = vunpack.c.l.s8.bf16 %v1444
    %v2348 = vunpack.c.l.s8.bf16 %v1445
    %v2349 = vunpack.c.l.s8.bf16 %v1446
    %v2350 = vunpack.c.l.s8.bf16 %v1447
    %v2351 = vunpack.c.l.s8.bf16 %v1448
    %v2352 = vunpack.c.l.s8.bf16 %v1449
    %v2353 = vunpack.c.l.s8.bf16 %v1450
    %v2354 = vunpack.c.h.s8.bf16 %v1444
    %v2355 = vunpack.c.h.s8.bf16 %v1445
    %v2356 = vunpack.c.h.s8.bf16 %v1446
    %v2357 = vunpack.c.h.s8.bf16 %v1447
    %v2358 = vunpack.c.h.s8.bf16 %v1448
    %v2359 = vunpack.c.h.s8.bf16 %v1449
    %v2360 = vunpack.c.h.s8.bf16 %v1450
    %v2361 = vunpack.c.l.s8.bf16 %v1451
    %v2362 = vunpack.c.l.s8.bf16 %v1452
    %v2363 = vunpack.c.l.s8.bf16 %v1453
    %v2364 = vunpack.c.l.s8.bf16 %v1454
    %v2365 = vunpack.c.l.s8.bf16 %v1455
    %v2366 = vunpack.c.l.s8.bf16 %v1456
    %v2367 = vunpack.c.l.s8.bf16 %v1457
    %v2368 = vunpack.c.h.s8.bf16 %v1451
    %v2369 = vunpack.c.h.s8.bf16 %v1452
    %v2370 = vunpack.c.h.s8.bf16 %v1453
    %v2371 = vunpack.c.h.s8.bf16 %v1454
    %v2372 = vunpack.c.h.s8.bf16 %v1455
    %v2373 = vunpack.c.h.s8.bf16 %v1456
    %v2374 = vunpack.c.h.s8.bf16 %v1457
    %v2375 = vunpack.c.l.s8.bf16 %v1458
    %v2376 = vunpack.c.l.s8.bf16 %v1459
    %v2377 = vunpack.c.l.s8.bf16 %v1460
    %v2378 = vunpack.c.l.s8.bf16 %v1461
    %v2379 = vunpack.c.l.s8.bf16 %v1462
    %v2380 = vunpack.c.l.s8.bf16 %v1463
    %v2381 = vunpack.c.l.s8.bf16 %v1464
    %v2382 = vunpack.c.h.s8.bf16 %v1458
    %v2383 = vunpack.c.h.s8.bf16 %v1459
    %v2384 = vunpack.c.h.s8.bf16 %v1460
    %v2385 = vunpack.c.h.s8.bf16 %v1461
    %v2386 = vunpack.c.h.s8.bf16 %v1462
    %v2387 = vunpack.c.h.s8.bf16 %v1463
    %v2388 = vunpack.c.h.s8.bf16 %v1464
    %v2389 = vunpack.c.l.s8.bf16 %v1465
    %v2390 = vunpack.c.l.s8.bf16 %v1466
    %v2391 = vunpack.c.l.s8.bf16 %v1467
    %v2392 = vunpack.c.l.s8.bf16 %v1468
    %v2393 = vunpack.c.l.s8.bf16 %v1469
    %v2394 = vunpack.c.l.s8.bf16 %v1470
    %v2395 = vunpack.c.l.s8.bf16 %v1471
    %v2396 = vunpack.c.h.s8.bf16 %v1465
    %v2397 = vunpack.c.h.s8.bf16 %v1466
    %v2398 = vunpack.c.h.s8.bf16 %v1467
    %v2399 = vunpack.c.h.s8.bf16 %v1468
    %v2400 = vunpack.c.h.s8.bf16 %v1469
    %v2401 = vunpack.c.h.s8.bf16 %v1470
    %v2402 = vunpack.c.h.s8.bf16 %v1471
    %v2403 = vunpack.c.l.s8.bf16 %v1472
    %v2404 = vunpack.c.l.s8.bf16 %v1473
    %v2405 = vunpack.c.l.s8.bf16 %v1474
    %v2406 = vunpack.c.l.s8.bf16 %v1475
    %v2407 = vunpack.c.l.s8.bf16 %v1476
    %v2408 = vunpack.c.l.s8.bf16 %v1477
    %v2409 = vunpack.c.l.s8.bf16 %v1478
    %v2410 = vunpack.c.h.s8.bf16 %v1472
    %v2411 = vunpack.c.h.s8.bf16 %v1473
    %v2412 = vunpack.c.h.s8.bf16 %v1474
    %v2413 = vunpack.c.h.s8.bf16 %v1475
    %v2414 = vunpack.c.h.s8.bf16 %v1476
    %v2415 = vunpack.c.h.s8.bf16 %v1477
    %v2416 = vunpack.c.h.s8.bf16 %v1478
    %v2417 = vunpack.c.l.s8.bf16 %v1479
    %v2418 = vunpack.c.l.s8.bf16 %v1480
    %v2419 = vunpack.c.l.s8.bf16 %v1481
    %v2420 = vunpack.c.l.s8.bf16 %v1482
    %v2421 = vunpack.c.l.s8.bf16 %v1483
    %v2422 = vunpack.c.l.s8.bf16 %v1484
    %v2423 = vunpack.c.l.s8.bf16 %v1485
    %v2424 = vunpack.c.h.s8.bf16 %v1479
    %v2425 = vunpack.c.h.s8.bf16 %v1480
    %v2426 = vunpack.c.h.s8.bf16 %v1481
    %v2427 = vunpack.c.h.s8.bf16 %v1482
    %v2428 = vunpack.c.h.s8.bf16 %v1483
    %v2429 = vunpack.c.h.s8.bf16 %v1484
    %v2430 = vunpack.c.h.s8.bf16 %v1485
    %v2431 = vunpack.c.l.s8.bf16 %v1486
    %v2432 = vunpack.c.l.s8.bf16 %v1487
    %v2433 = vunpack.c.l.s8.bf16 %v1488
    %v2434 = vunpack.c.l.s8.bf16 %v1489
    %v2435 = vunpack.c.l.s8.bf16 %v1490
    %v2436 = vunpack.c.l.s8.bf16 %v1491
    %v2437 = vunpack.c.l.s8.bf16 %v1492
    %v2438 = vunpack.c.h.s8.bf16 %v1486
    %v2439 = vunpack.c.h.s8.bf16 %v1487
    %v2440 = vunpack.c.h.s8.bf16 %v1488
    %v2441 = vunpack.c.h.s8.bf16 %v1489
    %v2442 = vunpack.c.h.s8.bf16 %v1490
    %v2443 = vunpack.c.h.s8.bf16 %v1491
    %v2444 = vunpack.c.h.s8.bf16 %v1492
    %2445 = vmatprep.subr.bf16.mxu0 %v1543
    %2446 = vmatpush1.bf16.msra.mxu0 %v1542
    %2447 = vmatprep.subr.bf16.mxu0 %v1536
    %2448 = vmatpush1.bf16.msra.mxu0 %v1535
    %2449 = vmatprep.subr.bf16.mxu0 %v1529
    %2450 = vmatpush1.bf16.msra.mxu0 %v1528
    %2451 = vmatprep.subr.bf16.mxu0 %v1522
    %2452 = vmatpush1.bf16.msra.mxu0 %v1521
    %2453 = vmatprep.subr.bf16.mxu0 %v1515
    %2454 = vmatpush1.bf16.msra.mxu0 %v1514
    %2455 = vmatprep.subr.bf16.mxu0 %v1508
    %2456 = vmatpush1.bf16.msra.mxu0 %v1507
    %2457 = vmatprep.subr.bf16.mxu0 %v1501
    %2458 = vmatpush1.bf16.msra.mxu0 %v1500
    %2459 = vmatprep.subr.bf16.mxu0 %v1494
    %2460 = vmatpush1.bf16.msra.mxu0 %v1493
    %2461 = vmatprep.subr.bf16.mxu0 %v1599
    %2462 = vmatpush2.bf16.msra.mxu0 %v1598
    %2463 = vmatprep.subr.bf16.mxu0 %v1592
    %2464 = vmatpush2.bf16.msra.mxu0 %v1591
    %2465 = vmatprep.subr.bf16.mxu0 %v1585
    %2466 = vmatpush2.bf16.msra.mxu0 %v1584
    %2467 = vmatprep.subr.bf16.mxu0 %v1578
    %2468 = vmatpush2.bf16.msra.mxu0 %v1577
    %2469 = vmatprep.subr.bf16.mxu0 %v1571
    %2470 = vmatpush2.bf16.msra.mxu0 %v1570
    %2471 = vmatprep.subr.bf16.mxu0 %v1564
    %2472 = vmatpush2.bf16.msra.mxu0 %v1563
    %2473 = vmatprep.subr.bf16.mxu0 %v1557
    %2474 = vmatpush2.bf16.msra.mxu0 %v1556
    %2475 = vmatprep.subr.bf16.mxu0 %v1550
    %2476 = vmatpush2.bf16.msra.mxu0 %v1549
    %2477 = vmatprep.mubr.bf16.mxu0 %v1001
    %2478 = vmatmul.mubr.bf16.gmra.mxu0 %v1000
    %v2479 = vpop.f32.mrf.mxu0
    %v2480 = vadd.f32 0.0, %v2479
    %v2481 = vpop.f32.mrf.mxu0
    %v2482 = vadd.f32 0.0, %v2481
    %v2483 = vpop.f32.mrf.mxu0
    %v2484 = vpop.f32.mrf.mxu0
    %2485 = vdwg.mxu0
    %2486 = vmatprep.subr.bf16.mxu0 %v1655
    %2487 = vmatpush1.bf16.msra.mxu0 %v1654
    %2488 = vmatprep.subr.bf16.mxu0 %v1648
    %2489 = vmatpush1.bf16.msra.mxu0 %v1647
    %2490 = vmatprep.subr.bf16.mxu0 %v1641
    %2491 = vmatpush1.bf16.msra.mxu0 %v1640
    %2492 = vmatprep.subr.bf16.mxu0 %v1634
    %2493 = vmatpush1.bf16.msra.mxu0 %v1633
    %2494 = vmatprep.subr.bf16.mxu0 %v1627
    %2495 = vmatpush1.bf16.msra.mxu0 %v1626
    %2496 = vmatprep.subr.bf16.mxu0 %v1620
    %2497 = vmatpush1.bf16.msra.mxu0 %v1619
    %2498 = vmatprep.subr.bf16.mxu0 %v1613
    %2499 = vmatpush1.bf16.msra.mxu0 %v1612
    %2500 = vmatprep.subr.bf16.mxu0 %v1606
    %2501 = vmatpush1.bf16.msra.mxu0 %v1605
    %2502 = vmatprep.subr.bf16.mxu0 %v1711
    %2503 = vmatpush2.bf16.msra.mxu0 %v1710
    %2504 = vmatprep.subr.bf16.mxu0 %v1704
    %2505 = vmatpush2.bf16.msra.mxu0 %v1703
    %2506 = vmatprep.subr.bf16.mxu0 %v1697
    %2507 = vmatpush2.bf16.msra.mxu0 %v1696
    %2508 = vmatprep.subr.bf16.mxu0 %v1690
    %2509 = vmatpush2.bf16.msra.mxu0 %v1689
    %2510 = vmatprep.subr.bf16.mxu0 %v1683
    %2511 = vmatpush2.bf16.msra.mxu0 %v1682
    %2512 = vmatprep.subr.bf16.mxu0 %v1676
    %2513 = vmatpush2.bf16.msra.mxu0 %v1675
    %2514 = vmatprep.subr.bf16.mxu0 %v1669
    %2515 = vmatpush2.bf16.msra.mxu0 %v1668
    %2516 = vmatprep.subr.bf16.mxu0 %v1662
    %2517 = vmatpush2.bf16.msra.mxu0 %v1661
    %2518 = vmatprep.mubr.bf16.mxu0 %v1003
    %2519 = vmatmul.mubr.bf16.gmra.mxu0 %v1002
    %v2520 = vpop.f32.mrf.mxu0
    %v2521 = vadd.f32 %v2480, %v2520
    %v2522 = vpop.f32.mrf.mxu0
    %v2523 = vadd.f32 %v2482, %v2522
    %v2524 = vpop.f32.mrf.mxu0
    %v2525 = vpop.f32.mrf.mxu0
    %2526 = vdwg.mxu0
    %2527 = vmatprep.subr.bf16.mxu0 %v1767
    %2528 = vmatpush1.bf16.msra.mxu0 %v1766
    %2529 = vmatprep.subr.bf16.mxu0 %v1760
    %2530 = vmatpush1.bf16.msra.mxu0 %v1759
    %2531 = vmatprep.subr.bf16.mxu0 %v1753
    %2532 = vmatpush1.bf16.msra.mxu0 %v1752
    %2533 = vmatprep.subr.bf16.mxu0 %v1746
    %2534 = vmatpush1.bf16.msra.mxu0 %v1745
    %2535 = vmatprep.subr.bf16.mxu0 %v1739
    %2536 = vmatpush1.bf16.msra.mxu0 %v1738
    %2537 = vmatprep.subr.bf16.mxu0 %v1732
    %2538 = vmatpush1.bf16.msra.mxu0 %v1731
    %2539 = vmatprep.subr.bf16.mxu0 %v1725
    %2540 = vmatpush1.bf16.msra.mxu0 %v1724
    %2541 = vmatprep.subr.bf16.mxu0 %v1718
    %2542 = vmatpush1.bf16.msra.mxu0 %v1717
    %2543 = vmatprep.subr.bf16.mxu0 %v1823
    %2544 = vmatpush2.bf16.msra.mxu0 %v1822
    %2545 = vmatprep.subr.bf16.mxu0 %v1816
    %2546 = vmatpush2.bf16.msra.mxu0 %v1815
    %2547 = vmatprep.subr.bf16.mxu0 %v1809
    %2548 = vmatpush2.bf16.msra.mxu0 %v1808
    %2549 = vmatprep.subr.bf16.mxu0 %v1802
    %2550 = vmatpush2.bf16.msra.mxu0 %v1801
    %2551 = vmatprep.subr.bf16.mxu0 %v1795
    %2552 = vmatpush2.bf16.msra.mxu0 %v1794
    %2553 = vmatprep.subr.bf16.mxu0 %v1788
    %2554 = vmatpush2.bf16.msra.mxu0 %v1787
    %2555 = vmatprep.subr.bf16.mxu0 %v1781
    %2556 = vmatpush2.bf16.msra.mxu0 %v1780
    %2557 = vmatprep.subr.bf16.mxu0 %v1774
    %2558 = vmatpush2.bf16.msra.mxu0 %v1773
    %2559 = vmatprep.mubr.bf16.mxu0 %v1005
    %2560 = vmatmul.mubr.bf16.gmra.mxu0 %v1004
    %v2561 = vpop.f32.mrf.mxu0
    %v2562 = vadd.f32 %v2521, %v2561
    %v2563 = vpop.f32.mrf.mxu0
    %v2564 = vadd.f32 %v2523, %v2563
    %v2565 = vpop.f32.mrf.mxu0
    %v2566 = vpop.f32.mrf.mxu0
    %2567 = vdwg.mxu0
    %2568 = vmatprep.subr.bf16.mxu0 %v1879
    %2569 = vmatpush1.bf16.msra.mxu0 %v1878
    %2570 = vmatprep.subr.bf16.mxu0 %v1872
    %2571 = vmatpush1.bf16.msra.mxu0 %v1871
    %2572 = vmatprep.subr.bf16.mxu0 %v1865
    %2573 = vmatpush1.bf16.msra.mxu0 %v1864
    %2574 = vmatprep.subr.bf16.mxu0 %v1858
    %2575 = vmatpush1.bf16.msra.mxu0 %v1857
    %2576 = vmatprep.subr.bf16.mxu0 %v1851
    %2577 = vmatpush1.bf16.msra.mxu0 %v1850
    %2578 = vmatprep.subr.bf16.mxu0 %v1844
    %2579 = vmatpush1.bf16.msra.mxu0 %v1843
    %2580 = vmatprep.subr.bf16.mxu0 %v1837
    %2581 = vmatpush1.bf16.msra.mxu0 %v1836
    %2582 = vmatprep.subr.bf16.mxu0 %v1830
    %2583 = vmatpush1.bf16.msra.mxu0 %v1829
    %2584 = vmatprep.subr.bf16.mxu0 %v1935
    %2585 = vmatpush2.bf16.msra.mxu0 %v1934
    %2586 = vmatprep.subr.bf16.mxu0 %v1928
    %2587 = vmatpush2.bf16.msra.mxu0 %v1927
    %2588 = vmatprep.subr.bf16.mxu0 %v1921
    %2589 = vmatpush2.bf16.msra.mxu0 %v1920
    %2590 = vmatprep.subr.bf16.mxu0 %v1914
    %2591 = vmatpush2.bf16.msra.mxu0 %v1913
    %2592 = vmatprep.subr.bf16.mxu0 %v1907
    %2593 = vmatpush2.bf16.msra.mxu0 %v1906
    %2594 = vmatprep.subr.bf16.mxu0 %v1900
    %2595 = vmatpush2.bf16.msra.mxu0 %v1899
    %2596 = vmatprep.subr.bf16.mxu0 %v1893
    %2597 = vmatpush2.bf16.msra.mxu0 %v1892
    %2598 = vmatprep.subr.bf16.mxu0 %v1886
    %2599 = vmatpush2.bf16.msra.mxu0 %v1885
    %2600 = vmatprep.mubr.bf16.mxu0 %v1007
    %2601 = vmatmul.mubr.bf16.gmra.mxu0 %v1006
    %v2602 = vpop.f32.mrf.mxu0
    %v2603 = vadd.f32 %v2562, %v2602
    %v2604 = vpop.f32.mrf.mxu0
    %v2605 = vadd.f32 %v2564, %v2604
    %v2606 = vpop.f32.mrf.mxu0
    %v2607 = vpop.f32.mrf.mxu0
    %2608 = vdwg.mxu0
    %2609 = vmatprep.subr.bf16.mxu0 %v1991
    %2610 = vmatpush1.bf16.msra.mxu0 %v1990
    %2611 = vmatprep.subr.bf16.mxu0 %v1984
    %2612 = vmatpush1.bf16.msra.mxu0 %v1983
    %2613 = vmatprep.subr.bf16.mxu0 %v1977
    %2614 = vmatpush1.bf16.msra.mxu0 %v1976
    %2615 = vmatprep.subr.bf16.mxu0 %v1970
    %2616 = vmatpush1.bf16.msra.mxu0 %v1969
    %2617 = vmatprep.subr.bf16.mxu0 %v1963
    %2618 = vmatpush1.bf16.msra.mxu0 %v1962
    %2619 = vmatprep.subr.bf16.mxu0 %v1956
    %2620 = vmatpush1.bf16.msra.mxu0 %v1955
    %2621 = vmatprep.subr.bf16.mxu0 %v1949
    %2622 = vmatpush1.bf16.msra.mxu0 %v1948
    %2623 = vmatprep.subr.bf16.mxu0 %v1942
    %2624 = vmatpush1.bf16.msra.mxu0 %v1941
    %2625 = vmatprep.subr.bf16.mxu0 %v2047
    %2626 = vmatpush2.bf16.msra.mxu0 %v2046
    %2627 = vmatprep.subr.bf16.mxu0 %v2040
    %2628 = vmatpush2.bf16.msra.mxu0 %v2039
    %2629 = vmatprep.subr.bf16.mxu0 %v2033
    %2630 = vmatpush2.bf16.msra.mxu0 %v2032
    %2631 = vmatprep.subr.bf16.mxu0 %v2026
    %2632 = vmatpush2.bf16.msra.mxu0 %v2025
    %2633 = vmatprep.subr.bf16.mxu0 %v2019
    %2634 = vmatpush2.bf16.msra.mxu0 %v2018
    %2635 = vmatprep.subr.bf16.mxu0 %v2012
    %2636 = vmatpush2.bf16.msra.mxu0 %v2011
    %2637 = vmatprep.subr.bf16.mxu0 %v2005
    %2638 = vmatpush2.bf16.msra.mxu0 %v2004
    %2639 = vmatprep.subr.bf16.mxu0 %v1998
    %2640 = vmatpush2.bf16.msra.mxu0 %v1997
    %2641 = vmatprep.mubr.bf16.mxu0 %v1009
    %2642 = vmatmul.mubr.bf16.gmra.mxu0 %v1008
    %v2643 = vpop.f32.mrf.mxu0
    %v2644 = vadd.f32 %v2603, %v2643
    %v2645 = vpop.f32.mrf.mxu0
    %v2646 = vadd.f32 %v2605, %v2645
    %v2647 = vpop.f32.mrf.mxu0
    %v2648 = vpop.f32.mrf.mxu0
    %2649 = vdwg.mxu0
    %2650 = vmatprep.subr.bf16.mxu0 %v2103
    %2651 = vmatpush1.bf16.msra.mxu0 %v2102
    %2652 = vmatprep.subr.bf16.mxu0 %v2096
    %2653 = vmatpush1.bf16.msra.mxu0 %v2095
    %2654 = vmatprep.subr.bf16.mxu0 %v2089
    %2655 = vmatpush1.bf16.msra.mxu0 %v2088
    %2656 = vmatprep.subr.bf16.mxu0 %v2082
    %2657 = vmatpush1.bf16.msra.mxu0 %v2081
    %2658 = vmatprep.subr.bf16.mxu0 %v2075
    %2659 = vmatpush1.bf16.msra.mxu0 %v2074
    %2660 = vmatprep.subr.bf16.mxu0 %v2068
    %2661 = vmatpush1.bf16.msra.mxu0 %v2067
    %2662 = vmatprep.subr.bf16.mxu0 %v2061
    %2663 = vmatpush1.bf16.msra.mxu0 %v2060
    %2664 = vmatprep.subr.bf16.mxu0 %v2054
    %2665 = vmatpush1.bf16.msra.mxu0 %v2053
    %2666 = vmatprep.subr.bf16.mxu0 %v2159
    %2667 = vmatpush2.bf16.msra.mxu0 %v2158
    %2668 = vmatprep.subr.bf16.mxu0 %v2152
    %2669 = vmatpush2.bf16.msra.mxu0 %v2151
    %2670 = vmatprep.subr.bf16.mxu0 %v2145
    %2671 = vmatpush2.bf16.msra.mxu0 %v2144
    %2672 = vmatprep.subr.bf16.mxu0 %v2138
    %2673 = vmatpush2.bf16.msra.mxu0 %v2137
    %2674 = vmatprep.subr.bf16.mxu0 %v2131
    %2675 = vmatpush2.bf16.msra.mxu0 %v2130
    %2676 = vmatprep.subr.bf16.mxu0 %v2124
    %2677 = vmatpush2.bf16.msra.mxu0 %v2123
    %2678 = vmatprep.subr.bf16.mxu0 %v2117
    %2679 = vmatpush2.bf16.msra.mxu0 %v2116
    %2680 = vmatprep.subr.bf16.mxu0 %v2110
    %2681 = vmatpush2.bf16.msra.mxu0 %v2109
    %2682 = vmatprep.mubr.bf16.mxu0 %v1011
    %2683 = vmatmul.mubr.bf16.gmra.mxu0 %v1010
    %v2684 = vpop.f32.mrf.mxu0
    %v2685 = vadd.f32 %v2644, %v2684
    %v2686 = vpop.f32.mrf.mxu0
    %v2687 = vadd.f32 %v2646, %v2686
    %v2688 = vpop.f32.mrf.mxu0
    %v2689 = vpop.f32.mrf.mxu0
    %2690 = vdwg.mxu0
    %2691 = vmatprep.subr.bf16.mxu0 %v2215
    %2692 = vmatpush1.bf16.msra.mxu0 %v2214
    %2693 = vmatprep.subr.bf16.mxu0 %v2208
    %2694 = vmatpush1.bf16.msra.mxu0 %v2207
    %2695 = vmatprep.subr.bf16.mxu0 %v2201
    %2696 = vmatpush1.bf16.msra.mxu0 %v2200
    %2697 = vmatprep.subr.bf16.mxu0 %v2194
    %2698 = vmatpush1.bf16.msra.mxu0 %v2193
    %2699 = vmatprep.subr.bf16.mxu0 %v2187
    %2700 = vmatpush1.bf16.msra.mxu0 %v2186
    %2701 = vmatprep.subr.bf16.mxu0 %v2180
    %2702 = vmatpush1.bf16.msra.mxu0 %v2179
    %2703 = vmatprep.subr.bf16.mxu0 %v2173
    %2704 = vmatpush1.bf16.msra.mxu0 %v2172
    %2705 = vmatprep.subr.bf16.mxu0 %v2166
    %2706 = vmatpush1.bf16.msra.mxu0 %v2165
    %2707 = vmatprep.subr.bf16.mxu0 %v2271
    %2708 = vmatpush2.bf16.msra.mxu0 %v2270
    %2709 = vmatprep.subr.bf16.mxu0 %v2264
    %2710 = vmatpush2.bf16.msra.mxu0 %v2263
    %2711 = vmatprep.subr.bf16.mxu0 %v2257
    %2712 = vmatpush2.bf16.msra.mxu0 %v2256
    %2713 = vmatprep.subr.bf16.mxu0 %v2250
    %2714 = vmatpush2.bf16.msra.mxu0 %v2249
    %2715 = vmatprep.subr.bf16.mxu0 %v2243
    %2716 = vmatpush2.bf16.msra.mxu0 %v2242
    %2717 = vmatprep.subr.bf16.mxu0 %v2236
    %2718 = vmatpush2.bf16.msra.mxu0 %v2235
    %2719 = vmatprep.subr.bf16.mxu0 %v2229
    %2720 = vmatpush2.bf16.msra.mxu0 %v2228
    %2721 = vmatprep.subr.bf16.mxu0 %v2222
    %2722 = vmatpush2.bf16.msra.mxu0 %v2221
    %2723 = vmatprep.mubr.bf16.mxu0 %v1013
    %2724 = vmatmul.mubr.bf16.gmra.mxu0 %v1012
    %v2725 = vpop.f32.mrf.mxu0
    %v2726 = vadd.f32 %v2685, %v2725
    %v2727 = vpop.f32.mrf.mxu0
    %v2728 = vadd.f32 %v2687, %v2727
    %v2729 = vpop.f32.mrf.mxu0
    %v2730 = vpop.f32.mrf.mxu0
    %2731 = vdwg.mxu0
    %2732 = vmatprep.subr.bf16.mxu0 %v2327
    %2733 = vmatpush1.bf16.msra.mxu0 %v2326
    %2734 = vmatprep.subr.bf16.mxu0 %v2320
    %2735 = vmatpush1.bf16.msra.mxu0 %v2319
    %2736 = vmatprep.subr.bf16.mxu0 %v2313
    %2737 = vmatpush1.bf16.msra.mxu0 %v2312
    %2738 = vmatprep.subr.bf16.mxu0 %v2306
    %2739 = vmatpush1.bf16.msra.mxu0 %v2305
    %2740 = vmatprep.subr.bf16.mxu0 %v2299
    %2741 = vmatpush1.bf16.msra.mxu0 %v2298
    %2742 = vmatprep.subr.bf16.mxu0 %v2292
    %2743 = vmatpush1.bf16.msra.mxu0 %v2291
    %2744 = vmatprep.subr.bf16.mxu0 %v2285
    %2745 = vmatpush1.bf16.msra.mxu0 %v2284
    %2746 = vmatprep.subr.bf16.mxu0 %v2278
    %2747 = vmatpush1.bf16.msra.mxu0 %v2277
    %2748 = vmatprep.subr.bf16.mxu0 %v2383
    %2749 = vmatpush2.bf16.msra.mxu0 %v2382
    %2750 = vmatprep.subr.bf16.mxu0 %v2376
    %2751 = vmatpush2.bf16.msra.mxu0 %v2375
    %2752 = vmatprep.subr.bf16.mxu0 %v2369
    %2753 = vmatpush2.bf16.msra.mxu0 %v2368
    %2754 = vmatprep.subr.bf16.mxu0 %v2362
    %2755 = vmatpush2.bf16.msra.mxu0 %v2361
    %2756 = vmatprep.subr.bf16.mxu0 %v2355
    %2757 = vmatpush2.bf16.msra.mxu0 %v2354
    %2758 = vmatprep.subr.bf16.mxu0 %v2348
    %2759 = vmatpush2.bf16.msra.mxu0 %v2347
    %2760 = vmatprep.subr.bf16.mxu0 %v2341
    %2761 = vmatpush2.bf16.msra.mxu0 %v2340
    %2762 = vmatprep.subr.bf16.mxu0 %v2334
    %2763 = vmatpush2.bf16.msra.mxu0 %v2333
    %2764 = vmatprep.mubr.bf16.mxu0 %v1015
    %2765 = vmatmul.mubr.bf16.gmra.mxu0 %v1014
    %v2766 = vpop.f32.mrf.mxu0
    %v2767 = vadd.f32 %v2726, %v2766
    %v2768 = vpop.f32.mrf.mxu0
    %v2769 = vadd.f32 %v2728, %v2768
    %v2770 = vpop.f32.mrf.mxu0
    %v2771 = vpop.f32.mrf.mxu0
    %2772 = vdwg.mxu0
    %2773 = vmatprep.subr.bf16.mxu0 %v2439
    %2774 = vmatpush1.bf16.msra.mxu0 %v2438
    %2775 = vmatprep.subr.bf16.mxu0 %v2432
    %2776 = vmatpush1.bf16.msra.mxu0 %v2431
    %2777 = vmatprep.subr.bf16.mxu0 %v2425
    %2778 = vmatpush1.bf16.msra.mxu0 %v2424
    %2779 = vmatprep.subr.bf16.mxu0 %v2418
    %2780 = vmatpush1.bf16.msra.mxu0 %v2417
    %2781 = vmatprep.subr.bf16.mxu0 %v2411
    %2782 = vmatpush1.bf16.msra.mxu0 %v2410
    %2783 = vmatprep.subr.bf16.mxu0 %v2404
    %2784 = vmatpush1.bf16.msra.mxu0 %v2403
    %2785 = vmatprep.subr.bf16.mxu0 %v2397
    %2786 = vmatpush1.bf16.msra.mxu0 %v2396
    %2787 = vmatprep.subr.bf16.mxu0 %v2390
    %2788 = vmatpush1.bf16.msra.mxu0 %v2389
    %2789 = vmatprep.subr.bf16.mxu0 0
    %2790 = vmatpush2.bf16.msra.mxu0 0
    %2791 = vmatprep.subr.bf16.mxu0 0
    %2792 = vmatpush2.bf16.msra.mxu0 0
    %2793 = vmatprep.subr.bf16.mxu0 0
    %2794 = vmatpush2.bf16.msra.mxu0 0
    %2795 = vmatprep.subr.bf16.mxu0 0
    %2796 = vmatpush2.bf16.msra.mxu0 0
    %2797 = vmatprep.subr.bf16.mxu0 0
    %2798 = vmatpush2.bf16.msra.mxu0 0
    %2799 = vmatprep.subr.bf16.mxu0 0
    %2800 = vmatpush2.bf16.msra.mxu0 0
    %2801 = vmatprep.subr.bf16.mxu0 0
    %2802 = vmatpush2.bf16.msra.mxu0 0
    %2803 = vmatprep.subr.bf16.mxu0 0
    %2804 = vmatpush2.bf16.msra.mxu0 0
    %2805 = vmatprep.mubr.bf16.mxu0 0
    %2806 = vmatmul.mubr.bf16.gmra.mxu0 %v1016
    %v2807 = vpop.f32.mrf.mxu0
    %v2808 = vadd.f32 %v2767, %v2807
    %v2809 = vpop.f32.mrf.mxu0
    %v2810 = vadd.f32 %v2769, %v2809
    %v2811 = vpop.f32.mrf.mxu0
    %v2812 = vpop.f32.mrf.mxu0
    %2813 = vdwg.mxu0
    %2814 = vmatprep.subr.bf16.mxu0 %v1545
    %2815 = vmatpush1.bf16.msra.mxu0 %v1544
    %2816 = vmatprep.subr.bf16.mxu0 %v1538
    %2817 = vmatpush1.bf16.msra.mxu0 %v1537
    %2818 = vmatprep.subr.bf16.mxu0 %v1531
    %2819 = vmatpush1.bf16.msra.mxu0 %v1530
    %2820 = vmatprep.subr.bf16.mxu0 %v1524
    %2821 = vmatpush1.bf16.msra.mxu0 %v1523
    %2822 = vmatprep.subr.bf16.mxu0 %v1517
    %2823 = vmatpush1.bf16.msra.mxu0 %v1516
    %2824 = vmatprep.subr.bf16.mxu0 %v1510
    %2825 = vmatpush1.bf16.msra.mxu0 %v1509
    %2826 = vmatprep.subr.bf16.mxu0 %v1503
    %2827 = vmatpush1.bf16.msra.mxu0 %v1502
    %2828 = vmatprep.subr.bf16.mxu0 %v1496
    %2829 = vmatpush1.bf16.msra.mxu0 %v1495
    %2830 = vmatprep.subr.bf16.mxu0 %v1601
    %2831 = vmatpush2.bf16.msra.mxu0 %v1600
    %2832 = vmatprep.subr.bf16.mxu0 %v1594
    %2833 = vmatpush2.bf16.msra.mxu0 %v1593
    %2834 = vmatprep.subr.bf16.mxu0 %v1587
    %2835 = vmatpush2.bf16.msra.mxu0 %v1586
    %2836 = vmatprep.subr.bf16.mxu0 %v1580
    %2837 = vmatpush2.bf16.msra.mxu0 %v1579
    %2838 = vmatprep.subr.bf16.mxu0 %v1573
    %2839 = vmatpush2.bf16.msra.mxu0 %v1572
    %2840 = vmatprep.subr.bf16.mxu0 %v1566
    %2841 = vmatpush2.bf16.msra.mxu0 %v1565
    %2842 = vmatprep.subr.bf16.mxu0 %v1559
    %2843 = vmatpush2.bf16.msra.mxu0 %v1558
    %2844 = vmatprep.subr.bf16.mxu0 %v1552
    %2845 = vmatpush2.bf16.msra.mxu0 %v1551
    %2846 = vmatprep.mubr.bf16.mxu0 %v1001
    %2847 = vmatmul.mubr.bf16.gmra.mxu0 %v1000
    %v2848 = vpop.f32.mrf.mxu0
    %v2849 = vadd.f32 0.0, %v2848
    %v2850 = vpop.f32.mrf.mxu0
    %v2851 = vadd.f32 0.0, %v2850
    %v2852 = vpop.f32.mrf.mxu0
    %v2853 = vpop.f32.mrf.mxu0
    %2854 = vdwg.mxu0
    %2855 = vmatprep.subr.bf16.mxu0 %v1657
    %2856 = vmatpush1.bf16.msra.mxu0 %v1656
    %2857 = vmatprep.subr.bf16.mxu0 %v1650
    %2858 = vmatpush1.bf16.msra.mxu0 %v1649
    %2859 = vmatprep.subr.bf16.mxu0 %v1643
    %2860 = vmatpush1.bf16.msra.mxu0 %v1642
    %2861 = vmatprep.subr.bf16.mxu0 %v1636
    %2862 = vmatpush1.bf16.msra.mxu0 %v1635
    %2863 = vmatprep.subr.bf16.mxu0 %v1629
    %2864 = vmatpush1.bf16.msra.mxu0 %v1628
    %2865 = vmatprep.subr.bf16.mxu0 %v1622
    %2866 = vmatpush1.bf16.msra.mxu0 %v1621
    %2867 = vmatprep.subr.bf16.mxu0 %v1615
    %2868 = vmatpush1.bf16.msra.mxu0 %v1614
    %2869 = vmatprep.subr.bf16.mxu0 %v1608
    %2870 = vmatpush1.bf16.msra.mxu0 %v1607
    %2871 = vmatprep.subr.bf16.mxu0 %v1713
    %2872 = vmatpush2.bf16.msra.mxu0 %v1712
    %2873 = vmatprep.subr.bf16.mxu0 %v1706
    %2874 = vmatpush2.bf16.msra.mxu0 %v1705
    %2875 = vmatprep.subr.bf16.mxu0 %v1699
    %2876 = vmatpush2.bf16.msra.mxu0 %v1698
    %2877 = vmatprep.subr.bf16.mxu0 %v1692
    %2878 = vmatpush2.bf16.msra.mxu0 %v1691
    %2879 = vmatprep.subr.bf16.mxu0 %v1685
    %2880 = vmatpush2.bf16.msra.mxu0 %v1684
    %2881 = vmatprep.subr.bf16.mxu0 %v1678
    %2882 = vmatpush2.bf16.msra.mxu0 %v1677
    %2883 = vmatprep.subr.bf16.mxu0 %v1671
    %2884 = vmatpush2.bf16.msra.mxu0 %v1670
    %2885 = vmatprep.subr.bf16.mxu0 %v1664
    %2886 = vmatpush2.bf16.msra.mxu0 %v1663
    %2887 = vmatprep.mubr.bf16.mxu0 %v1003
    %2888 = vmatmul.mubr.bf16.gmra.mxu0 %v1002
    %v2889 = vpop.f32.mrf.mxu0
    %v2890 = vadd.f32 %v2849, %v2889
    %v2891 = vpop.f32.mrf.mxu0
    %v2892 = vadd.f32 %v2851, %v2891
    %v2893 = vpop.f32.mrf.mxu0
    %v2894 = vpop.f32.mrf.mxu0
    %2895 = vdwg.mxu0
    %2896 = vmatprep.subr.bf16.mxu0 %v1769
    %2897 = vmatpush1.bf16.msra.mxu0 %v1768
    %2898 = vmatprep.subr.bf16.mxu0 %v1762
    %2899 = vmatpush1.bf16.msra.mxu0 %v1761
    %2900 = vmatprep.subr.bf16.mxu0 %v1755
    %2901 = vmatpush1.bf16.msra.mxu0 %v1754
    %2902 = vmatprep.subr.bf16.mxu0 %v1748
    %2903 = vmatpush1.bf16.msra.mxu0 %v1747
    %2904 = vmatprep.subr.bf16.mxu0 %v1741
    %2905 = vmatpush1.bf16.msra.mxu0 %v1740
    %2906 = vmatprep.subr.bf16.mxu0 %v1734
    %2907 = vmatpush1.bf16.msra.mxu0 %v1733
    %2908 = vmatprep.subr.bf16.mxu0 %v1727
    %2909 = vmatpush1.bf16.msra.mxu0 %v1726
    %2910 = vmatprep.subr.bf16.mxu0 %v1720
    %2911 = vmatpush1.bf16.msra.mxu0 %v1719
    %2912 = vmatprep.subr.bf16.mxu0 %v1825
    %2913 = vmatpush2.bf16.msra.mxu0 %v1824
    %2914 = vmatprep.subr.bf16.mxu0 %v1818
    %2915 = vmatpush2.bf16.msra.mxu0 %v1817
    %2916 = vmatprep.subr.bf16.mxu0 %v1811
    %2917 = vmatpush2.bf16.msra.mxu0 %v1810
    %2918 = vmatprep.subr.bf16.mxu0 %v1804
    %2919 = vmatpush2.bf16.msra.mxu0 %v1803
    %2920 = vmatprep.subr.bf16.mxu0 %v1797
    %2921 = vmatpush2.bf16.msra.mxu0 %v1796
    %2922 = vmatprep.subr.bf16.mxu0 %v1790
    %2923 = vmatpush2.bf16.msra.mxu0 %v1789
    %2924 = vmatprep.subr.bf16.mxu0 %v1783
    %2925 = vmatpush2.bf16.msra.mxu0 %v1782
    %2926 = vmatprep.subr.bf16.mxu0 %v1776
    %2927 = vmatpush2.bf16.msra.mxu0 %v1775
    %2928 = vmatprep.mubr.bf16.mxu0 %v1005
    %2929 = vmatmul.mubr.bf16.gmra.mxu0 %v1004
    %v2930 = vpop.f32.mrf.mxu0
    %v2931 = vadd.f32 %v2890, %v2930
    %v2932 = vpop.f32.mrf.mxu0
    %v2933 = vadd.f32 %v2892, %v2932
    %v2934 = vpop.f32.mrf.mxu0
    %v2935 = vpop.f32.mrf.mxu0
    %2936 = vdwg.mxu0
    %2937 = vmatprep.subr.bf16.mxu0 %v1881
    %2938 = vmatpush1.bf16.msra.mxu0 %v1880
    %2939 = vmatprep.subr.bf16.mxu0 %v1874
    %2940 = vmatpush1.bf16.msra.mxu0 %v1873
    %2941 = vmatprep.subr.bf16.mxu0 %v1867
    %2942 = vmatpush1.bf16.msra.mxu0 %v1866
    %2943 = vmatprep.subr.bf16.mxu0 %v1860
    %2944 = vmatpush1.bf16.msra.mxu0 %v1859
    %2945 = vmatprep.subr.bf16.mxu0 %v1853
    %2946 = vmatpush1.bf16.msra.mxu0 %v1852
    %2947 = vmatprep.subr.bf16.mxu0 %v1846
    %2948 = vmatpush1.bf16.msra.mxu0 %v1845
    %2949 = vmatprep.subr.bf16.mxu0 %v1839
    %2950 = vmatpush1.bf16.msra.mxu0 %v1838
    %2951 = vmatprep.subr.bf16.mxu0 %v1832
    %2952 = vmatpush1.bf16.msra.mxu0 %v1831
    %2953 = vmatprep.subr.bf16.mxu0 %v1937
    %2954 = vmatpush2.bf16.msra.mxu0 %v1936
    %2955 = vmatprep.subr.bf16.mxu0 %v1930
    %2956 = vmatpush2.bf16.msra.mxu0 %v1929
    %2957 = vmatprep.subr.bf16.mxu0 %v1923
    %2958 = vmatpush2.bf16.msra.mxu0 %v1922
    %2959 = vmatprep.subr.bf16.mxu0 %v1916
    %2960 = vmatpush2.bf16.msra.mxu0 %v1915
    %2961 = vmatprep.subr.bf16.mxu0 %v1909
    %2962 = vmatpush2.bf16.msra.mxu0 %v1908
    %2963 = vmatprep.subr.bf16.mxu0 %v1902
    %2964 = vmatpush2.bf16.msra.mxu0 %v1901
    %2965 = vmatprep.subr.bf16.mxu0 %v1895
    %2966 = vmatpush2.bf16.msra.mxu0 %v1894
    %2967 = vmatprep.subr.bf16.mxu0 %v1888
    %2968 = vmatpush2.bf16.msra.mxu0 %v1887
    %2969 = vmatprep.mubr.bf16.mxu0 %v1007
    %2970 = vmatmul.mubr.bf16.gmra.mxu0 %v1006
    %v2971 = vpop.f32.mrf.mxu0
    %v2972 = vadd.f32 %v2931, %v2971
    %v2973 = vpop.f32.mrf.mxu0
    %v2974 = vadd.f32 %v2933, %v2973
    %v2975 = vpop.f32.mrf.mxu0
    %v2976 = vpop.f32.mrf.mxu0
    %2977 = vdwg.mxu0
    %2978 = vmatprep.subr.bf16.mxu0 %v1993
    %2979 = vmatpush1.bf16.msra.mxu0 %v1992
    %2980 = vmatprep.subr.bf16.mxu0 %v1986
    %2981 = vmatpush1.bf16.msra.mxu0 %v1985
    %2982 = vmatprep.subr.bf16.mxu0 %v1979
    %2983 = vmatpush1.bf16.msra.mxu0 %v1978
    %2984 = vmatprep.subr.bf16.mxu0 %v1972
    %2985 = vmatpush1.bf16.msra.mxu0 %v1971
    %2986 = vmatprep.subr.bf16.mxu0 %v1965
    %2987 = vmatpush1.bf16.msra.mxu0 %v1964
    %2988 = vmatprep.subr.bf16.mxu0 %v1958
    %2989 = vmatpush1.bf16.msra.mxu0 %v1957
    %2990 = vmatprep.subr.bf16.mxu0 %v1951
    %2991 = vmatpush1.bf16.msra.mxu0 %v1950
    %2992 = vmatprep.subr.bf16.mxu0 %v1944
    %2993 = vmatpush1.bf16.msra.mxu0 %v1943
    %2994 = vmatprep.subr.bf16.mxu0 %v2049
    %2995 = vmatpush2.bf16.msra.mxu0 %v2048
    %2996 = vmatprep.subr.bf16.mxu0 %v2042
    %2997 = vmatpush2.bf16.msra.mxu0 %v2041
    %2998 = vmatprep.subr.bf16.mxu0 %v2035
    %2999 = vmatpush2.bf16.msra.mxu0 %v2034
    %3000 = vmatprep.subr.bf16.mxu0 %v2028
    %3001 = vmatpush2.bf16.msra.mxu0 %v2027
    %3002 = vmatprep.subr.bf16.mxu0 %v2021
    %3003 = vmatpush2.bf16.msra.mxu0 %v2020
    %3004 = vmatprep.subr.bf16.mxu0 %v2014
    %3005 = vmatpush2.bf16.msra.mxu0 %v2013
    %3006 = vmatprep.subr.bf16.mxu0 %v2007
    %3007 = vmatpush2.bf16.msra.mxu0 %v2006
    %3008 = vmatprep.subr.bf16.mxu0 %v2000
    %3009 = vmatpush2.bf16.msra.mxu0 %v1999
    %3010 = vmatprep.mubr.bf16.mxu0 %v1009
    %3011 = vmatmul.mubr.bf16.gmra.mxu0 %v1008
    %v3012 = vpop.f32.mrf.mxu0
    %v3013 = vadd.f32 %v2972, %v3012
    %v3014 = vpop.f32.mrf.mxu0
    %v3015 = vadd.f32 %v2974, %v3014
    %v3016 = vpop.f32.mrf.mxu0
    %v3017 = vpop.f32.mrf.mxu0
    %3018 = vdwg.mxu0
    %3019 = vmatprep.subr.bf16.mxu0 %v2105
    %3020 = vmatpush1.bf16.msra.mxu0 %v2104
    %3021 = vmatprep.subr.bf16.mxu0 %v2098
    %3022 = vmatpush1.bf16.msra.mxu0 %v2097
    %3023 = vmatprep.subr.bf16.mxu0 %v2091
    %3024 = vmatpush1.bf16.msra.mxu0 %v2090
    %3025 = vmatprep.subr.bf16.mxu0 %v2084
    %3026 = vmatpush1.bf16.msra.mxu0 %v2083
    %3027 = vmatprep.subr.bf16.mxu0 %v2077
    %3028 = vmatpush1.bf16.msra.mxu0 %v2076
    %3029 = vmatprep.subr.bf16.mxu0 %v2070
    %3030 = vmatpush1.bf16.msra.mxu0 %v2069
    %3031 = vmatprep.subr.bf16.mxu0 %v2063
    %3032 = vmatpush1.bf16.msra.mxu0 %v2062
    %3033 = vmatprep.subr.bf16.mxu0 %v2056
    %3034 = vmatpush1.bf16.msra.mxu0 %v2055
    %3035 = vmatprep.subr.bf16.mxu0 %v2161
    %3036 = vmatpush2.bf16.msra.mxu0 %v2160
    %3037 = vmatprep.subr.bf16.mxu0 %v2154
    %3038 = vmatpush2.bf16.msra.mxu0 %v2153
    %3039 = vmatprep.subr.bf16.mxu0 %v2147
    %3040 = vmatpush2.bf16.msra.mxu0 %v2146
    %3041 = vmatprep.subr.bf16.mxu0 %v2140
    %3042 = vmatpush2.bf16.msra.mxu0 %v2139
    %3043 = vmatprep.subr.bf16.mxu0 %v2133
    %3044 = vmatpush2.bf16.msra.mxu0 %v2132
    %3045 = vmatprep.subr.bf16.mxu0 %v2126
    %3046 = vmatpush2.bf16.msra.mxu0 %v2125
    %3047 = vmatprep.subr.bf16.mxu0 %v2119
    %3048 = vmatpush2.bf16.msra.mxu0 %v2118
    %3049 = vmatprep.subr.bf16.mxu0 %v2112
    %3050 = vmatpush2.bf16.msra.mxu0 %v2111
    %3051 = vmatprep.mubr.bf16.mxu0 %v1011
    %3052 = vmatmul.mubr.bf16.gmra.mxu0 %v1010
    %v3053 = vpop.f32.mrf.mxu0
    %v3054 = vadd.f32 %v3013, %v3053
    %v3055 = vpop.f32.mrf.mxu0
    %v3056 = vadd.f32 %v3015, %v3055
    %v3057 = vpop.f32.mrf.mxu0
    %v3058 = vpop.f32.mrf.mxu0
    %3059 = vdwg.mxu0
    %3060 = vmatprep.subr.bf16.mxu0 %v2217
    %3061 = vmatpush1.bf16.msra.mxu0 %v2216
    %3062 = vmatprep.subr.bf16.mxu0 %v2210
    %3063 = vmatpush1.bf16.msra.mxu0 %v2209
    %3064 = vmatprep.subr.bf16.mxu0 %v2203
    %3065 = vmatpush1.bf16.msra.mxu0 %v2202
    %3066 = vmatprep.subr.bf16.mxu0 %v2196
    %3067 = vmatpush1.bf16.msra.mxu0 %v2195
    %3068 = vmatprep.subr.bf16.mxu0 %v2189
    %3069 = vmatpush1.bf16.msra.mxu0 %v2188
    %3070 = vmatprep.subr.bf16.mxu0 %v2182
    %3071 = vmatpush1.bf16.msra.mxu0 %v2181
    %3072 = vmatprep.subr.bf16.mxu0 %v2175
    %3073 = vmatpush1.bf16.msra.mxu0 %v2174
    %3074 = vmatprep.subr.bf16.mxu0 %v2168
    %3075 = vmatpush1.bf16.msra.mxu0 %v2167
    %3076 = vmatprep.subr.bf16.mxu0 %v2273
    %3077 = vmatpush2.bf16.msra.mxu0 %v2272
    %3078 = vmatprep.subr.bf16.mxu0 %v2266
    %3079 = vmatpush2.bf16.msra.mxu0 %v2265
    %3080 = vmatprep.subr.bf16.mxu0 %v2259
    %3081 = vmatpush2.bf16.msra.mxu0 %v2258
    %3082 = vmatprep.subr.bf16.mxu0 %v2252
    %3083 = vmatpush2.bf16.msra.mxu0 %v2251
    %3084 = vmatprep.subr.bf16.mxu0 %v2245
    %3085 = vmatpush2.bf16.msra.mxu0 %v2244
    %3086 = vmatprep.subr.bf16.mxu0 %v2238
    %3087 = vmatpush2.bf16.msra.mxu0 %v2237
    %3088 = vmatprep.subr.bf16.mxu0 %v2231
    %3089 = vmatpush2.bf16.msra.mxu0 %v2230
    %3090 = vmatprep.subr.bf16.mxu0 %v2224
    %3091 = vmatpush2.bf16.msra.mxu0 %v2223
    %3092 = vmatprep.mubr.bf16.mxu0 %v1013
    %3093 = vmatmul.mubr.bf16.gmra.mxu0 %v1012
    %v3094 = vpop.f32.mrf.mxu0
    %v3095 = vadd.f32 %v3054, %v3094
    %v3096 = vpop.f32.mrf.mxu0
    %v3097 = vadd.f32 %v3056, %v3096
    %v3098 = vpop.f32.mrf.mxu0
    %v3099 = vpop.f32.mrf.mxu0
    %3100 = vdwg.mxu0
    %3101 = vmatprep.subr.bf16.mxu0 %v2329
    %3102 = vmatpush1.bf16.msra.mxu0 %v2328
    %3103 = vmatprep.subr.bf16.mxu0 %v2322
    %3104 = vmatpush1.bf16.msra.mxu0 %v2321
    %3105 = vmatprep.subr.bf16.mxu0 %v2315
    %3106 = vmatpush1.bf16.msra.mxu0 %v2314
    %3107 = vmatprep.subr.bf16.mxu0 %v2308
    %3108 = vmatpush1.bf16.msra.mxu0 %v2307
    %3109 = vmatprep.subr.bf16.mxu0 %v2301
    %3110 = vmatpush1.bf16.msra.mxu0 %v2300
    %3111 = vmatprep.subr.bf16.mxu0 %v2294
    %3112 = vmatpush1.bf16.msra.mxu0 %v2293
    %3113 = vmatprep.subr.bf16.mxu0 %v2287
    %3114 = vmatpush1.bf16.msra.mxu0 %v2286
    %3115 = vmatprep.subr.bf16.mxu0 %v2280
    %3116 = vmatpush1.bf16.msra.mxu0 %v2279
    %3117 = vmatprep.subr.bf16.mxu0 %v2385
    %3118 = vmatpush2.bf16.msra.mxu0 %v2384
    %3119 = vmatprep.subr.bf16.mxu0 %v2378
    %3120 = vmatpush2.bf16.msra.mxu0 %v2377
    %3121 = vmatprep.subr.bf16.mxu0 %v2371
    %3122 = vmatpush2.bf16.msra.mxu0 %v2370
    %3123 = vmatprep.subr.bf16.mxu0 %v2364
    %3124 = vmatpush2.bf16.msra.mxu0 %v2363
    %3125 = vmatprep.subr.bf16.mxu0 %v2357
    %3126 = vmatpush2.bf16.msra.mxu0 %v2356
    %3127 = vmatprep.subr.bf16.mxu0 %v2350
    %3128 = vmatpush2.bf16.msra.mxu0 %v2349
    %3129 = vmatprep.subr.bf16.mxu0 %v2343
    %3130 = vmatpush2.bf16.msra.mxu0 %v2342
    %3131 = vmatprep.subr.bf16.mxu0 %v2336
    %3132 = vmatpush2.bf16.msra.mxu0 %v2335
    %3133 = vmatprep.mubr.bf16.mxu0 %v1015
    %3134 = vmatmul.mubr.bf16.gmra.mxu0 %v1014
    %v3135 = vpop.f32.mrf.mxu0
    %v3136 = vadd.f32 %v3095, %v3135
    %v3137 = vpop.f32.mrf.mxu0
    %v3138 = vadd.f32 %v3097, %v3137
    %v3139 = vpop.f32.mrf.mxu0
    %v3140 = vpop.f32.mrf.mxu0
    %3141 = vdwg.mxu0
    %3142 = vmatprep.subr.bf16.mxu0 %v2441
    %3143 = vmatpush1.bf16.msra.mxu0 %v2440
    %3144 = vmatprep.subr.bf16.mxu0 %v2434
    %3145 = vmatpush1.bf16.msra.mxu0 %v2433
    %3146 = vmatprep.subr.bf16.mxu0 %v2427
    %3147 = vmatpush1.bf16.msra.mxu0 %v2426
    %3148 = vmatprep.subr.bf16.mxu0 %v2420
    %3149 = vmatpush1.bf16.msra.mxu0 %v2419
    %3150 = vmatprep.subr.bf16.mxu0 %v2413
    %3151 = vmatpush1.bf16.msra.mxu0 %v2412
    %3152 = vmatprep.subr.bf16.mxu0 %v2406
    %3153 = vmatpush1.bf16.msra.mxu0 %v2405
    %3154 = vmatprep.subr.bf16.mxu0 %v2399
    %3155 = vmatpush1.bf16.msra.mxu0 %v2398
    %3156 = vmatprep.subr.bf16.mxu0 %v2392
    %3157 = vmatpush1.bf16.msra.mxu0 %v2391
    %3158 = vmatprep.subr.bf16.mxu0 0
    %3159 = vmatpush2.bf16.msra.mxu0 0
    %3160 = vmatprep.subr.bf16.mxu0 0
    %3161 = vmatpush2.bf16.msra.mxu0 0
    %3162 = vmatprep.subr.bf16.mxu0 0
    %3163 = vmatpush2.bf16.msra.mxu0 0
    %3164 = vmatprep.subr.bf16.mxu0 0
    %3165 = vmatpush2.bf16.msra.mxu0 0
    %3166 = vmatprep.subr.bf16.mxu0 0
    %3167 = vmatpush2.bf16.msra.mxu0 0
    %3168 = vmatprep.subr.bf16.mxu0 0
    %3169 = vmatpush2.bf16.msra.mxu0 0
    %3170 = vmatprep.subr.bf16.mxu0 0
    %3171 = vmatpush2.bf16.msra.mxu0 0
    %3172 = vmatprep.subr.bf16.mxu0 0
    %3173 = vmatpush2.bf16.msra.mxu0 0
    %3174 = vmatprep.mubr.bf16.mxu0 0
    %3175 = vmatmul.mubr.bf16.gmra.mxu0 %v1016
    %v3176 = vpop.f32.mrf.mxu0
    %v3177 = vadd.f32 %v3136, %v3176
    %v3178 = vpop.f32.mrf.mxu0
    %v3179 = vadd.f32 %v3138, %v3178
    %v3180 = vpop.f32.mrf.mxu0
    %v3181 = vpop.f32.mrf.mxu0
    %3182 = vdwg.mxu0
    %3183 = vmatprep.subr.bf16.mxu0 %v1547
    %3184 = vmatpush1.bf16.msra.mxu0 %v1546
    %3185 = vmatprep.subr.bf16.mxu0 %v1540
    %3186 = vmatpush1.bf16.msra.mxu0 %v1539
    %3187 = vmatprep.subr.bf16.mxu0 %v1533
    %3188 = vmatpush1.bf16.msra.mxu0 %v1532
    %3189 = vmatprep.subr.bf16.mxu0 %v1526
    %3190 = vmatpush1.bf16.msra.mxu0 %v1525
    %3191 = vmatprep.subr.bf16.mxu0 %v1519
    %3192 = vmatpush1.bf16.msra.mxu0 %v1518
    %3193 = vmatprep.subr.bf16.mxu0 %v1512
    %3194 = vmatpush1.bf16.msra.mxu0 %v1511
    %3195 = vmatprep.subr.bf16.mxu0 %v1505
    %3196 = vmatpush1.bf16.msra.mxu0 %v1504
    %3197 = vmatprep.subr.bf16.mxu0 %v1498
    %3198 = vmatpush1.bf16.msra.mxu0 %v1497
    %3199 = vmatprep.subr.bf16.mxu0 %v1603
    %3200 = vmatpush2.bf16.msra.mxu0 %v1602
    %3201 = vmatprep.subr.bf16.mxu0 %v1596
    %3202 = vmatpush2.bf16.msra.mxu0 %v1595
    %3203 = vmatprep.subr.bf16.mxu0 %v1589
    %3204 = vmatpush2.bf16.msra.mxu0 %v1588
    %3205 = vmatprep.subr.bf16.mxu0 %v1582
    %3206 = vmatpush2.bf16.msra.mxu0 %v1581
    %3207 = vmatprep.subr.bf16.mxu0 %v1575
    %3208 = vmatpush2.bf16.msra.mxu0 %v1574
    %3209 = vmatprep.subr.bf16.mxu0 %v1568
    %3210 = vmatpush2.bf16.msra.mxu0 %v1567
    %3211 = vmatprep.subr.bf16.mxu0 %v1561
    %3212 = vmatpush2.bf16.msra.mxu0 %v1560
    %3213 = vmatprep.subr.bf16.mxu0 %v1554
    %3214 = vmatpush2.bf16.msra.mxu0 %v1553
    %3215 = vmatprep.mubr.bf16.mxu0 %v1001
    %3216 = vmatmul.mubr.bf16.gmra.mxu0 %v1000
    %v3217 = vpop.f32.mrf.mxu0
    %v3218 = vadd.f32 0.0, %v3217
    %v3219 = vpop.f32.mrf.mxu0
    %v3220 = vadd.f32 0.0, %v3219
    %v3221 = vpop.f32.mrf.mxu0
    %v3222 = vpop.f32.mrf.mxu0
    %3223 = vdwg.mxu0
    %3224 = vmatprep.subr.bf16.mxu0 %v1659
    %3225 = vmatpush1.bf16.msra.mxu0 %v1658
    %3226 = vmatprep.subr.bf16.mxu0 %v1652
    %3227 = vmatpush1.bf16.msra.mxu0 %v1651
    %3228 = vmatprep.subr.bf16.mxu0 %v1645
    %3229 = vmatpush1.bf16.msra.mxu0 %v1644
    %3230 = vmatprep.subr.bf16.mxu0 %v1638
    %3231 = vmatpush1.bf16.msra.mxu0 %v1637
    %3232 = vmatprep.subr.bf16.mxu0 %v1631
    %3233 = vmatpush1.bf16.msra.mxu0 %v1630
    %3234 = vmatprep.subr.bf16.mxu0 %v1624
    %3235 = vmatpush1.bf16.msra.mxu0 %v1623
    %3236 = vmatprep.subr.bf16.mxu0 %v1617
    %3237 = vmatpush1.bf16.msra.mxu0 %v1616
    %3238 = vmatprep.subr.bf16.mxu0 %v1610
    %3239 = vmatpush1.bf16.msra.mxu0 %v1609
    %3240 = vmatprep.subr.bf16.mxu0 %v1715
    %3241 = vmatpush2.bf16.msra.mxu0 %v1714
    %3242 = vmatprep.subr.bf16.mxu0 %v1708
    %3243 = vmatpush2.bf16.msra.mxu0 %v1707
    %3244 = vmatprep.subr.bf16.mxu0 %v1701
    %3245 = vmatpush2.bf16.msra.mxu0 %v1700
    %3246 = vmatprep.subr.bf16.mxu0 %v1694
    %3247 = vmatpush2.bf16.msra.mxu0 %v1693
    %3248 = vmatprep.subr.bf16.mxu0 %v1687
    %3249 = vmatpush2.bf16.msra.mxu0 %v1686
    %3250 = vmatprep.subr.bf16.mxu0 %v1680
    %3251 = vmatpush2.bf16.msra.mxu0 %v1679
    %3252 = vmatprep.subr.bf16.mxu0 %v1673
    %3253 = vmatpush2.bf16.msra.mxu0 %v1672
    %3254 = vmatprep.subr.bf16.mxu0 %v1666
    %3255 = vmatpush2.bf16.msra.mxu0 %v1665
    %3256 = vmatprep.mubr.bf16.mxu0 %v1003
    %3257 = vmatmul.mubr.bf16.gmra.mxu0 %v1002
    %v3258 = vpop.f32.mrf.mxu0
    %v3259 = vadd.f32 %v3218, %v3258
    %v3260 = vpop.f32.mrf.mxu0
    %v3261 = vadd.f32 %v3220, %v3260
    %v3262 = vpop.f32.mrf.mxu0
    %v3263 = vpop.f32.mrf.mxu0
    %3264 = vdwg.mxu0
    %3265 = vmatprep.subr.bf16.mxu0 %v1771
    %3266 = vmatpush1.bf16.msra.mxu0 %v1770
    %3267 = vmatprep.subr.bf16.mxu0 %v1764
    %3268 = vmatpush1.bf16.msra.mxu0 %v1763
    %3269 = vmatprep.subr.bf16.mxu0 %v1757
    %3270 = vmatpush1.bf16.msra.mxu0 %v1756
    %3271 = vmatprep.subr.bf16.mxu0 %v1750
    %3272 = vmatpush1.bf16.msra.mxu0 %v1749
    %3273 = vmatprep.subr.bf16.mxu0 %v1743
    %3274 = vmatpush1.bf16.msra.mxu0 %v1742
    %3275 = vmatprep.subr.bf16.mxu0 %v1736
    %3276 = vmatpush1.bf16.msra.mxu0 %v1735
    %3277 = vmatprep.subr.bf16.mxu0 %v1729
    %3278 = vmatpush1.bf16.msra.mxu0 %v1728
    %3279 = vmatprep.subr.bf16.mxu0 %v1722
    %3280 = vmatpush1.bf16.msra.mxu0 %v1721
    %3281 = vmatprep.subr.bf16.mxu0 %v1827
    %3282 = vmatpush2.bf16.msra.mxu0 %v1826
    %3283 = vmatprep.subr.bf16.mxu0 %v1820
    %3284 = vmatpush2.bf16.msra.mxu0 %v1819
    %3285 = vmatprep.subr.bf16.mxu0 %v1813
    %3286 = vmatpush2.bf16.msra.mxu0 %v1812
    %3287 = vmatprep.subr.bf16.mxu0 %v1806
    %3288 = vmatpush2.bf16.msra.mxu0 %v1805
    %3289 = vmatprep.subr.bf16.mxu0 %v1799
    %3290 = vmatpush2.bf16.msra.mxu0 %v1798
    %3291 = vmatprep.subr.bf16.mxu0 %v1792
    %3292 = vmatpush2.bf16.msra.mxu0 %v1791
    %3293 = vmatprep.subr.bf16.mxu0 %v1785
    %3294 = vmatpush2.bf16.msra.mxu0 %v1784
    %3295 = vmatprep.subr.bf16.mxu0 %v1778
    %3296 = vmatpush2.bf16.msra.mxu0 %v1777
    %3297 = vmatprep.mubr.bf16.mxu0 %v1005
    %3298 = vmatmul.mubr.bf16.gmra.mxu0 %v1004
    %v3299 = vpop.f32.mrf.mxu0
    %v3300 = vadd.f32 %v3259, %v3299
    %v3301 = vpop.f32.mrf.mxu0
    %v3302 = vadd.f32 %v3261, %v3301
    %v3303 = vpop.f32.mrf.mxu0
    %v3304 = vpop.f32.mrf.mxu0
    %3305 = vdwg.mxu0
    %3306 = vmatprep.subr.bf16.mxu0 %v1883
    %3307 = vmatpush1.bf16.msra.mxu0 %v1882
    %3308 = vmatprep.subr.bf16.mxu0 %v1876
    %3309 = vmatpush1.bf16.msra.mxu0 %v1875
    %3310 = vmatprep.subr.bf16.mxu0 %v1869
    %3311 = vmatpush1.bf16.msra.mxu0 %v1868
    %3312 = vmatprep.subr.bf16.mxu0 %v1862
    %3313 = vmatpush1.bf16.msra.mxu0 %v1861
    %3314 = vmatprep.subr.bf16.mxu0 %v1855
    %3315 = vmatpush1.bf16.msra.mxu0 %v1854
    %3316 = vmatprep.subr.bf16.mxu0 %v1848
    %3317 = vmatpush1.bf16.msra.mxu0 %v1847
    %3318 = vmatprep.subr.bf16.mxu0 %v1841
    %3319 = vmatpush1.bf16.msra.mxu0 %v1840
    %3320 = vmatprep.subr.bf16.mxu0 %v1834
    %3321 = vmatpush1.bf16.msra.mxu0 %v1833
    %3322 = vmatprep.subr.bf16.mxu0 %v1939
    %3323 = vmatpush2.bf16.msra.mxu0 %v1938
    %3324 = vmatprep.subr.bf16.mxu0 %v1932
    %3325 = vmatpush2.bf16.msra.mxu0 %v1931
    %3326 = vmatprep.subr.bf16.mxu0 %v1925
    %3327 = vmatpush2.bf16.msra.mxu0 %v1924
    %3328 = vmatprep.subr.bf16.mxu0 %v1918
    %3329 = vmatpush2.bf16.msra.mxu0 %v1917
    %3330 = vmatprep.subr.bf16.mxu0 %v1911
    %3331 = vmatpush2.bf16.msra.mxu0 %v1910
    %3332 = vmatprep.subr.bf16.mxu0 %v1904
    %3333 = vmatpush2.bf16.msra.mxu0 %v1903
    %3334 = vmatprep.subr.bf16.mxu0 %v1897
    %3335 = vmatpush2.bf16.msra.mxu0 %v1896
    %3336 = vmatprep.subr.bf16.mxu0 %v1890
    %3337 = vmatpush2.bf16.msra.mxu0 %v1889
    %3338 = vmatprep.mubr.bf16.mxu0 %v1007
    %3339 = vmatmul.mubr.bf16.gmra.mxu0 %v1006
    %v3340 = vpop.f32.mrf.mxu0
    %v3341 = vadd.f32 %v3300, %v3340
    %v3342 = vpop.f32.mrf.mxu0
    %v3343 = vadd.f32 %v3302, %v3342
    %v3344 = vpop.f32.mrf.mxu0
    %v3345 = vpop.f32.mrf.mxu0
    %3346 = vdwg.mxu0
    %3347 = vmatprep.subr.bf16.mxu0 %v1995
    %3348 = vmatpush1.bf16.msra.mxu0 %v1994
    %3349 = vmatprep.subr.bf16.mxu0 %v1988
    %3350 = vmatpush1.bf16.msra.mxu0 %v1987
    %3351 = vmatprep.subr.bf16.mxu0 %v1981
    %3352 = vmatpush1.bf16.msra.mxu0 %v1980
    %3353 = vmatprep.subr.bf16.mxu0 %v1974
    %3354 = vmatpush1.bf16.msra.mxu0 %v1973
    %3355 = vmatprep.subr.bf16.mxu0 %v1967
    %3356 = vmatpush1.bf16.msra.mxu0 %v1966
    %3357 = vmatprep.subr.bf16.mxu0 %v1960
    %3358 = vmatpush1.bf16.msra.mxu0 %v1959
    %3359 = vmatprep.subr.bf16.mxu0 %v1953
    %3360 = vmatpush1.bf16.msra.mxu0 %v1952
    %3361 = vmatprep.subr.bf16.mxu0 %v1946
    %3362 = vmatpush1.bf16.msra.mxu0 %v1945
    %3363 = vmatprep.subr.bf16.mxu0 %v2051
    %3364 = vmatpush2.bf16.msra.mxu0 %v2050
    %3365 = vmatprep.subr.bf16.mxu0 %v2044
    %3366 = vmatpush2.bf16.msra.mxu0 %v2043
    %3367 = vmatprep.subr.bf16.mxu0 %v2037
    %3368 = vmatpush2.bf16.msra.mxu0 %v2036
    %3369 = vmatprep.subr.bf16.mxu0 %v2030
    %3370 = vmatpush2.bf16.msra.mxu0 %v2029
    %3371 = vmatprep.subr.bf16.mxu0 %v2023
    %3372 = vmatpush2.bf16.msra.mxu0 %v2022
    %3373 = vmatprep.subr.bf16.mxu0 %v2016
    %3374 = vmatpush2.bf16.msra.mxu0 %v2015
    %3375 = vmatprep.subr.bf16.mxu0 %v2009
    %3376 = vmatpush2.bf16.msra.mxu0 %v2008
    %3377 = vmatprep.subr.bf16.mxu0 %v2002
    %3378 = vmatpush2.bf16.msra.mxu0 %v2001
    %3379 = vmatprep.mubr.bf16.mxu0 %v1009
    %3380 = vmatmul.mubr.bf16.gmra.mxu0 %v1008
    %v3381 = vpop.f32.mrf.mxu0
    %v3382 = vadd.f32 %v3341, %v3381
    %v3383 = vpop.f32.mrf.mxu0
    %v3384 = vadd.f32 %v3343, %v3383
    %v3385 = vpop.f32.mrf.mxu0
    %v3386 = vpop.f32.mrf.mxu0
    %3387 = vdwg.mxu0
    %3388 = vmatprep.subr.bf16.mxu0 %v2107
    %3389 = vmatpush1.bf16.msra.mxu0 %v2106
    %3390 = vmatprep.subr.bf16.mxu0 %v2100
    %3391 = vmatpush1.bf16.msra.mxu0 %v2099
    %3392 = vmatprep.subr.bf16.mxu0 %v2093
    %3393 = vmatpush1.bf16.msra.mxu0 %v2092
    %3394 = vmatprep.subr.bf16.mxu0 %v2086
    %3395 = vmatpush1.bf16.msra.mxu0 %v2085
    %3396 = vmatprep.subr.bf16.mxu0 %v2079
    %3397 = vmatpush1.bf16.msra.mxu0 %v2078
    %3398 = vmatprep.subr.bf16.mxu0 %v2072
    %3399 = vmatpush1.bf16.msra.mxu0 %v2071
    %3400 = vmatprep.subr.bf16.mxu0 %v2065
    %3401 = vmatpush1.bf16.msra.mxu0 %v2064
    %3402 = vmatprep.subr.bf16.mxu0 %v2058
    %3403 = vmatpush1.bf16.msra.mxu0 %v2057
    %3404 = vmatprep.subr.bf16.mxu0 %v2163
    %3405 = vmatpush2.bf16.msra.mxu0 %v2162
    %3406 = vmatprep.subr.bf16.mxu0 %v2156
    %3407 = vmatpush2.bf16.msra.mxu0 %v2155
    %3408 = vmatprep.subr.bf16.mxu0 %v2149
    %3409 = vmatpush2.bf16.msra.mxu0 %v2148
    %3410 = vmatprep.subr.bf16.mxu0 %v2142
    %3411 = vmatpush2.bf16.msra.mxu0 %v2141
    %3412 = vmatprep.subr.bf16.mxu0 %v2135
    %3413 = vmatpush2.bf16.msra.mxu0 %v2134
    %3414 = vmatprep.subr.bf16.mxu0 %v2128
    %3415 = vmatpush2.bf16.msra.mxu0 %v2127
    %3416 = vmatprep.subr.bf16.mxu0 %v2121
    %3417 = vmatpush2.bf16.msra.mxu0 %v2120
    %3418 = vmatprep.subr.bf16.mxu0 %v2114
    %3419 = vmatpush2.bf16.msra.mxu0 %v2113
    %3420 = vmatprep.mubr.bf16.mxu0 %v1011
    %3421 = vmatmul.mubr.bf16.gmra.mxu0 %v1010
    %v3422 = vpop.f32.mrf.mxu0
    %v3423 = vadd.f32 %v3382, %v3422
    %v3424 = vpop.f32.mrf.mxu0
    %v3425 = vadd.f32 %v3384, %v3424
    %v3426 = vpop.f32.mrf.mxu0
    %v3427 = vpop.f32.mrf.mxu0
    %3428 = vdwg.mxu0
    %3429 = vmatprep.subr.bf16.mxu0 %v2219
    %3430 = vmatpush1.bf16.msra.mxu0 %v2218
    %3431 = vmatprep.subr.bf16.mxu0 %v2212
    %3432 = vmatpush1.bf16.msra.mxu0 %v2211
    %3433 = vmatprep.subr.bf16.mxu0 %v2205
    %3434 = vmatpush1.bf16.msra.mxu0 %v2204
    %3435 = vmatprep.subr.bf16.mxu0 %v2198
    %3436 = vmatpush1.bf16.msra.mxu0 %v2197
    %3437 = vmatprep.subr.bf16.mxu0 %v2191
    %3438 = vmatpush1.bf16.msra.mxu0 %v2190
    %3439 = vmatprep.subr.bf16.mxu0 %v2184
    %3440 = vmatpush1.bf16.msra.mxu0 %v2183
    %3441 = vmatprep.subr.bf16.mxu0 %v2177
    %3442 = vmatpush1.bf16.msra.mxu0 %v2176
    %3443 = vmatprep.subr.bf16.mxu0 %v2170
    %3444 = vmatpush1.bf16.msra.mxu0 %v2169
    %3445 = vmatprep.subr.bf16.mxu0 %v2275
    %3446 = vmatpush2.bf16.msra.mxu0 %v2274
    %3447 = vmatprep.subr.bf16.mxu0 %v2268
    %3448 = vmatpush2.bf16.msra.mxu0 %v2267
    %3449 = vmatprep.subr.bf16.mxu0 %v2261
    %3450 = vmatpush2.bf16.msra.mxu0 %v2260
    %3451 = vmatprep.subr.bf16.mxu0 %v2254
    %3452 = vmatpush2.bf16.msra.mxu0 %v2253
    %3453 = vmatprep.subr.bf16.mxu0 %v2247
    %3454 = vmatpush2.bf16.msra.mxu0 %v2246
    %3455 = vmatprep.subr.bf16.mxu0 %v2240
    %3456 = vmatpush2.bf16.msra.mxu0 %v2239
    %3457 = vmatprep.subr.bf16.mxu0 %v2233
    %3458 = vmatpush2.bf16.msra.mxu0 %v2232
    %3459 = vmatprep.subr.bf16.mxu0 %v2226
    %3460 = vmatpush2.bf16.msra.mxu0 %v2225
    %3461 = vmatprep.mubr.bf16.mxu0 %v1013
    %3462 = vmatmul.mubr.bf16.gmra.mxu0 %v1012
    %v3463 = vpop.f32.mrf.mxu0
    %v3464 = vadd.f32 %v3423, %v3463
    %v3465 = vpop.f32.mrf.mxu0
    %v3466 = vadd.f32 %v3425, %v3465
    %v3467 = vpop.f32.mrf.mxu0
    %v3468 = vpop.f32.mrf.mxu0
    %3469 = vdwg.mxu0
    %3470 = vmatprep.subr.bf16.mxu0 %v2331
    %3471 = vmatpush1.bf16.msra.mxu0 %v2330
    %3472 = vmatprep.subr.bf16.mxu0 %v2324
    %3473 = vmatpush1.bf16.msra.mxu0 %v2323
    %3474 = vmatprep.subr.bf16.mxu0 %v2317
    %3475 = vmatpush1.bf16.msra.mxu0 %v2316
    %3476 = vmatprep.subr.bf16.mxu0 %v2310
    %3477 = vmatpush1.bf16.msra.mxu0 %v2309
    %3478 = vmatprep.subr.bf16.mxu0 %v2303
    %3479 = vmatpush1.bf16.msra.mxu0 %v2302
    %3480 = vmatprep.subr.bf16.mxu0 %v2296
    %3481 = vmatpush1.bf16.msra.mxu0 %v2295
    %3482 = vmatprep.subr.bf16.mxu0 %v2289
    %3483 = vmatpush1.bf16.msra.mxu0 %v2288
    %3484 = vmatprep.subr.bf16.mxu0 %v2282
    %3485 = vmatpush1.bf16.msra.mxu0 %v2281
    %3486 = vmatprep.subr.bf16.mxu0 %v2387
    %3487 = vmatpush2.bf16.msra.mxu0 %v2386
    %3488 = vmatprep.subr.bf16.mxu0 %v2380
    %3489 = vmatpush2.bf16.msra.mxu0 %v2379
    %3490 = vmatprep.subr.bf16.mxu0 %v2373
    %3491 = vmatpush2.bf16.msra.mxu0 %v2372
    %3492 = vmatprep.subr.bf16.mxu0 %v2366
    %3493 = vmatpush2.bf16.msra.mxu0 %v2365
    %3494 = vmatprep.subr.bf16.mxu0 %v2359
    %3495 = vmatpush2.bf16.msra.mxu0 %v2358
    %3496 = vmatprep.subr.bf16.mxu0 %v2352
    %3497 = vmatpush2.bf16.msra.mxu0 %v2351
    %3498 = vmatprep.subr.bf16.mxu0 %v2345
    %3499 = vmatpush2.bf16.msra.mxu0 %v2344
    %3500 = vmatprep.subr.bf16.mxu0 %v2338
    %3501 = vmatpush2.bf16.msra.mxu0 %v2337
    %3502 = vmatprep.mubr.bf16.mxu0 %v1015
    %3503 = vmatmul.mubr.bf16.gmra.mxu0 %v1014
    %v3504 = vpop.f32.mrf.mxu0
    %v3505 = vadd.f32 %v3464, %v3504
    %v3506 = vpop.f32.mrf.mxu0
    %v3507 = vadd.f32 %v3466, %v3506
    %v3508 = vpop.f32.mrf.mxu0
    %v3509 = vpop.f32.mrf.mxu0
    %3510 = vdwg.mxu0
    %3511 = vmatprep.subr.bf16.mxu0 %v2443
    %3512 = vmatpush1.bf16.msra.mxu0 %v2442
    %3513 = vmatprep.subr.bf16.mxu0 %v2436
    %3514 = vmatpush1.bf16.msra.mxu0 %v2435
    %3515 = vmatprep.subr.bf16.mxu0 %v2429
    %3516 = vmatpush1.bf16.msra.mxu0 %v2428
    %3517 = vmatprep.subr.bf16.mxu0 %v2422
    %3518 = vmatpush1.bf16.msra.mxu0 %v2421
    %3519 = vmatprep.subr.bf16.mxu0 %v2415
    %3520 = vmatpush1.bf16.msra.mxu0 %v2414
    %3521 = vmatprep.subr.bf16.mxu0 %v2408
    %3522 = vmatpush1.bf16.msra.mxu0 %v2407
    %3523 = vmatprep.subr.bf16.mxu0 %v2401
    %3524 = vmatpush1.bf16.msra.mxu0 %v2400
    %3525 = vmatprep.subr.bf16.mxu0 %v2394
    %3526 = vmatpush1.bf16.msra.mxu0 %v2393
    %3527 = vmatprep.subr.bf16.mxu0 0
    %3528 = vmatpush2.bf16.msra.mxu0 0
    %3529 = vmatprep.subr.bf16.mxu0 0
    %3530 = vmatpush2.bf16.msra.mxu0 0
    %3531 = vmatprep.subr.bf16.mxu0 0
    %3532 = vmatpush2.bf16.msra.mxu0 0
    %3533 = vmatprep.subr.bf16.mxu0 0
    %3534 = vmatpush2.bf16.msra.mxu0 0
    %3535 = vmatprep.subr.bf16.mxu0 0
    %3536 = vmatpush2.bf16.msra.mxu0 0
    %3537 = vmatprep.subr.bf16.mxu0 0
    %3538 = vmatpush2.bf16.msra.mxu0 0
    %3539 = vmatprep.subr.bf16.mxu0 0
    %3540 = vmatpush2.bf16.msra.mxu0 0
    %3541 = vmatprep.subr.bf16.mxu0 0
    %3542 = vmatpush2.bf16.msra.mxu0 0
    %3543 = vmatprep.mubr.bf16.mxu0 0
    %3544 = vmatmul.mubr.bf16.gmra.mxu0 %v1016
    %v3545 = vpop.f32.mrf.mxu0
    %v3546 = vadd.f32 %v3505, %v3545
    %v3547 = vpop.f32.mrf.mxu0
    %v3548 = vadd.f32 %v3507, %v3547
    %v3549 = vpop.f32.mrf.mxu0
    %v3550 = vpop.f32.mrf.mxu0
    %3551 = vdwg.mxu0
    %3552 = vmatprep.subr.bf16.mxu0 0
    %3553 = vmatpush1.bf16.msra.mxu0 %v1548
    %3554 = vmatprep.subr.bf16.mxu0 0
    %3555 = vmatpush1.bf16.msra.mxu0 %v1541
    %3556 = vmatprep.subr.bf16.mxu0 0
    %3557 = vmatpush1.bf16.msra.mxu0 %v1534
    %3558 = vmatprep.subr.bf16.mxu0 0
    %3559 = vmatpush1.bf16.msra.mxu0 %v1527
    %3560 = vmatprep.subr.bf16.mxu0 0
    %3561 = vmatpush1.bf16.msra.mxu0 %v1520
    %3562 = vmatprep.subr.bf16.mxu0 0
    %3563 = vmatpush1.bf16.msra.mxu0 %v1513
    %3564 = vmatprep.subr.bf16.mxu0 0
    %3565 = vmatpush1.bf16.msra.mxu0 %v1506
    %3566 = vmatprep.subr.bf16.mxu0 0
    %3567 = vmatpush1.bf16.msra.mxu0 %v1499
    %3568 = vmatprep.subr.bf16.mxu0 0
    %3569 = vmatpush2.bf16.msra.mxu0 %v1604
    %3570 = vmatprep.subr.bf16.mxu0 0
    %3571 = vmatpush2.bf16.msra.mxu0 %v1597
    %3572 = vmatprep.subr.bf16.mxu0 0
    %3573 = vmatpush2.bf16.msra.mxu0 %v1590
    %3574 = vmatprep.subr.bf16.mxu0 0
    %3575 = vmatpush2.bf16.msra.mxu0 %v1583
    %3576 = vmatprep.subr.bf16.mxu0 0
    %3577 = vmatpush2.bf16.msra.mxu0 %v1576
    %3578 = vmatprep.subr.bf16.mxu0 0
    %3579 = vmatpush2.bf16.msra.mxu0 %v1569
    %3580 = vmatprep.subr.bf16.mxu0 0
    %3581 = vmatpush2.bf16.msra.mxu0 %v1562
    %3582 = vmatprep.subr.bf16.mxu0 0
    %3583 = vmatpush2.bf16.msra.mxu0 %v1555
    %3584 = vmatprep.mubr.bf16.mxu0 %v1001
    %3585 = vmatmul.mubr.bf16.gmra.mxu0 %v1000
    %v3586 = vpop.f32.mrf.mxu0
    %v3587 = vadd.f32 0.0, %v3586
    %v3588 = vpop.f32.mrf.mxu0
    %v3589 = vpop.f32.mrf.mxu0
    %v3590 = vpop.f32.mrf.mxu0
    %3591 = vdwg.mxu0
    %3592 = vmatprep.subr.bf16.mxu0 0
    %3593 = vmatpush1.bf16.msra.mxu0 %v1660
    %3594 = vmatprep.subr.bf16.mxu0 0
    %3595 = vmatpush1.bf16.msra.mxu0 %v1653
    %3596 = vmatprep.subr.bf16.mxu0 0
    %3597 = vmatpush1.bf16.msra.mxu0 %v1646
    %3598 = vmatprep.subr.bf16.mxu0 0
    %3599 = vmatpush1.bf16.msra.mxu0 %v1639
    %3600 = vmatprep.subr.bf16.mxu0 0
    %3601 = vmatpush1.bf16.msra.mxu0 %v1632
    %3602 = vmatprep.subr.bf16.mxu0 0
    %3603 = vmatpush1.bf16.msra.mxu0 %v1625
    %3604 = vmatprep.subr.bf16.mxu0 0
    %3605 = vmatpush1.bf16.msra.mxu0 %v1618
    %3606 = vmatprep.subr.bf16.mxu0 0
    %3607 = vmatpush1.bf16.msra.mxu0 %v1611
    %3608 = vmatprep.subr.bf16.mxu0 0
    %3609 = vmatpush2.bf16.msra.mxu0 %v1716
    %3610 = vmatprep.subr.bf16.mxu0 0
    %3611 = vmatpush2.bf16.msra.mxu0 %v1709
    %3612 = vmatprep.subr.bf16.mxu0 0
    %3613 = vmatpush2.bf16.msra.mxu0 %v1702
    %3614 = vmatprep.subr.bf16.mxu0 0
    %3615 = vmatpush2.bf16.msra.mxu0 %v1695
    %3616 = vmatprep.subr.bf16.mxu0 0
    %3617 = vmatpush2.bf16.msra.mxu0 %v1688
    %3618 = vmatprep.subr.bf16.mxu0 0
    %3619 = vmatpush2.bf16.msra.mxu0 %v1681
    %3620 = vmatprep.subr.bf16.mxu0 0
    %3621 = vmatpush2.bf16.msra.mxu0 %v1674
    %3622 = vmatprep.subr.bf16.mxu0 0
    %3623 = vmatpush2.bf16.msra.mxu0 %v1667
    %3624 = vmatprep.mubr.bf16.mxu0 %v1003
    %3625 = vmatmul.mubr.bf16.gmra.mxu0 %v1002
    %v3626 = vpop.f32.mrf.mxu0
    %v3627 = vadd.f32 %v3587, %v3626
    %v3628 = vpop.f32.mrf.mxu0
    %v3629 = vpop.f32.mrf.mxu0
    %v3630 = vpop.f32.mrf.mxu0
    %3631 = vdwg.mxu0
    %3632 = vmatprep.subr.bf16.mxu0 0
    %3633 = vmatpush1.bf16.msra.mxu0 %v1772
    %3634 = vmatprep.subr.bf16.mxu0 0
    %3635 = vmatpush1.bf16.msra.mxu0 %v1765
    %3636 = vmatprep.subr.bf16.mxu0 0
    %3637 = vmatpush1.bf16.msra.mxu0 %v1758
    %3638 = vmatprep.subr.bf16.mxu0 0
    %3639 = vmatpush1.bf16.msra.mxu0 %v1751
    %3640 = vmatprep.subr.bf16.mxu0 0
    %3641 = vmatpush1.bf16.msra.mxu0 %v1744
    %3642 = vmatprep.subr.bf16.mxu0 0
    %3643 = vmatpush1.bf16.msra.mxu0 %v1737
    %3644 = vmatprep.subr.bf16.mxu0 0
    %3645 = vmatpush1.bf16.msra.mxu0 %v1730
    %3646 = vmatprep.subr.bf16.mxu0 0
    %3647 = vmatpush1.bf16.msra.mxu0 %v1723
    %3648 = vmatprep.subr.bf16.mxu0 0
    %3649 = vmatpush2.bf16.msra.mxu0 %v1828
    %3650 = vmatprep.subr.bf16.mxu0 0
    %3651 = vmatpush2.bf16.msra.mxu0 %v1821
    %3652 = vmatprep.subr.bf16.mxu0 0
    %3653 = vmatpush2.bf16.msra.mxu0 %v1814
    %3654 = vmatprep.subr.bf16.mxu0 0
    %3655 = vmatpush2.bf16.msra.mxu0 %v1807
    %3656 = vmatprep.subr.bf16.mxu0 0
    %3657 = vmatpush2.bf16.msra.mxu0 %v1800
    %3658 = vmatprep.subr.bf16.mxu0 0
    %3659 = vmatpush2.bf16.msra.mxu0 %v1793
    %3660 = vmatprep.subr.bf16.mxu0 0
    %3661 = vmatpush2.bf16.msra.mxu0 %v1786
    %3662 = vmatprep.subr.bf16.mxu0 0
    %3663 = vmatpush2.bf16.msra.mxu0 %v1779
    %3664 = vmatprep.mubr.bf16.mxu0 %v1005
    %3665 = vmatmul.mubr.bf16.gmra.mxu0 %v1004
    %v3666 = vpop.f32.mrf.mxu0
    %v3667 = vadd.f32 %v3627, %v3666
    %v3668 = vpop.f32.mrf.mxu0
    %v3669 = vpop.f32.mrf.mxu0
    %v3670 = vpop.f32.mrf.mxu0
    %3671 = vdwg.mxu0
    %3672 = vmatprep.subr.bf16.mxu0 0
    %3673 = vmatpush1.bf16.msra.mxu0 %v1884
    %3674 = vmatprep.subr.bf16.mxu0 0
    %3675 = vmatpush1.bf16.msra.mxu0 %v1877
    %3676 = vmatprep.subr.bf16.mxu0 0
    %3677 = vmatpush1.bf16.msra.mxu0 %v1870
    %3678 = vmatprep.subr.bf16.mxu0 0
    %3679 = vmatpush1.bf16.msra.mxu0 %v1863
    %3680 = vmatprep.subr.bf16.mxu0 0
    %3681 = vmatpush1.bf16.msra.mxu0 %v1856
    %3682 = vmatprep.subr.bf16.mxu0 0
    %3683 = vmatpush1.bf16.msra.mxu0 %v1849
    %3684 = vmatprep.subr.bf16.mxu0 0
    %3685 = vmatpush1.bf16.msra.mxu0 %v1842
    %3686 = vmatprep.subr.bf16.mxu0 0
    %3687 = vmatpush1.bf16.msra.mxu0 %v1835
    %3688 = vmatprep.subr.bf16.mxu0 0
    %3689 = vmatpush2.bf16.msra.mxu0 %v1940
    %3690 = vmatprep.subr.bf16.mxu0 0
    %3691 = vmatpush2.bf16.msra.mxu0 %v1933
    %3692 = vmatprep.subr.bf16.mxu0 0
    %3693 = vmatpush2.bf16.msra.mxu0 %v1926
    %3694 = vmatprep.subr.bf16.mxu0 0
    %3695 = vmatpush2.bf16.msra.mxu0 %v1919
    %3696 = vmatprep.subr.bf16.mxu0 0
    %3697 = vmatpush2.bf16.msra.mxu0 %v1912
    %3698 = vmatprep.subr.bf16.mxu0 0
    %3699 = vmatpush2.bf16.msra.mxu0 %v1905
    %3700 = vmatprep.subr.bf16.mxu0 0
    %3701 = vmatpush2.bf16.msra.mxu0 %v1898
    %3702 = vmatprep.subr.bf16.mxu0 0
    %3703 = vmatpush2.bf16.msra.mxu0 %v1891
    %3704 = vmatprep.mubr.bf16.mxu0 %v1007
    %3705 = vmatmul.mubr.bf16.gmra.mxu0 %v1006
    %v3706 = vpop.f32.mrf.mxu0
    %v3707 = vadd.f32 %v3667, %v3706
    %v3708 = vpop.f32.mrf.mxu0
    %v3709 = vpop.f32.mrf.mxu0
    %v3710 = vpop.f32.mrf.mxu0
    %3711 = vdwg.mxu0
    %3712 = vmatprep.subr.bf16.mxu0 0
    %3713 = vmatpush1.bf16.msra.mxu0 %v1996
    %3714 = vmatprep.subr.bf16.mxu0 0
    %3715 = vmatpush1.bf16.msra.mxu0 %v1989
    %3716 = vmatprep.subr.bf16.mxu0 0
    %3717 = vmatpush1.bf16.msra.mxu0 %v1982
    %3718 = vmatprep.subr.bf16.mxu0 0
    %3719 = vmatpush1.bf16.msra.mxu0 %v1975
    %3720 = vmatprep.subr.bf16.mxu0 0
    %3721 = vmatpush1.bf16.msra.mxu0 %v1968
    %3722 = vmatprep.subr.bf16.mxu0 0
    %3723 = vmatpush1.bf16.msra.mxu0 %v1961
    %3724 = vmatprep.subr.bf16.mxu0 0
    %3725 = vmatpush1.bf16.msra.mxu0 %v1954
    %3726 = vmatprep.subr.bf16.mxu0 0
    %3727 = vmatpush1.bf16.msra.mxu0 %v1947
    %3728 = vmatprep.subr.bf16.mxu0 0
    %3729 = vmatpush2.bf16.msra.mxu0 %v2052
    %3730 = vmatprep.subr.bf16.mxu0 0
    %3731 = vmatpush2.bf16.msra.mxu0 %v2045
    %3732 = vmatprep.subr.bf16.mxu0 0
    %3733 = vmatpush2.bf16.msra.mxu0 %v2038
    %3734 = vmatprep.subr.bf16.mxu0 0
    %3735 = vmatpush2.bf16.msra.mxu0 %v2031
    %3736 = vmatprep.subr.bf16.mxu0 0
    %3737 = vmatpush2.bf16.msra.mxu0 %v2024
    %3738 = vmatprep.subr.bf16.mxu0 0
    %3739 = vmatpush2.bf16.msra.mxu0 %v2017
    %3740 = vmatprep.subr.bf16.mxu0 0
    %3741 = vmatpush2.bf16.msra.mxu0 %v2010
    %3742 = vmatprep.subr.bf16.mxu0 0
    %3743 = vmatpush2.bf16.msra.mxu0 %v2003
    %3744 = vmatprep.mubr.bf16.mxu0 %v1009
    %3745 = vmatmul.mubr.bf16.gmra.mxu0 %v1008
    %v3746 = vpop.f32.mrf.mxu0
    %v3747 = vadd.f32 %v3707, %v3746
    %v3748 = vpop.f32.mrf.mxu0
    %v3749 = vpop.f32.mrf.mxu0
    %v3750 = vpop.f32.mrf.mxu0
    %3751 = vdwg.mxu0
    %3752 = vmatprep.subr.bf16.mxu0 0
    %3753 = vmatpush1.bf16.msra.mxu0 %v2108
    %3754 = vmatprep.subr.bf16.mxu0 0
    %3755 = vmatpush1.bf16.msra.mxu0 %v2101
    %3756 = vmatprep.subr.bf16.mxu0 0
    %3757 = vmatpush1.bf16.msra.mxu0 %v2094
    %3758 = vmatprep.subr.bf16.mxu0 0
    %3759 = vmatpush1.bf16.msra.mxu0 %v2087
    %3760 = vmatprep.subr.bf16.mxu0 0
    %3761 = vmatpush1.bf16.msra.mxu0 %v2080
    %3762 = vmatprep.subr.bf16.mxu0 0
    %3763 = vmatpush1.bf16.msra.mxu0 %v2073
    %3764 = vmatprep.subr.bf16.mxu0 0
    %3765 = vmatpush1.bf16.msra.mxu0 %v2066
    %3766 = vmatprep.subr.bf16.mxu0 0
    %3767 = vmatpush1.bf16.msra.mxu0 %v2059
    %3768 = vmatprep.subr.bf16.mxu0 0
    %3769 = vmatpush2.bf16.msra.mxu0 %v2164
    %3770 = vmatprep.subr.bf16.mxu0 0
    %3771 = vmatpush2.bf16.msra.mxu0 %v2157
    %3772 = vmatprep.subr.bf16.mxu0 0
    %3773 = vmatpush2.bf16.msra.mxu0 %v2150
    %3774 = vmatprep.subr.bf16.mxu0 0
    %3775 = vmatpush2.bf16.msra.mxu0 %v2143
    %3776 = vmatprep.subr.bf16.mxu0 0
    %3777 = vmatpush2.bf16.msra.mxu0 %v2136
    %3778 = vmatprep.subr.bf16.mxu0 0
    %3779 = vmatpush2.bf16.msra.mxu0 %v2129
    %3780 = vmatprep.subr.bf16.mxu0 0
    %3781 = vmatpush2.bf16.msra.mxu0 %v2122
    %3782 = vmatprep.subr.bf16.mxu0 0
    %3783 = vmatpush2.bf16.msra.mxu0 %v2115
    %3784 = vmatprep.mubr.bf16.mxu0 %v1011
    %3785 = vmatmul.mubr.bf16.gmra.mxu0 %v1010
    %v3786 = vpop.f32.mrf.mxu0
    %v3787 = vadd.f32 %v3747, %v3786
    %v3788 = vpop.f32.mrf.mxu0
    %v3789 = vpop.f32.mrf.mxu0
    %v3790 = vpop.f32.mrf.mxu0
    %3791 = vdwg.mxu0
    %3792 = vmatprep.subr.bf16.mxu0 0
    %3793 = vmatpush1.bf16.msra.mxu0 %v2220
    %3794 = vmatprep.subr.bf16.mxu0 0
    %3795 = vmatpush1.bf16.msra.mxu0 %v2213
    %3796 = vmatprep.subr.bf16.mxu0 0
    %3797 = vmatpush1.bf16.msra.mxu0 %v2206
    %3798 = vmatprep.subr.bf16.mxu0 0
    %3799 = vmatpush1.bf16.msra.mxu0 %v2199
    %3800 = vmatprep.subr.bf16.mxu0 0
    %3801 = vmatpush1.bf16.msra.mxu0 %v2192
    %3802 = vmatprep.subr.bf16.mxu0 0
    %3803 = vmatpush1.bf16.msra.mxu0 %v2185
    %3804 = vmatprep.subr.bf16.mxu0 0
    %3805 = vmatpush1.bf16.msra.mxu0 %v2178
    %3806 = vmatprep.subr.bf16.mxu0 0
    %3807 = vmatpush1.bf16.msra.mxu0 %v2171
    %3808 = vmatprep.subr.bf16.mxu0 0
    %3809 = vmatpush2.bf16.msra.mxu0 %v2276
    %3810 = vmatprep.subr.bf16.mxu0 0
    %3811 = vmatpush2.bf16.msra.mxu0 %v2269
    %3812 = vmatprep.subr.bf16.mxu0 0
    %3813 = vmatpush2.bf16.msra.mxu0 %v2262
    %3814 = vmatprep.subr.bf16.mxu0 0
    %3815 = vmatpush2.bf16.msra.mxu0 %v2255
    %3816 = vmatprep.subr.bf16.mxu0 0
    %3817 = vmatpush2.bf16.msra.mxu0 %v2248
    %3818 = vmatprep.subr.bf16.mxu0 0
    %3819 = vmatpush2.bf16.msra.mxu0 %v2241
    %3820 = vmatprep.subr.bf16.mxu0 0
    %3821 = vmatpush2.bf16.msra.mxu0 %v2234
    %3822 = vmatprep.subr.bf16.mxu0 0
    %3823 = vmatpush2.bf16.msra.mxu0 %v2227
    %3824 = vmatprep.mubr.bf16.mxu0 %v1013
    %3825 = vmatmul.mubr.bf16.gmra.mxu0 %v1012
    %v3826 = vpop.f32.mrf.mxu0
    %v3827 = vadd.f32 %v3787, %v3826
    %v3828 = vpop.f32.mrf.mxu0
    %v3829 = vpop.f32.mrf.mxu0
    %v3830 = vpop.f32.mrf.mxu0
    %3831 = vdwg.mxu0
    %3832 = vmatprep.subr.bf16.mxu0 0
    %3833 = vmatpush1.bf16.msra.mxu0 %v2332
    %3834 = vmatprep.subr.bf16.mxu0 0
    %3835 = vmatpush1.bf16.msra.mxu0 %v2325
    %3836 = vmatprep.subr.bf16.mxu0 0
    %3837 = vmatpush1.bf16.msra.mxu0 %v2318
    %3838 = vmatprep.subr.bf16.mxu0 0
    %3839 = vmatpush1.bf16.msra.mxu0 %v2311
    %3840 = vmatprep.subr.bf16.mxu0 0
    %3841 = vmatpush1.bf16.msra.mxu0 %v2304
    %3842 = vmatprep.subr.bf16.mxu0 0
    %3843 = vmatpush1.bf16.msra.mxu0 %v2297
    %3844 = vmatprep.subr.bf16.mxu0 0
    %3845 = vmatpush1.bf16.msra.mxu0 %v2290
    %3846 = vmatprep.subr.bf16.mxu0 0
    %3847 = vmatpush1.bf16.msra.mxu0 %v2283
    %3848 = vmatprep.subr.bf16.mxu0 0
    %3849 = vmatpush2.bf16.msra.mxu0 %v2388
    %3850 = vmatprep.subr.bf16.mxu0 0
    %3851 = vmatpush2.bf16.msra.mxu0 %v2381
    %3852 = vmatprep.subr.bf16.mxu0 0
    %3853 = vmatpush2.bf16.msra.mxu0 %v2374
    %3854 = vmatprep.subr.bf16.mxu0 0
    %3855 = vmatpush2.bf16.msra.mxu0 %v2367
    %3856 = vmatprep.subr.bf16.mxu0 0
    %3857 = vmatpush2.bf16.msra.mxu0 %v2360
    %3858 = vmatprep.subr.bf16.mxu0 0
    %3859 = vmatpush2.bf16.msra.mxu0 %v2353
    %3860 = vmatprep.subr.bf16.mxu0 0
    %3861 = vmatpush2.bf16.msra.mxu0 %v2346
    %3862 = vmatprep.subr.bf16.mxu0 0
    %3863 = vmatpush2.bf16.msra.mxu0 %v2339
    %3864 = vmatprep.mubr.bf16.mxu0 %v1015
    %3865 = vmatmul.mubr.bf16.gmra.mxu0 %v1014
    %v3866 = vpop.f32.mrf.mxu0
    %v3867 = vadd.f32 %v3827, %v3866
    %v3868 = vpop.f32.mrf.mxu0
    %v3869 = vpop.f32.mrf.mxu0
    %v3870 = vpop.f32.mrf.mxu0
    %3871 = vdwg.mxu0
    %3872 = vmatprep.subr.bf16.mxu0 0
    %3873 = vmatpush1.bf16.msra.mxu0 %v2444
    %3874 = vmatprep.subr.bf16.mxu0 0
    %3875 = vmatpush1.bf16.msra.mxu0 %v2437
    %3876 = vmatprep.subr.bf16.mxu0 0
    %3877 = vmatpush1.bf16.msra.mxu0 %v2430
    %3878 = vmatprep.subr.bf16.mxu0 0
    %3879 = vmatpush1.bf16.msra.mxu0 %v2423
    %3880 = vmatprep.subr.bf16.mxu0 0
    %3881 = vmatpush1.bf16.msra.mxu0 %v2416
    %3882 = vmatprep.subr.bf16.mxu0 0
    %3883 = vmatpush1.bf16.msra.mxu0 %v2409
    %3884 = vmatprep.subr.bf16.mxu0 0
    %3885 = vmatpush1.bf16.msra.mxu0 %v2402
    %3886 = vmatprep.subr.bf16.mxu0 0
    %3887 = vmatpush1.bf16.msra.mxu0 %v2395
    %3888 = vmatprep.subr.bf16.mxu0 0
    %3889 = vmatpush2.bf16.msra.mxu0 0
    %3890 = vmatprep.subr.bf16.mxu0 0
    %3891 = vmatpush2.bf16.msra.mxu0 0
    %3892 = vmatprep.subr.bf16.mxu0 0
    %3893 = vmatpush2.bf16.msra.mxu0 0
    %3894 = vmatprep.subr.bf16.mxu0 0
    %3895 = vmatpush2.bf16.msra.mxu0 0
    %3896 = vmatprep.subr.bf16.mxu0 0
    %3897 = vmatpush2.bf16.msra.mxu0 0
    %3898 = vmatprep.subr.bf16.mxu0 0
    %3899 = vmatpush2.bf16.msra.mxu0 0
    %3900 = vmatprep.subr.bf16.mxu0 0
    %3901 = vmatpush2.bf16.msra.mxu0 0
    %3902 = vmatprep.subr.bf16.mxu0 0
    %3903 = vmatpush2.bf16.msra.mxu0 0
    %3904 = vmatprep.mubr.bf16.mxu0 0
    %3905 = vmatmul.mubr.bf16.gmra.mxu0 %v1016
    %v3906 = vpop.f32.mrf.mxu0
    %v3907 = vadd.f32 %v3867, %v3906
    %v3908 = vpop.f32.mrf.mxu0
    %v3909 = vpop.f32.mrf.mxu0
    %v3910 = vpop.f32.mrf.mxu0
    %3911 = vdwg.mxu0
    %v3912 = vld [vmem:[#allocation9] sm:$0xff]
    %v3914 = vlaneseq
    %v3915 = vshrl.u32 %v3914, 7
    %v3916 = vsub.s32 0, %v3915
    %v3917 = vrot.slane %v3912, %v3916
    %v3918 = vlaneseq
    %v3919 = vshrl.u32 %v3918, 7
    %v3920 = vsub.s32 1, %v3919
    %v3921 = vrot.slane %v3912, %v3920
    %v3922 = vlaneseq
    %v3923 = vshrl.u32 %v3922, 7
    %v3924 = vsub.s32 2, %v3923
    %v3925 = vrot.slane %v3912, %v3924
    %v3926 = vlaneseq
    %v3927 = vshrl.u32 %v3926, 7
    %v3928 = vsub.s32 3, %v3927
    %v3929 = vrot.slane %v3912, %v3928
    %v3930 = vlaneseq
    %v3931 = vshrl.u32 %v3930, 7
    %v3932 = vsub.s32 4, %v3931
    %v3933 = vrot.slane %v3912, %v3932
    %v3934 = vlaneseq
    %v3935 = vshrl.u32 %v3934, 7
    %v3936 = vsub.s32 5, %v3935
    %v3937 = vrot.slane %v3912, %v3936
    %v3938 = vlaneseq
    %v3939 = vshrl.u32 %v3938, 7
    %v3940 = vsub.s32 6, %v3939
    %v3941 = vrot.slane %v3912, %v3940
    %v3949 = vmul.f32 %v2808, %v3917
    %v3950 = vmul.f32 %v2810, %v3921
    %v3951 = vmul.f32 %v3177, %v3925
    %v3952 = vmul.f32 %v3179, %v3929
    %v3953 = vmul.f32 %v3546, %v3933
    %v3954 = vmul.f32 %v3548, %v3937
    %v3955 = vmul.f32 %v3907, %v3941
    %v3956 = vld [vmem:[#allocation10] sm:$0xff]
    %v3958 = vlaneseq
    %v3959 = vshrl.u32 %v3958, 7
    %v3960 = vsub.s32 0, %v3959
    %v3961 = vrot.slane %v3956, %v3960
    %v3962 = vlaneseq
    %v3963 = vshrl.u32 %v3962, 7
    %v3964 = vsub.s32 1, %v3963
    %v3965 = vrot.slane %v3956, %v3964
    %v3966 = vlaneseq
    %v3967 = vshrl.u32 %v3966, 7
    %v3968 = vsub.s32 2, %v3967
    %v3969 = vrot.slane %v3956, %v3968
    %v3970 = vlaneseq
    %v3971 = vshrl.u32 %v3970, 7
    %v3972 = vsub.s32 3, %v3971
    %v3973 = vrot.slane %v3956, %v3972
    %v3974 = vlaneseq
    %v3975 = vshrl.u32 %v3974, 7
    %v3976 = vsub.s32 4, %v3975
    %v3977 = vrot.slane %v3956, %v3976
    %v3978 = vlaneseq
    %v3979 = vshrl.u32 %v3978, 7
    %v3980 = vsub.s32 5, %v3979
    %v3981 = vrot.slane %v3956, %v3980
    %v3982 = vlaneseq
    %v3983 = vshrl.u32 %v3982, 7
    %v3984 = vsub.s32 6, %v3983
    %v3985 = vrot.slane %v3956, %v3984
    %v3993 = vadd.f32 %v3949, %v3961
    %v3994 = vadd.f32 %v3950, %v3965
    %v3995 = vadd.f32 %v3951, %v3969
    %v3996 = vadd.f32 %v3952, %v3973
    %v3997 = vadd.f32 %v3953, %v3977
    %v3998 = vadd.f32 %v3954, %v3981
    %v3999 = vadd.f32 %v3955, %v3985
    %v4000 = vmax.f32 %v3993, 0.0
    %v4001 = vmax.f32 %v3994, 0.0
    %v4002 = vmax.f32 %v3995, 0.0
    %v4003 = vmax.f32 %v3996, 0.0
    %v4004 = vmax.f32 %v3997, 0.0
    %v4005 = vmax.f32 %v3998, 0.0
    %v4006 = vmax.f32 %v3999, 0.0
    %v4007 = vpack.c.bf16 %v4000, %v4000
    %v4008 = vpack.c.bf16 %v4001, %v4001
    %v4009 = vpack.c.bf16 %v4002, %v4002
    %v4010 = vpack.c.bf16 %v4003, %v4003
    %v4011 = vpack.c.bf16 %v4004, %v4004
    %v4012 = vpack.c.bf16 %v4005, %v4005
    %v4013 = vpack.c.bf16 %v4006, %v4006
    %v4014 = vld [vmem:[#allocation12] sm:$0xff]
    %v4015 = vld [vmem:[#allocation12 + $0x8] sm:$0xff]
    %v4016 = vld [vmem:[#allocation12 + $0x10] sm:$0xff]
    %v4017 = vld [vmem:[#allocation12 + $0x18] sm:$0xff]
    %v4018 = vld [vmem:[#allocation12 + $0x20] sm:$0xff]
    %v4019 = vld [vmem:[#allocation12 + $0x28] sm:$0xff]
    %v4020 = vld [vmem:[#allocation12 + $0x30] sm:$0xff]
    %v4021 = vld [vmem:[#allocation12 + $0x38] sm:$0xff]
    %v4022 = vld [vmem:[#allocation12 + $0x40] sm:$0xff]
    %v4023 = vld [vmem:[#allocation12 + $0x48] sm:$0xff]
    %v4024 = vld [vmem:[#allocation12 + $0x50] sm:$0xff]
    %v4025 = vld [vmem:[#allocation12 + $0x58] sm:$0xff]
    %v4026 = vld [vmem:[#allocation12 + $0x60] sm:$0xff]
    %v4027 = vld [vmem:[#allocation12 + $0x68] sm:$0xff]
    %v4028 = vld [vmem:[#allocation12 + $0x70] sm:$0xff]
    %v4029 = vld [vmem:[#allocation12 + $0x78] sm:$0xff]
    %v4030 = vld [vmem:[#allocation12 + $0x80] sm:$0xff]
    %v4031 = vld [vmem:[#allocation12 + $0x88] sm:$0xff]
    %v4032 = vld [vmem:[#allocation12 + $0x90] sm:$0xff]
    %v4033 = vld [vmem:[#allocation12 + $0x98] sm:$0xff]
    %v4034 = vld [vmem:[#allocation12 + $0xa0] sm:$0xff]
    %v4035 = vld [vmem:[#allocation12 + $0xa8] sm:$0xff]
    %v4036 = vld [vmem:[#allocation12 + $0xb0] sm:$0xff]
    %v4037 = vld [vmem:[#allocation12 + $0xb8] sm:$0xff]
    %v4038 = vld [vmem:[#allocation12 + $0xc0] sm:$0xff]
    %v4039 = vld [vmem:[#allocation12 + $0xc8] sm:$0xff]
    %v4040 = vld [vmem:[#allocation12 + $0xd0] sm:$0xff]
    %v4041 = vld [vmem:[#allocation12 + $0xd8] sm:$0xff]
    %v4042 = vld [vmem:[#allocation12 + $0xe0] sm:$0xff]
    %v4043 = vld [vmem:[#allocation12 + $0xe8] sm:$0xff]
    %v4044 = vld [vmem:[#allocation12 + $0xf0] sm:$0xff]
    %v4045 = vld [vmem:[#allocation12 + $0xf8] sm:$0xff]
    %v4046 = vld [vmem:[#allocation12 + $0x100] sm:$0xff]
    %v4047 = vld [vmem:[#allocation12 + $0x108] sm:$0xff]
    %v4048 = vld [vmem:[#allocation12 + $0x110] sm:$0xff]
    %v4049 = vld [vmem:[#allocation12 + $0x118] sm:$0xff]
    %v4050 = vld [vmem:[#allocation12 + $0x120] sm:$0xff]
    %v4051 = vld [vmem:[#allocation12 + $0x128] sm:$0xff]
    %v4052 = vld [vmem:[#allocation12 + $0x130] sm:$0xff]
    %v4053 = vld [vmem:[#allocation12 + $0x138] sm:$0xff]
    %v4054 = vld [vmem:[#allocation12 + $0x140] sm:$0xff]
    %v4055 = vld [vmem:[#allocation12 + $0x148] sm:$0xff]
    %v4056 = vld [vmem:[#allocation12 + $0x150] sm:$0xff]
    %v4057 = vld [vmem:[#allocation12 + $0x158] sm:$0xff]
    %v4058 = vld [vmem:[#allocation12 + $0x160] sm:$0xff]
    %v4059 = vld [vmem:[#allocation12 + $0x168] sm:$0xff]
    %v4060 = vld [vmem:[#allocation12 + $0x170] sm:$0xff]
    %v4061 = vld [vmem:[#allocation12 + $0x178] sm:$0xff]
    %v4062 = vld [vmem:[#allocation12 + $0x180] sm:$0xff]
    %v4063 = vld [vmem:[#allocation12 + $0x188] sm:$0xff]
    %v4064 = vld [vmem:[#allocation12 + $0x190] sm:$0xff]
    %v4065 = vld [vmem:[#allocation12 + $0x198] sm:$0xff]
    %v4066 = vld [vmem:[#allocation12 + $0x1a0] sm:$0xff]
    %v4067 = vld [vmem:[#allocation12 + $0x1a8] sm:$0xff]
    %v4068 = vld [vmem:[#allocation12 + $0x1b0] sm:$0xff]
    %v4069 = vld [vmem:[#allocation12 + $0x1b8] sm:$0xff]
    %v4070 = vld [vmem:[#allocation12 + $0x1c0] sm:$0xff]
    %v4071 = vld [vmem:[#allocation12 + $0x1c8] sm:$0xff]
    %v4072 = vld [vmem:[#allocation12 + $0x1d0] sm:$0xff]
    %v4073 = vld [vmem:[#allocation12 + $0x1d8] sm:$0xff]
    %v4074 = vld [vmem:[#allocation12 + $0x1e0] sm:$0xff]
    %v4075 = vld [vmem:[#allocation12 + $0x1e8] sm:$0xff]
    %v4076 = vld [vmem:[#allocation12 + $0x1f0] sm:$0xff]
    %v4077 = vld [vmem:[#allocation12 + $0x1f8] sm:$0xff]
    %v4078 = vld [vmem:[#allocation12 + $0x200] sm:$0xff]
    %v4079 = vld [vmem:[#allocation12 + $0x208] sm:$0xff]
    %v4080 = vld [vmem:[#allocation12 + $0x210] sm:$0xff]
    %v4081 = vld [vmem:[#allocation12 + $0x218] sm:$0xff]
    %v4082 = vld [vmem:[#allocation12 + $0x220] sm:$0xff]
    %v4083 = vld [vmem:[#allocation12 + $0x228] sm:$0xff]
    %v4084 = vld [vmem:[#allocation12 + $0x230] sm:$0xff]
    %v4085 = vld [vmem:[#allocation12 + $0x238] sm:$0xff]
    %v4086 = vld [vmem:[#allocation12 + $0x240] sm:$0xff]
    %v4087 = vld [vmem:[#allocation12 + $0x248] sm:$0xff]
    %v4088 = vld [vmem:[#allocation12 + $0x250] sm:$0xff]
    %v4089 = vld [vmem:[#allocation12 + $0x258] sm:$0xff]
    %v4090 = vld [vmem:[#allocation12 + $0x260] sm:$0xff]
    %v4091 = vld [vmem:[#allocation12 + $0x268] sm:$0xff]
    %v4092 = vld [vmem:[#allocation12 + $0x270] sm:$0xff]
    %v4093 = vld [vmem:[#allocation12 + $0x278] sm:$0xff]
    %v4094 = vld [vmem:[#allocation12 + $0x280] sm:$0xff]
    %v4095 = vld [vmem:[#allocation12 + $0x288] sm:$0xff]
    %v4096 = vld [vmem:[#allocation12 + $0x290] sm:$0xff]
    %v4097 = vld [vmem:[#allocation12 + $0x298] sm:$0xff]
    %v4098 = vld [vmem:[#allocation12 + $0x2a0] sm:$0xff]
    %v4099 = vld [vmem:[#allocation12 + $0x2a8] sm:$0xff]
    %v4100 = vld [vmem:[#allocation12 + $0x2b0] sm:$0xff]
    %v4101 = vld [vmem:[#allocation12 + $0x2b8] sm:$0xff]
    %v4102 = vld [vmem:[#allocation12 + $0x2c0] sm:$0xff]
    %v4103 = vld [vmem:[#allocation12 + $0x2c8] sm:$0xff]
    %v4104 = vld [vmem:[#allocation12 + $0x2d0] sm:$0xff]
    %v4105 = vld [vmem:[#allocation12 + $0x2d8] sm:$0xff]
    %v4106 = vld [vmem:[#allocation12 + $0x2e0] sm:$0xff]
    %v4107 = vld [vmem:[#allocation12 + $0x2e8] sm:$0xff]
    %v4108 = vld [vmem:[#allocation12 + $0x2f0] sm:$0xff]
    %v4109 = vld [vmem:[#allocation12 + $0x2f8] sm:$0xff]
    %v4110 = vld [vmem:[#allocation12 + $0x300] sm:$0xff]
    %v4111 = vld [vmem:[#allocation12 + $0x308] sm:$0xff]
    %v4112 = vld [vmem:[#allocation12 + $0x310] sm:$0xff]
    %v4113 = vld [vmem:[#allocation12 + $0x318] sm:$0xff]
    %v4114 = vld [vmem:[#allocation12 + $0x320] sm:$0xff]
    %v4115 = vld [vmem:[#allocation12 + $0x328] sm:$0xff]
    %v4116 = vld [vmem:[#allocation12 + $0x330] sm:$0xff]
    %v4117 = vld [vmem:[#allocation12 + $0x338] sm:$0xff]
    %v4118 = vld [vmem:[#allocation12 + $0x340] sm:$0xff]
    %v4119 = vld [vmem:[#allocation12 + $0x348] sm:$0xff]
    %v4120 = vld [vmem:[#allocation12 + $0x350] sm:$0xff]
    %v4121 = vld [vmem:[#allocation12 + $0x358] sm:$0xff]
    %v4122 = vld [vmem:[#allocation12 + $0x360] sm:$0xff]
    %v4123 = vld [vmem:[#allocation12 + $0x368] sm:$0xff]
    %v4124 = vld [vmem:[#allocation12 + $0x370] sm:$0xff]
    %v4125 = vld [vmem:[#allocation12 + $0x378] sm:$0xff]
    %v4126 = vld [vmem:[#allocation13] sm:$0x3]
    %v4128 = vlaneseq
    %v4129 = vshrl.u32 %v4128, 7
    %v4130 = vsub.s32 0, %v4129
    %v4131 = vrot.slane %v4126, %v4130
    %v4132 = vlaneseq
    %v4133 = vshrl.u32 %v4132, 7
    %v4134 = vsub.s32 1, %v4133
    %v4135 = vrot.slane %v4126, %v4134
    %v4250 = vunpack.c.l.b16 %v4014
    %v4251 = vunpack.c.h.b16 %v4014
    %v4252 = vunpack.c.l.b16 %v4015
    %v4253 = vunpack.c.h.b16 %v4015
    %v4254 = vunpack.c.l.b16 %v4016
    %v4255 = vunpack.c.h.b16 %v4016
    %v4256 = vunpack.c.l.b16 %v4017
    %v4257 = vunpack.c.h.b16 %v4017
    %v4258 = vunpack.c.l.b16 %v4018
    %v4259 = vunpack.c.h.b16 %v4018
    %v4260 = vunpack.c.l.b16 %v4019
    %v4261 = vunpack.c.h.b16 %v4019
    %v4262 = vunpack.c.l.b16 %v4020
    %v4263 = vunpack.c.h.b16 %v4020
    %v4264 = vunpack.c.l.b16 %v4021
    %v4265 = vunpack.c.h.b16 %v4021
    %v4266 = vunpack.c.l.b16 %v4022
    %v4267 = vunpack.c.h.b16 %v4022
    %v4268 = vunpack.c.l.b16 %v4023
    %v4269 = vunpack.c.h.b16 %v4023
    %v4270 = vunpack.c.l.b16 %v4024
    %v4271 = vunpack.c.h.b16 %v4024
    %v4272 = vunpack.c.l.b16 %v4025
    %v4273 = vunpack.c.h.b16 %v4025
    %v4274 = vunpack.c.l.b16 %v4026
    %v4275 = vunpack.c.h.b16 %v4026
    %v4276 = vunpack.c.l.b16 %v4027
    %v4277 = vunpack.c.h.b16 %v4027
    %v4278 = vunpack.c.l.b16 %v4028
    %v4279 = vunpack.c.h.b16 %v4028
    %v4280 = vunpack.c.l.b16 %v4029
    %v4281 = vunpack.c.h.b16 %v4029
    %v4282 = vunpack.c.l.b16 %v4030
    %v4283 = vunpack.c.h.b16 %v4030
    %v4284 = vunpack.c.l.b16 %v4031
    %v4285 = vunpack.c.h.b16 %v4031
    %v4286 = vunpack.c.l.b16 %v4032
    %v4287 = vunpack.c.h.b16 %v4032
    %v4288 = vunpack.c.l.b16 %v4033
    %v4289 = vunpack.c.h.b16 %v4033
    %v4290 = vunpack.c.l.b16 %v4034
    %v4291 = vunpack.c.h.b16 %v4034
    %v4292 = vunpack.c.l.b16 %v4035
    %v4293 = vunpack.c.h.b16 %v4035
    %v4294 = vunpack.c.l.b16 %v4036
    %v4295 = vunpack.c.h.b16 %v4036
    %v4296 = vunpack.c.l.b16 %v4037
    %v4297 = vunpack.c.h.b16 %v4037
    %v4298 = vunpack.c.l.b16 %v4038
    %v4299 = vunpack.c.h.b16 %v4038
    %v4300 = vunpack.c.l.b16 %v4039
    %v4301 = vunpack.c.h.b16 %v4039
    %v4302 = vunpack.c.l.b16 %v4040
    %v4303 = vunpack.c.h.b16 %v4040
    %v4304 = vunpack.c.l.b16 %v4041
    %v4305 = vunpack.c.h.b16 %v4041
    %v4306 = vunpack.c.l.b16 %v4042
    %v4307 = vunpack.c.h.b16 %v4042
    %v4308 = vunpack.c.l.b16 %v4043
    %v4309 = vunpack.c.h.b16 %v4043
    %v4310 = vunpack.c.l.b16 %v4044
    %v4311 = vunpack.c.h.b16 %v4044
    %v4312 = vunpack.c.l.b16 %v4045
    %v4313 = vunpack.c.h.b16 %v4045
    %v4314 = vunpack.c.l.b16 %v4046
    %v4315 = vunpack.c.h.b16 %v4046
    %v4316 = vunpack.c.l.b16 %v4047
    %v4317 = vunpack.c.h.b16 %v4047
    %v4318 = vunpack.c.l.b16 %v4048
    %v4319 = vunpack.c.h.b16 %v4048
    %v4320 = vunpack.c.l.b16 %v4049
    %v4321 = vunpack.c.h.b16 %v4049
    %v4322 = vunpack.c.l.b16 %v4050
    %v4323 = vunpack.c.h.b16 %v4050
    %v4324 = vunpack.c.l.b16 %v4051
    %v4325 = vunpack.c.h.b16 %v4051
    %v4326 = vunpack.c.l.b16 %v4052
    %v4327 = vunpack.c.h.b16 %v4052
    %v4328 = vunpack.c.l.b16 %v4053
    %v4329 = vunpack.c.h.b16 %v4053
    %v4330 = vunpack.c.l.b16 %v4054
    %v4331 = vunpack.c.h.b16 %v4054
    %v4332 = vunpack.c.l.b16 %v4055
    %v4333 = vunpack.c.h.b16 %v4055
    %v4334 = vunpack.c.l.b16 %v4056
    %v4335 = vunpack.c.h.b16 %v4056
    %v4336 = vunpack.c.l.b16 %v4057
    %v4337 = vunpack.c.h.b16 %v4057
    %v4338 = vunpack.c.l.b16 %v4058
    %v4339 = vunpack.c.h.b16 %v4058
    %v4340 = vunpack.c.l.b16 %v4059
    %v4341 = vunpack.c.h.b16 %v4059
    %v4342 = vunpack.c.l.b16 %v4060
    %v4343 = vunpack.c.h.b16 %v4060
    %v4344 = vunpack.c.l.b16 %v4061
    %v4345 = vunpack.c.h.b16 %v4061
    %v4346 = vunpack.c.l.b16 %v4062
    %v4347 = vunpack.c.h.b16 %v4062
    %v4348 = vunpack.c.l.b16 %v4063
    %v4349 = vunpack.c.h.b16 %v4063
    %v4350 = vunpack.c.l.b16 %v4064
    %v4351 = vunpack.c.h.b16 %v4064
    %v4352 = vunpack.c.l.b16 %v4065
    %v4353 = vunpack.c.h.b16 %v4065
    %v4354 = vunpack.c.l.b16 %v4066
    %v4355 = vunpack.c.h.b16 %v4066
    %v4356 = vunpack.c.l.b16 %v4067
    %v4357 = vunpack.c.h.b16 %v4067
    %v4358 = vunpack.c.l.b16 %v4068
    %v4359 = vunpack.c.h.b16 %v4068
    %v4360 = vunpack.c.l.b16 %v4069
    %v4361 = vunpack.c.h.b16 %v4069
    %v4362 = vunpack.c.l.b16 %v4070
    %v4363 = vunpack.c.h.b16 %v4070
    %v4364 = vunpack.c.l.b16 %v4071
    %v4365 = vunpack.c.h.b16 %v4071
    %v4366 = vunpack.c.l.b16 %v4072
    %v4367 = vunpack.c.h.b16 %v4072
    %v4368 = vunpack.c.l.b16 %v4073
    %v4369 = vunpack.c.h.b16 %v4073
    %v4370 = vunpack.c.l.b16 %v4074
    %v4371 = vunpack.c.h.b16 %v4074
    %v4372 = vunpack.c.l.b16 %v4075
    %v4373 = vunpack.c.h.b16 %v4075
    %v4374 = vunpack.c.l.b16 %v4076
    %v4375 = vunpack.c.h.b16 %v4076
    %v4376 = vunpack.c.l.b16 %v4077
    %v4377 = vunpack.c.h.b16 %v4077
    %v4378 = vunpack.c.l.b16 %v4078
    %v4379 = vunpack.c.h.b16 %v4078
    %v4380 = vunpack.c.l.b16 %v4079
    %v4381 = vunpack.c.h.b16 %v4079
    %v4382 = vunpack.c.l.b16 %v4080
    %v4383 = vunpack.c.h.b16 %v4080
    %v4384 = vunpack.c.l.b16 %v4081
    %v4385 = vunpack.c.h.b16 %v4081
    %v4386 = vunpack.c.l.b16 %v4082
    %v4387 = vunpack.c.h.b16 %v4082
    %v4388 = vunpack.c.l.b16 %v4083
    %v4389 = vunpack.c.h.b16 %v4083
    %v4390 = vunpack.c.l.b16 %v4084
    %v4391 = vunpack.c.h.b16 %v4084
    %v4392 = vunpack.c.l.b16 %v4085
    %v4393 = vunpack.c.h.b16 %v4085
    %v4394 = vunpack.c.l.b16 %v4086
    %v4395 = vunpack.c.h.b16 %v4086
    %v4396 = vunpack.c.l.b16 %v4087
    %v4397 = vunpack.c.h.b16 %v4087
    %v4398 = vunpack.c.l.b16 %v4088
    %v4399 = vunpack.c.h.b16 %v4088
    %v4400 = vunpack.c.l.b16 %v4089
    %v4401 = vunpack.c.h.b16 %v4089
    %v4402 = vunpack.c.l.b16 %v4090
    %v4403 = vunpack.c.h.b16 %v4090
    %v4404 = vunpack.c.l.b16 %v4091
    %v4405 = vunpack.c.h.b16 %v4091
    %v4406 = vunpack.c.l.b16 %v4092
    %v4407 = vunpack.c.h.b16 %v4092
    %v4408 = vunpack.c.l.b16 %v4093
    %v4409 = vunpack.c.h.b16 %v4093
    %v4410 = vunpack.c.l.b16 %v4094
    %v4411 = vunpack.c.h.b16 %v4094
    %v4412 = vunpack.c.l.b16 %v4095
    %v4413 = vunpack.c.h.b16 %v4095
    %v4414 = vunpack.c.l.b16 %v4096
    %v4415 = vunpack.c.h.b16 %v4096
    %v4416 = vunpack.c.l.b16 %v4097
    %v4417 = vunpack.c.h.b16 %v4097
    %v4418 = vunpack.c.l.b16 %v4098
    %v4419 = vunpack.c.h.b16 %v4098
    %v4420 = vunpack.c.l.b16 %v4099
    %v4421 = vunpack.c.h.b16 %v4099
    %v4422 = vunpack.c.l.b16 %v4100
    %v4423 = vunpack.c.h.b16 %v4100
    %v4424 = vunpack.c.l.b16 %v4101
    %v4425 = vunpack.c.h.b16 %v4101
    %v4426 = vunpack.c.l.b16 %v4102
    %v4427 = vunpack.c.h.b16 %v4102
    %v4428 = vunpack.c.l.b16 %v4103
    %v4429 = vunpack.c.h.b16 %v4103
    %v4430 = vunpack.c.l.b16 %v4104
    %v4431 = vunpack.c.h.b16 %v4104
    %v4432 = vunpack.c.l.b16 %v4105
    %v4433 = vunpack.c.h.b16 %v4105
    %v4434 = vunpack.c.l.b16 %v4106
    %v4435 = vunpack.c.h.b16 %v4106
    %v4436 = vunpack.c.l.b16 %v4107
    %v4437 = vunpack.c.h.b16 %v4107
    %v4438 = vunpack.c.l.b16 %v4108
    %v4439 = vunpack.c.h.b16 %v4108
    %v4440 = vunpack.c.l.b16 %v4109
    %v4441 = vunpack.c.h.b16 %v4109
    %v4442 = vunpack.c.l.b16 %v4110
    %v4443 = vunpack.c.h.b16 %v4110
    %v4444 = vunpack.c.l.b16 %v4111
    %v4445 = vunpack.c.h.b16 %v4111
    %v4446 = vunpack.c.l.b16 %v4112
    %v4447 = vunpack.c.h.b16 %v4112
    %v4448 = vunpack.c.l.b16 %v4113
    %v4449 = vunpack.c.h.b16 %v4113
    %v4450 = vunpack.c.l.b16 %v4114
    %v4451 = vunpack.c.h.b16 %v4114
    %v4452 = vunpack.c.l.b16 %v4115
    %v4453 = vunpack.c.h.b16 %v4115
    %v4454 = vunpack.c.l.b16 %v4116
    %v4455 = vunpack.c.h.b16 %v4116
    %v4456 = vunpack.c.l.b16 %v4117
    %v4457 = vunpack.c.h.b16 %v4117
    %v4458 = vunpack.c.l.b16 %v4118
    %v4459 = vunpack.c.h.b16 %v4118
    %v4460 = vunpack.c.l.b16 %v4119
    %v4461 = vunpack.c.h.b16 %v4119
    %v4462 = vunpack.c.l.b16 %v4120
    %v4463 = vunpack.c.h.b16 %v4120
    %v4464 = vunpack.c.l.b16 %v4121
    %v4465 = vunpack.c.h.b16 %v4121
    %v4466 = vunpack.c.l.b16 %v4122
    %v4467 = vunpack.c.h.b16 %v4122
    %v4468 = vunpack.c.l.b16 %v4123
    %v4469 = vunpack.c.h.b16 %v4123
    %v4470 = vunpack.c.l.b16 %v4124
    %v4471 = vunpack.c.h.b16 %v4124
    %v4472 = vunpack.c.l.b16 %v4125
    %v4473 = vunpack.c.h.b16 %v4125
    %v4474 = vpack.c.b16 %v4252, %v4250
    %v4475 = vpack.c.b16 %v4253, %v4251
    %v4476 = vpack.c.b16 %v4256, %v4254
    %v4477 = vpack.c.b16 %v4257, %v4255
    %v4478 = vpack.c.b16 %v4260, %v4258
    %v4479 = vpack.c.b16 %v4261, %v4259
    %v4480 = vpack.c.b16 %v4264, %v4262
    %v4481 = vpack.c.b16 %v4265, %v4263
    %v4482 = vpack.c.b16 %v4268, %v4266
    %v4483 = vpack.c.b16 %v4269, %v4267
    %v4484 = vpack.c.b16 %v4272, %v4270
    %v4485 = vpack.c.b16 %v4273, %v4271
    %v4486 = vpack.c.b16 %v4276, %v4274
    %v4487 = vpack.c.b16 %v4277, %v4275
    %v4488 = vpack.c.b16 %v4280, %v4278
    %v4489 = vpack.c.b16 %v4281, %v4279
    %v4490 = vpack.c.b16 %v4284, %v4282
    %v4491 = vpack.c.b16 %v4285, %v4283
    %v4492 = vpack.c.b16 %v4288, %v4286
    %v4493 = vpack.c.b16 %v4289, %v4287
    %v4494 = vpack.c.b16 %v4292, %v4290
    %v4495 = vpack.c.b16 %v4293, %v4291
    %v4496 = vpack.c.b16 %v4296, %v4294
    %v4497 = vpack.c.b16 %v4297, %v4295
    %v4498 = vpack.c.b16 %v4300, %v4298
    %v4499 = vpack.c.b16 %v4301, %v4299
    %v4500 = vpack.c.b16 %v4304, %v4302
    %v4501 = vpack.c.b16 %v4305, %v4303
    %v4502 = vpack.c.b16 %v4308, %v4306
    %v4503 = vpack.c.b16 %v4309, %v4307
    %v4504 = vpack.c.b16 %v4312, %v4310
    %v4505 = vpack.c.b16 %v4313, %v4311
    %v4506 = vpack.c.b16 %v4316, %v4314
    %v4507 = vpack.c.b16 %v4317, %v4315
    %v4508 = vpack.c.b16 %v4320, %v4318
    %v4509 = vpack.c.b16 %v4321, %v4319
    %v4510 = vpack.c.b16 %v4324, %v4322
    %v4511 = vpack.c.b16 %v4325, %v4323
    %v4512 = vpack.c.b16 %v4328, %v4326
    %v4513 = vpack.c.b16 %v4329, %v4327
    %v4514 = vpack.c.b16 %v4332, %v4330
    %v4515 = vpack.c.b16 %v4333, %v4331
    %v4516 = vpack.c.b16 %v4336, %v4334
    %v4517 = vpack.c.b16 %v4337, %v4335
    %v4518 = vpack.c.b16 %v4340, %v4338
    %v4519 = vpack.c.b16 %v4341, %v4339
    %v4520 = vpack.c.b16 %v4344, %v4342
    %v4521 = vpack.c.b16 %v4345, %v4343
    %v4522 = vpack.c.b16 %v4348, %v4346
    %v4523 = vpack.c.b16 %v4349, %v4347
    %v4524 = vpack.c.b16 %v4352, %v4350
    %v4525 = vpack.c.b16 %v4353, %v4351
    %v4526 = vpack.c.b16 %v4356, %v4354
    %v4527 = vpack.c.b16 %v4357, %v4355
    %v4528 = vpack.c.b16 %v4360, %v4358
    %v4529 = vpack.c.b16 %v4361, %v4359
    %v4530 = vpack.c.b16 %v4364, %v4362
    %v4531 = vpack.c.b16 %v4365, %v4363
    %v4532 = vpack.c.b16 %v4368, %v4366
    %v4533 = vpack.c.b16 %v4369, %v4367
    %v4534 = vpack.c.b16 %v4372, %v4370
    %v4535 = vpack.c.b16 %v4373, %v4371
    %v4536 = vpack.c.b16 %v4376, %v4374
    %v4537 = vpack.c.b16 %v4377, %v4375
    %v4538 = vpack.c.b16 %v4380, %v4378
    %v4539 = vpack.c.b16 %v4381, %v4379
    %v4540 = vpack.c.b16 %v4384, %v4382
    %v4541 = vpack.c.b16 %v4385, %v4383
    %v4542 = vpack.c.b16 %v4388, %v4386
    %v4543 = vpack.c.b16 %v4389, %v4387
    %v4544 = vpack.c.b16 %v4392, %v4390
    %v4545 = vpack.c.b16 %v4393, %v4391
    %v4546 = vpack.c.b16 %v4396, %v4394
    %v4547 = vpack.c.b16 %v4397, %v4395
    %v4548 = vpack.c.b16 %v4400, %v4398
    %v4549 = vpack.c.b16 %v4401, %v4399
    %v4550 = vpack.c.b16 %v4404, %v4402
    %v4551 = vpack.c.b16 %v4405, %v4403
    %v4552 = vpack.c.b16 %v4408, %v4406
    %v4553 = vpack.c.b16 %v4409, %v4407
    %v4554 = vpack.c.b16 %v4412, %v4410
    %v4555 = vpack.c.b16 %v4413, %v4411
    %v4556 = vpack.c.b16 %v4416, %v4414
    %v4557 = vpack.c.b16 %v4417, %v4415
    %v4558 = vpack.c.b16 %v4420, %v4418
    %v4559 = vpack.c.b16 %v4421, %v4419
    %v4560 = vpack.c.b16 %v4424, %v4422
    %v4561 = vpack.c.b16 %v4425, %v4423
    %v4562 = vpack.c.b16 %v4428, %v4426
    %v4563 = vpack.c.b16 %v4429, %v4427
    %v4564 = vpack.c.b16 %v4432, %v4430
    %v4565 = vpack.c.b16 %v4433, %v4431
    %v4566 = vpack.c.b16 %v4436, %v4434
    %v4567 = vpack.c.b16 %v4437, %v4435
    %v4568 = vpack.c.b16 %v4440, %v4438
    %v4569 = vpack.c.b16 %v4441, %v4439
    %v4570 = vpack.c.b16 %v4444, %v4442
    %v4571 = vpack.c.b16 %v4445, %v4443
    %v4572 = vpack.c.b16 %v4448, %v4446
    %v4573 = vpack.c.b16 %v4449, %v4447
    %v4574 = vpack.c.b16 %v4452, %v4450
    %v4575 = vpack.c.b16 %v4453, %v4451
    %v4576 = vpack.c.b16 %v4456, %v4454
    %v4577 = vpack.c.b16 %v4457, %v4455
    %v4578 = vpack.c.b16 %v4460, %v4458
    %v4579 = vpack.c.b16 %v4461, %v4459
    %v4580 = vpack.c.b16 %v4464, %v4462
    %v4581 = vpack.c.b16 %v4465, %v4463
    %v4582 = vpack.c.b16 %v4468, %v4466
    %v4583 = vpack.c.b16 %v4469, %v4467
    %v4584 = vpack.c.b16 %v4472, %v4470
    %v4585 = vpack.c.b16 %v4473, %v4471
    %4698 = vmatprep.subr.bf16.mxu0 %v4489
    %4699 = vmatpush1.bf16.msra.mxu0 %v4488
    %4700 = vmatprep.subr.bf16.mxu0 %v4487
    %4701 = vmatpush1.bf16.msra.mxu0 %v4486
    %4702 = vmatprep.subr.bf16.mxu0 %v4485
    %4703 = vmatpush1.bf16.msra.mxu0 %v4484
    %4704 = vmatprep.subr.bf16.mxu0 %v4483
    %4705 = vmatpush1.bf16.msra.mxu0 %v4482
    %4706 = vmatprep.subr.bf16.mxu0 %v4481
    %4707 = vmatpush1.bf16.msra.mxu0 %v4480
    %4708 = vmatprep.subr.bf16.mxu0 %v4479
    %4709 = vmatpush1.bf16.msra.mxu0 %v4478
    %4710 = vmatprep.subr.bf16.mxu0 %v4477
    %4711 = vmatpush1.bf16.msra.mxu0 %v4476
    %4712 = vmatprep.subr.bf16.mxu0 %v4475
    %4713 = vmatpush1.bf16.msra.mxu0 %v4474
    %4714 = vmatprep.subr.bf16.mxu0 %v4505
    %4715 = vmatpush2.bf16.msra.mxu0 %v4504
    %4716 = vmatprep.subr.bf16.mxu0 %v4503
    %4717 = vmatpush2.bf16.msra.mxu0 %v4502
    %4718 = vmatprep.subr.bf16.mxu0 %v4501
    %4719 = vmatpush2.bf16.msra.mxu0 %v4500
    %4720 = vmatprep.subr.bf16.mxu0 %v4499
    %4721 = vmatpush2.bf16.msra.mxu0 %v4498
    %4722 = vmatprep.subr.bf16.mxu0 %v4497
    %4723 = vmatpush2.bf16.msra.mxu0 %v4496
    %4724 = vmatprep.subr.bf16.mxu0 %v4495
    %4725 = vmatpush2.bf16.msra.mxu0 %v4494
    %4726 = vmatprep.subr.bf16.mxu0 %v4493
    %4727 = vmatpush2.bf16.msra.mxu0 %v4492
    %4728 = vmatprep.subr.bf16.mxu0 %v4491
    %4729 = vmatpush2.bf16.msra.mxu0 %v4490
    %4730 = vmatprep.mubr.bf16.mxu0 %v4008
    %4731 = vmatmul.mubr.bf16.gmra.mxu0 %v4007
    %v4732 = vpop.f32.mrf.mxu0
    %v4733 = vadd.f32 %v4131, %v4732
    %v4734 = vpop.f32.mrf.mxu0
    %v4735 = vadd.f32 %v4135, %v4734
    %v4736 = vpop.f32.mrf.mxu0
    %v4737 = vpop.f32.mrf.mxu0
    %4738 = vdwg.mxu0
    %4739 = vmatprep.subr.bf16.mxu0 %v4521
    %4740 = vmatpush1.bf16.msra.mxu0 %v4520
    %4741 = vmatprep.subr.bf16.mxu0 %v4519
    %4742 = vmatpush1.bf16.msra.mxu0 %v4518
    %4743 = vmatprep.subr.bf16.mxu0 %v4517
    %4744 = vmatpush1.bf16.msra.mxu0 %v4516
    %4745 = vmatprep.subr.bf16.mxu0 %v4515
    %4746 = vmatpush1.bf16.msra.mxu0 %v4514
    %4747 = vmatprep.subr.bf16.mxu0 %v4513
    %4748 = vmatpush1.bf16.msra.mxu0 %v4512
    %4749 = vmatprep.subr.bf16.mxu0 %v4511
    %4750 = vmatpush1.bf16.msra.mxu0 %v4510
    %4751 = vmatprep.subr.bf16.mxu0 %v4509
    %4752 = vmatpush1.bf16.msra.mxu0 %v4508
    %4753 = vmatprep.subr.bf16.mxu0 %v4507
    %4754 = vmatpush1.bf16.msra.mxu0 %v4506
    %4755 = vmatprep.subr.bf16.mxu0 %v4537
    %4756 = vmatpush2.bf16.msra.mxu0 %v4536
    %4757 = vmatprep.subr.bf16.mxu0 %v4535
    %4758 = vmatpush2.bf16.msra.mxu0 %v4534
    %4759 = vmatprep.subr.bf16.mxu0 %v4533
    %4760 = vmatpush2.bf16.msra.mxu0 %v4532
    %4761 = vmatprep.subr.bf16.mxu0 %v4531
    %4762 = vmatpush2.bf16.msra.mxu0 %v4530
    %4763 = vmatprep.subr.bf16.mxu0 %v4529
    %4764 = vmatpush2.bf16.msra.mxu0 %v4528
    %4765 = vmatprep.subr.bf16.mxu0 %v4527
    %4766 = vmatpush2.bf16.msra.mxu0 %v4526
    %4767 = vmatprep.subr.bf16.mxu0 %v4525
    %4768 = vmatpush2.bf16.msra.mxu0 %v4524
    %4769 = vmatprep.subr.bf16.mxu0 %v4523
    %4770 = vmatpush2.bf16.msra.mxu0 %v4522
    %4771 = vmatprep.mubr.bf16.mxu0 %v4010
    %4772 = vmatmul.mubr.bf16.gmra.mxu0 %v4009
    %v4773 = vpop.f32.mrf.mxu0
    %v4774 = vadd.f32 %v4733, %v4773
    %v4775 = vpop.f32.mrf.mxu0
    %v4776 = vadd.f32 %v4735, %v4775
    %v4777 = vpop.f32.mrf.mxu0
    %v4778 = vpop.f32.mrf.mxu0
    %4779 = vdwg.mxu0
    %4780 = vmatprep.subr.bf16.mxu0 %v4553
    %4781 = vmatpush1.bf16.msra.mxu0 %v4552
    %4782 = vmatprep.subr.bf16.mxu0 %v4551
    %4783 = vmatpush1.bf16.msra.mxu0 %v4550
    %4784 = vmatprep.subr.bf16.mxu0 %v4549
    %4785 = vmatpush1.bf16.msra.mxu0 %v4548
    %4786 = vmatprep.subr.bf16.mxu0 %v4547
    %4787 = vmatpush1.bf16.msra.mxu0 %v4546
    %4788 = vmatprep.subr.bf16.mxu0 %v4545
    %4789 = vmatpush1.bf16.msra.mxu0 %v4544
    %4790 = vmatprep.subr.bf16.mxu0 %v4543
    %4791 = vmatpush1.bf16.msra.mxu0 %v4542
    %4792 = vmatprep.subr.bf16.mxu0 %v4541
    %4793 = vmatpush1.bf16.msra.mxu0 %v4540
    %4794 = vmatprep.subr.bf16.mxu0 %v4539
    %4795 = vmatpush1.bf16.msra.mxu0 %v4538
    %4796 = vmatprep.subr.bf16.mxu0 %v4569
    %4797 = vmatpush2.bf16.msra.mxu0 %v4568
    %4798 = vmatprep.subr.bf16.mxu0 %v4567
    %4799 = vmatpush2.bf16.msra.mxu0 %v4566
    %4800 = vmatprep.subr.bf16.mxu0 %v4565
    %4801 = vmatpush2.bf16.msra.mxu0 %v4564
    %4802 = vmatprep.subr.bf16.mxu0 %v4563
    %4803 = vmatpush2.bf16.msra.mxu0 %v4562
    %4804 = vmatprep.subr.bf16.mxu0 %v4561
    %4805 = vmatpush2.bf16.msra.mxu0 %v4560
    %4806 = vmatprep.subr.bf16.mxu0 %v4559
    %4807 = vmatpush2.bf16.msra.mxu0 %v4558
    %4808 = vmatprep.subr.bf16.mxu0 %v4557
    %4809 = vmatpush2.bf16.msra.mxu0 %v4556
    %4810 = vmatprep.subr.bf16.mxu0 %v4555
    %4811 = vmatpush2.bf16.msra.mxu0 %v4554
    %4812 = vmatprep.mubr.bf16.mxu0 %v4012
    %4813 = vmatmul.mubr.bf16.gmra.mxu0 %v4011
    %v4814 = vpop.f32.mrf.mxu0
    %v4815 = vadd.f32 %v4774, %v4814
    %v4816 = vpop.f32.mrf.mxu0
    %v4817 = vadd.f32 %v4776, %v4816
    %v4818 = vpop.f32.mrf.mxu0
    %v4819 = vpop.f32.mrf.mxu0
    %4820 = vdwg.mxu0
    %4821 = vmatprep.subr.bf16.mxu0 %v4585
    %4822 = vmatpush1.bf16.msra.mxu0 %v4584
    %4823 = vmatprep.subr.bf16.mxu0 %v4583
    %4824 = vmatpush1.bf16.msra.mxu0 %v4582
    %4825 = vmatprep.subr.bf16.mxu0 %v4581
    %4826 = vmatpush1.bf16.msra.mxu0 %v4580
    %4827 = vmatprep.subr.bf16.mxu0 %v4579
    %4828 = vmatpush1.bf16.msra.mxu0 %v4578
    %4829 = vmatprep.subr.bf16.mxu0 %v4577
    %4830 = vmatpush1.bf16.msra.mxu0 %v4576
    %4831 = vmatprep.subr.bf16.mxu0 %v4575
    %4832 = vmatpush1.bf16.msra.mxu0 %v4574
    %4833 = vmatprep.subr.bf16.mxu0 %v4573
    %4834 = vmatpush1.bf16.msra.mxu0 %v4572
    %4835 = vmatprep.subr.bf16.mxu0 %v4571
    %4836 = vmatpush1.bf16.msra.mxu0 %v4570
    %4837 = vmatprep.subr.bf16.mxu0 0
    %4838 = vmatpush2.bf16.msra.mxu0 0
    %4839 = vmatprep.subr.bf16.mxu0 0
    %4840 = vmatpush2.bf16.msra.mxu0 0
    %4841 = vmatprep.subr.bf16.mxu0 0
    %4842 = vmatpush2.bf16.msra.mxu0 0
    %4843 = vmatprep.subr.bf16.mxu0 0
    %4844 = vmatpush2.bf16.msra.mxu0 0
    %4845 = vmatprep.subr.bf16.mxu0 0
    %4846 = vmatpush2.bf16.msra.mxu0 0
    %4847 = vmatprep.subr.bf16.mxu0 0
    %4848 = vmatpush2.bf16.msra.mxu0 0
    %4849 = vmatprep.subr.bf16.mxu0 0
    %4850 = vmatpush2.bf16.msra.mxu0 0
    %4851 = vmatprep.subr.bf16.mxu0 0
    %4852 = vmatpush2.bf16.msra.mxu0 0
    %4853 = vmatprep.mubr.bf16.mxu0 0
    %4854 = vmatmul.mubr.bf16.gmra.mxu0 %v4013
    %v4855 = vpop.f32.mrf.mxu0
    %v4856 = vadd.f32 %v4815, %v4855
    %v4857 = vpop.f32.mrf.mxu0
    %v4858 = vadd.f32 %v4817, %v4857
    %v4859 = vpop.f32.mrf.mxu0
    %v4860 = vpop.f32.mrf.mxu0
    %4861 = vdwg.mxu0
    %v4862 = vmax.f32 %v4856, 0.0
    %v4863 = vmax.f32 %v4858, 0.0
    %v4864 = vpack.c.bf16 %v4862, %v4862
    %v4865 = vpack.c.bf16 %v4863, %v4863
    %v4866 = vld [vmem:[#allocation15] sm:$0xf]
    %v4867 = vld [vmem:[#allocation15 + $0x4] sm:$0xf]
    %v4868 = vld [vmem:[#allocation15 + $0x8] sm:$0xf]
    %v4869 = vld [vmem:[#allocation15 + $0xc] sm:$0xf]
    %v4870 = vld [vmem:[#allocation15 + $0x10] sm:$0xf]
    %v4871 = vld [vmem:[#allocation15 + $0x14] sm:$0xf]
    %v4872 = vld [vmem:[#allocation15 + $0x18] sm:$0xf]
    %v4873 = vld [vmem:[#allocation15 + $0x1c] sm:$0xf]
    %v4874 = vld [vmem:[#allocation15 + $0x20] sm:$0xf]
    %v4875 = vld [vmem:[#allocation15 + $0x24] sm:$0xf]
    %v4876 = vld [vmem:[#allocation15 + $0x28] sm:$0xf]
    %v4877 = vld [vmem:[#allocation15 + $0x2c] sm:$0xf]
    %v4878 = vld [vmem:[#allocation15 + $0x30] sm:$0xf]
    %v4879 = vld [vmem:[#allocation15 + $0x34] sm:$0xf]
    %v4880 = vld [vmem:[#allocation15 + $0x38] sm:$0xf]
    %v4881 = vld [vmem:[#allocation15 + $0x3c] sm:$0xf]
    %v4882 = vld [vmem:[#allocation15 + $0x40] sm:$0xf]
    %v4883 = vld [vmem:[#allocation15 + $0x44] sm:$0xf]
    %v4884 = vld [vmem:[#allocation15 + $0x48] sm:$0xf]
    %v4885 = vld [vmem:[#allocation15 + $0x4c] sm:$0xf]
    %v4886 = vld [vmem:[#allocation15 + $0x50] sm:$0xf]
    %v4887 = vld [vmem:[#allocation15 + $0x54] sm:$0xf]
    %v4888 = vld [vmem:[#allocation15 + $0x58] sm:$0xf]
    %v4889 = vld [vmem:[#allocation15 + $0x5c] sm:$0xf]
    %v4890 = vld [vmem:[#allocation15 + $0x60] sm:$0xf]
    %v4891 = vld [vmem:[#allocation15 + $0x64] sm:$0xf]
    %v4892 = vld [vmem:[#allocation15 + $0x68] sm:$0xf]
    %v4893 = vld [vmem:[#allocation15 + $0x6c] sm:$0xf]
    %v4894 = vld [vmem:[#allocation15 + $0x70] sm:$0xf]
    %v4895 = vld [vmem:[#allocation15 + $0x74] sm:$0xf]
    %v4896 = vld [vmem:[#allocation15 + $0x78] sm:$0xf]
    %v4897 = vld [vmem:[#allocation15 + $0x7c] sm:$0xf]
    %v4898 = vld [vmem:[#allocation16] sm:$0x1]
    %v4900 = vlaneseq
    %v4901 = vshrl.u32 %v4900, 7
    %v4902 = vsub.s32 0, %v4901
    %v4903 = vrot.slane %v4898, %v4902
    %v4937 = vunpack.c.l.b16 %v4866
    %v4938 = vunpack.c.l.b16 %v4867
    %v4939 = vunpack.c.l.b16 %v4868
    %v4940 = vunpack.c.l.b16 %v4869
    %v4941 = vunpack.c.l.b16 %v4870
    %v4942 = vunpack.c.l.b16 %v4871
    %v4943 = vunpack.c.l.b16 %v4872
    %v4944 = vunpack.c.l.b16 %v4873
    %v4945 = vunpack.c.l.b16 %v4874
    %v4946 = vunpack.c.l.b16 %v4875
    %v4947 = vunpack.c.l.b16 %v4876
    %v4948 = vunpack.c.l.b16 %v4877
    %v4949 = vunpack.c.l.b16 %v4878
    %v4950 = vunpack.c.l.b16 %v4879
    %v4951 = vunpack.c.l.b16 %v4880
    %v4952 = vunpack.c.l.b16 %v4881
    %v4953 = vunpack.c.l.b16 %v4882
    %v4954 = vunpack.c.l.b16 %v4883
    %v4955 = vunpack.c.l.b16 %v4884
    %v4956 = vunpack.c.l.b16 %v4885
    %v4957 = vunpack.c.l.b16 %v4886
    %v4958 = vunpack.c.l.b16 %v4887
    %v4959 = vunpack.c.l.b16 %v4888
    %v4960 = vunpack.c.l.b16 %v4889
    %v4961 = vunpack.c.l.b16 %v4890
    %v4962 = vunpack.c.l.b16 %v4891
    %v4963 = vunpack.c.l.b16 %v4892
    %v4964 = vunpack.c.l.b16 %v4893
    %v4965 = vunpack.c.l.b16 %v4894
    %v4966 = vunpack.c.l.b16 %v4895
    %v4967 = vunpack.c.l.b16 %v4896
    %v4968 = vunpack.c.l.b16 %v4897
    %v4969 = vpack.c.b16 %v4938, %v4937
    %v4970 = vpack.c.b16 %v4940, %v4939
    %v4971 = vpack.c.b16 %v4942, %v4941
    %v4972 = vpack.c.b16 %v4944, %v4943
    %v4973 = vpack.c.b16 %v4946, %v4945
    %v4974 = vpack.c.b16 %v4948, %v4947
    %v4975 = vpack.c.b16 %v4950, %v4949
    %v4976 = vpack.c.b16 %v4952, %v4951
    %v4977 = vpack.c.b16 %v4954, %v4953
    %v4978 = vpack.c.b16 %v4956, %v4955
    %v4979 = vpack.c.b16 %v4958, %v4957
    %v4980 = vpack.c.b16 %v4960, %v4959
    %v4981 = vpack.c.b16 %v4962, %v4961
    %v4982 = vpack.c.b16 %v4964, %v4963
    %v4983 = vpack.c.b16 %v4966, %v4965
    %v4984 = vpack.c.b16 %v4968, %v4967
    %5001 = vmatprep.subr.bf16.mxu0 0
    %5002 = vmatpush1.bf16.msra.mxu0 %v4976
    %5003 = vmatprep.subr.bf16.mxu0 0
    %5004 = vmatpush1.bf16.msra.mxu0 %v4975
    %5005 = vmatprep.subr.bf16.mxu0 0
    %5006 = vmatpush1.bf16.msra.mxu0 %v4974
    %5007 = vmatprep.subr.bf16.mxu0 0
    %5008 = vmatpush1.bf16.msra.mxu0 %v4973
    %5009 = vmatprep.subr.bf16.mxu0 0
    %5010 = vmatpush1.bf16.msra.mxu0 %v4972
    %5011 = vmatprep.subr.bf16.mxu0 0
    %5012 = vmatpush1.bf16.msra.mxu0 %v4971
    %5013 = vmatprep.subr.bf16.mxu0 0
    %5014 = vmatpush1.bf16.msra.mxu0 %v4970
    %5015 = vmatprep.subr.bf16.mxu0 0
    %5016 = vmatpush1.bf16.msra.mxu0 %v4969
    %5017 = vmatprep.subr.bf16.mxu0 0
    %5018 = vmatpush2.bf16.msra.mxu0 %v4984
    %5019 = vmatprep.subr.bf16.mxu0 0
    %5020 = vmatpush2.bf16.msra.mxu0 %v4983
    %5021 = vmatprep.subr.bf16.mxu0 0
    %5022 = vmatpush2.bf16.msra.mxu0 %v4982
    %5023 = vmatprep.subr.bf16.mxu0 0
    %5024 = vmatpush2.bf16.msra.mxu0 %v4981
    %5025 = vmatprep.subr.bf16.mxu0 0
    %5026 = vmatpush2.bf16.msra.mxu0 %v4980
    %5027 = vmatprep.subr.bf16.mxu0 0
    %5028 = vmatpush2.bf16.msra.mxu0 %v4979
    %5029 = vmatprep.subr.bf16.mxu0 0
    %5030 = vmatpush2.bf16.msra.mxu0 %v4978
    %5031 = vmatprep.subr.bf16.mxu0 0
    %5032 = vmatpush2.bf16.msra.mxu0 %v4977
    %5033 = vmatprep.mubr.bf16.mxu0 %v4865
    %5034 = vmatmul.mubr.bf16.gmra.mxu0 %v4864
    %v5035 = vpop.f32.mrf.mxu0
    %v5036 = vadd.f32 %v4903, %v5035
    %v5037 = vpop.f32.mrf.mxu0
    %v5038 = vpop.f32.mrf.mxu0
    %v5039 = vpop.f32.mrf.mxu0
    %5040 = vdwg.mxu0
    %v5041 = vmax.f32 %v5036, 0.0
    %v5042 = vpack.c.bf16 %v5041, %v5041
    %v5043 = vld [vmem:[#allocation18] sm:$0xf]
    %v5044 = vld [vmem:[#allocation18 + $0x4] sm:$0xf]
    %v5045 = vld [vmem:[#allocation18 + $0x8] sm:$0xf]
    %v5046 = vld [vmem:[#allocation18 + $0xc] sm:$0xf]
    %v5047 = vld [vmem:[#allocation18 + $0x10] sm:$0xf]
    %v5048 = vld [vmem:[#allocation18 + $0x14] sm:$0xf]
    %v5049 = vld [vmem:[#allocation18 + $0x18] sm:$0xf]
    %v5050 = vld [vmem:[#allocation18 + $0x1c] sm:$0xf]
    %v5051 = vld [vmem:[#allocation18 + $0x20] sm:$0xf]
    %v5052 = vld [vmem:[#allocation18 + $0x24] sm:$0xf]
    %v5053 = vld [vmem:[#allocation18 + $0x28] sm:$0xf]
    %v5054 = vld [vmem:[#allocation18 + $0x2c] sm:$0xf]
    %v5055 = vld [vmem:[#allocation18 + $0x30] sm:$0xf]
    %v5056 = vld [vmem:[#allocation18 + $0x34] sm:$0xf]
    %v5057 = vld [vmem:[#allocation18 + $0x38] sm:$0xf]
    %v5058 = vld [vmem:[#allocation18 + $0x3c] sm:$0xf]
    %v5059 = vld [vmem:[#allocation19] sm:$0x1]
    %v5061 = vlaneseq
    %v5062 = vshrl.u32 %v5061, 7
    %v5063 = vsub.s32 0, %v5062
    %v5064 = vrot.slane %v5059, %v5063
    %v5082 = vunpack.c.l.b16 %v5043
    %v5083 = vunpack.c.l.b16 %v5044
    %v5084 = vunpack.c.l.b16 %v5045
    %v5085 = vunpack.c.l.b16 %v5046
    %v5086 = vunpack.c.l.b16 %v5047
    %v5087 = vunpack.c.l.b16 %v5048
    %v5088 = vunpack.c.l.b16 %v5049
    %v5089 = vunpack.c.l.b16 %v5050
    %v5090 = vunpack.c.l.b16 %v5051
    %v5091 = vunpack.c.l.b16 %v5052
    %v5092 = vunpack.c.l.b16 %v5053
    %v5093 = vunpack.c.l.b16 %v5054
    %v5094 = vunpack.c.l.b16 %v5055
    %v5095 = vunpack.c.l.b16 %v5056
    %v5096 = vunpack.c.l.b16 %v5057
    %v5097 = vunpack.c.l.b16 %v5058
    %v5098 = vpack.c.b16 %v5083, %v5082
    %v5099 = vpack.c.b16 %v5085, %v5084
    %v5100 = vpack.c.b16 %v5087, %v5086
    %v5101 = vpack.c.b16 %v5089, %v5088
    %v5102 = vpack.c.b16 %v5091, %v5090
    %v5103 = vpack.c.b16 %v5093, %v5092
    %v5104 = vpack.c.b16 %v5095, %v5094
    %v5105 = vpack.c.b16 %v5097, %v5096
    %5114 = vmatprep.subr.bf16.mxu0 0
    %5115 = vmatpush1.bf16.msra.mxu0 %v5105
    %5116 = vmatprep.subr.bf16.mxu0 0
    %5117 = vmatpush1.bf16.msra.mxu0 %v5104
    %5118 = vmatprep.subr.bf16.mxu0 0
    %5119 = vmatpush1.bf16.msra.mxu0 %v5103
    %5120 = vmatprep.subr.bf16.mxu0 0
    %5121 = vmatpush1.bf16.msra.mxu0 %v5102
    %5122 = vmatprep.subr.bf16.mxu0 0
    %5123 = vmatpush1.bf16.msra.mxu0 %v5101
    %5124 = vmatprep.subr.bf16.mxu0 0
    %5125 = vmatpush1.bf16.msra.mxu0 %v5100
    %5126 = vmatprep.subr.bf16.mxu0 0
    %5127 = vmatpush1.bf16.msra.mxu0 %v5099
    %5128 = vmatprep.subr.bf16.mxu0 0
    %5129 = vmatpush1.bf16.msra.mxu0 %v5098
    %5130 = vmatprep.subr.bf16.mxu0 0
    %5131 = vmatpush2.bf16.msra.mxu0 0
    %5132 = vmatprep.subr.bf16.mxu0 0
    %5133 = vmatpush2.bf16.msra.mxu0 0
    %5134 = vmatprep.subr.bf16.mxu0 0
    %5135 = vmatpush2.bf16.msra.mxu0 0
    %5136 = vmatprep.subr.bf16.mxu0 0
    %5137 = vmatpush2.bf16.msra.mxu0 0
    %5138 = vmatprep.subr.bf16.mxu0 0
    %5139 = vmatpush2.bf16.msra.mxu0 0
    %5140 = vmatprep.subr.bf16.mxu0 0
    %5141 = vmatpush2.bf16.msra.mxu0 0
    %5142 = vmatprep.subr.bf16.mxu0 0
    %5143 = vmatpush2.bf16.msra.mxu0 0
    %5144 = vmatprep.subr.bf16.mxu0 0
    %5145 = vmatpush2.bf16.msra.mxu0 0
    %5146 = vmatprep.mubr.bf16.mxu0 0
    %5147 = vmatmul.mubr.bf16.gmra.mxu0 %v5042
    %v5148 = vpop.f32.mrf.mxu0
    %v5149 = vadd.f32 %v5064, %v5148
    %v5150 = vpop.f32.mrf.mxu0
    %v5151 = vpop.f32.mrf.mxu0
    %v5152 = vpop.f32.mrf.mxu0
    %5153 = vdwg.mxu0
    %5154 = vst [vmem:[%s13] sm:$0xff] %v5149
    // Predicated region
    $region102: #{forward.1} parent=1 // pred_check
      _
    $region103: #{forward.1} parent=1 // pred_check_branch
      %5156 = sbr.rel (0) target = $region105
    $region104: #{forward.1} parent=1 // pred_region
      _
    $region105: #{forward.1} parent=1 // pred_fallthru
      _
    // Predicated region
    $region106: #{forward.1} parent=1 // pred_check
      _
    $region107: #{forward.1} parent=1 // pred_check_branch
      %5158 = sbr.rel (0) target = $region109
    $region108: #{forward.1} parent=1 // pred_region
      _
    $region109: #{forward.1} parent=1 // pred_fallthru
      _
    %5159 = vsyncpa [#allocation3], 1
    %5160 = vsyncpa [#allocation5], 1
    %5161 = vsyncpa [#allocation8], 1
    %5162 = vsyncpa [#allocation11], 1
    %5163 = vsyncpa [#allocation14], 1
    %5164 = vsyncpa [#allocation17], 1
    %5165 = vsyncpa [#allocation20], 1

</llo_original>
